<compile_context>
chip_gen: v7x
topology: tpu7x:2x2x1
jax: 0.10.0
libtpu: 0.0.40
codegen_flags: <defaults>
</compile_context>

<pallas_src>
import functools
import math

import jax
import jax.numpy as jnp
from jax import lax
from jax.experimental import pallas as pl
from jax.experimental.pallas import tpu as pltpu

_LN_EPS = 1e-5
_NEG_INF = -1e30


# --------------------------------------------------------------------------
# Pallas kernel: whole EncoderBlock for one batch sample, NLC layout (L, D).
# --------------------------------------------------------------------------
def _encoder_block_kernel(x_ref, pos_ref, lnw_ref, lnb_ref, shift_ref,
                          wf_ref, bf_ref, wq_ref, wk_ref, wv_ref, wo_ref,
                          fcw_ref, fcb_ref, mrow_ref, mcol_ref, o_ref):
    f32 = jnp.float32
    L, D = x_ref.shape
    conv_num, K = wf_ref.shape[0], wf_ref.shape[1]
    Nh, _, Dk = wq_ref.shape
    inv_n = 1.0 / float(L * D)

    def layer_norm(v, idx):
        # nn.LayerNorm([D, length]): normalize jointly over all D*L elements.
        mu = jnp.sum(jnp.sum(v, axis=1, keepdims=True),
                     axis=0, keepdims=True) * inv_n
        c = v - mu
        var = jnp.sum(jnp.sum(c * c, axis=1, keepdims=True),
                      axis=0, keepdims=True) * inv_n
        return c * lax.rsqrt(var + _LN_EPS) * lnw_ref[idx, :, :] + lnb_ref[idx, :, :]

    def ds_conv(v, i):
        # Depthwise + pointwise fused: out = sum_t (S_t @ v) @ Wf[i,t] + bf[i].
        # S_t is a constant banded shift matrix (handles zero padding for free),
        # so all work lands on the MXU.
        acc = jnp.zeros((L, D), f32) + bf_ref[i, :, :]
        for t in range(K):                                   # K small & static
            shifted = jnp.dot(shift_ref[t, :, :], v, preferred_element_type=f32)
            acc = acc + jnp.dot(shifted, wf_ref[i, t, :, :],
                                preferred_element_type=f32)
        return acc

    def self_attention(v):
        scale = 1.0 / math.sqrt(Dk)
        hmask = mrow_ref[...]            # (1, L) key mask
        vmask = mcol_ref[...]            # (L, 1) query mask
        attn = jnp.zeros((L, D), f32)
        for h in range(Nh):              # Nh small & static -> unrolled
            qh = jnp.dot(v, wq_ref[h, :, :], preferred_element_type=f32)  # (L, Dk)
            kh = jnp.dot(v, wk_ref[h, :, :], preferred_element_type=f32)  # (L, Dk)
            vh = jnp.dot(v, wv_ref[h, :, :], preferred_element_type=f32)  # (L, Dv)
            s = lax.dot_general(qh, kh, (((1,), (1,)), ((), ())),
                                preferred_element_type=f32) * scale       # (L, L)
            s = s * hmask + (1.0 - hmask) * _NEG_INF                      # mask_logits
            s = s - jnp.max(s, axis=-1, keepdims=True)
            p = jnp.exp(s)
            p = p / jnp.sum(p, axis=-1, keepdims=True)
            p = p * vmask
            head = jnp.dot(p, vh, preferred_element_type=f32)             # (L, Dv)
            # per-head slice of Wo accumulated == concat(heads) @ Wo
            attn = attn + jnp.dot(head, wo_ref[h, :, :],
                                  preferred_element_type=f32)             # (L, D)
        return attn

    # ---- forward (dropout layers are identity at inference) ----
    out = x_ref[...].astype(f32) + pos_ref[...]
    res = out
    out = layer_norm(out, 0)
    for i in range(conv_num):
        out = jnp.maximum(ds_conv(out, i), 0.0) + res
        res = out
        out = layer_norm(out, 1 + i)
    out = self_attention(out) + res
    res = out
    out = layer_norm(out, 1 + conv_num)
    out = jnp.maximum(jnp.dot(out, fcw_ref[...], preferred_element_type=f32)
                      + fcb_ref[...], 0.0) + res
    o_ref[...] = out.astype(o_ref.dtype)


# --------------------------------------------------------------------------
# Wrapper: weight prep + single pallas_call (PyTorch NCL interface).
# --------------------------------------------------------------------------
def encoder_block_forward(x, mask, params, ksize):
    """x: (N, D, L) (PyTorch NCL); mask: (N, L) in {0,1}. Returns (N, D, L)."""
    N, D, L = x.shape
    assert ksize % 2 == 1, "module semantics require odd k (same-length conv)"
    pad = ksize // 2
    conv_num = params["w_dw"].shape[0]
    Nh, _, Dk = params["wq"].shape
    Dv = params["wv"].shape[2]
    f32 = jnp.float32

    # ---- tiny, weight-sized prep (single boundary transpose on activations) ----
    x_nlc = jnp.transpose(x, (0, 2, 1)).astype(f32)                   # (N, L, D)
    pos_ld = jnp.transpose(params["pos"], (1, 0)).astype(f32)         # (L, D)
    ln_w = jnp.transpose(params["ln_w"], (0, 2, 1)).astype(f32)       # (conv_num+2, L, D)
    ln_b = jnp.transpose(params["ln_b"], (0, 2, 1)).astype(f32)

    # Fuse depthwise into pointwise: wf[i,t,ci,co] = w_dw[i,ci,t] * w_pw[i,co,ci]
    dw = params["w_dw"][:, :, 0, :]                                   # (conv_num, D, K)
    pw = params["w_pw"][:, :, :, 0]                                   # (conv_num, Dout, Din)
    wf = (jnp.transpose(dw, (0, 2, 1))[:, :, :, None] *
          jnp.transpose(pw, (0, 2, 1))[:, None, :, :]).astype(f32)    # (conv_num, K, D, D)
    bf = (jnp.einsum("ic,ioc->io", params["b_dw"], pw)
          + params["b_pw"]).astype(f32).reshape(conv_num, 1, D)       # fused bias

    # Per-tap banded shift matrices: (eye offset d)[l, l+d] = 1  ->  S_d @ v
    # shifts the sequence and zero-fills the boundary in one MXU matmul.
    shift = jnp.stack(
        [jnp.eye(L, L, k=t - pad, dtype=f32) for t in range(ksize)])  # (K, L, L)

    wq = params["wq"].astype(f32)                                     # (Nh, D, Dk)
    wk = params["wk"].astype(f32)
    wv = params["wv"].astype(f32)
    wo = params["wo"].reshape(Nh, Dv, Nh * Dv).astype(f32)            # head-split Wo
    fcw = jnp.transpose(params["fc_w"], (1, 0)).astype(f32)           # (D, D): x @ W^T
    fcb = params["fc_b"].reshape(1, D).astype(f32)
    mrow = mask.reshape(N, 1, L).astype(f32)
    mcol = mask.reshape(N, L, 1).astype(f32)

    out_nlc = pl.pallas_call(
        _encoder_block_kernel,
        out_shape=jax.ShapeDtypeStruct((N, L, D), f32),
        grid_spec=pltpu.PrefetchScalarGridSpec(
            num_scalar_prefetch=0,
            grid=(N,),
            in_specs=[
                pl.BlockSpec((None, L, D), lambda n: (n, 0, 0)),              # x (NLC)
                pl.BlockSpec((L, D), lambda n: (0, 0)),                       # pos enc
                pl.BlockSpec((conv_num + 2, L, D), lambda n: (0, 0, 0)),      # LN gamma
                pl.BlockSpec((conv_num + 2, L, D), lambda n: (0, 0, 0)),      # LN beta
                pl.BlockSpec((ksize, L, L), lambda n: (0, 0, 0)),             # tap shifts
                pl.BlockSpec((conv_num, ksize, D, D), lambda n: (0, 0, 0, 0)),# fused conv W
                pl.BlockSpec((conv_num, 1, D), lambda n: (0, 0, 0)),          # fused conv b
                pl.BlockSpec((Nh, D, Dk), lambda n: (0, 0, 0)),               # Wq
                pl.BlockSpec((Nh, D, Dk), lambda n: (0, 0, 0)),               # Wk
                pl.BlockSpec((Nh, D, Dv), lambda n: (0, 0, 0)),               # Wv
                pl.BlockSpec((Nh, Dv, Nh * Dv), lambda n: (0, 0, 0)),         # Wo (per head)
                pl.BlockSpec((D, D), lambda n: (0, 0)),                       # fc W^T
                pl.BlockSpec((1, D), lambda n: (0, 0)),                       # fc b
                pl.BlockSpec((None, 1, L), lambda n: (n, 0, 0)),              # key mask
                pl.BlockSpec((None, L, 1), lambda n: (n, 0, 0)),              # query mask
            ],
            out_specs=pl.BlockSpec((None, L, D), lambda n: (n, 0, 0)),
        ),
        compiler_params=pltpu.CompilerParams(
            dimension_semantics=("parallel",)),
    )(x_nlc, pos_ld, ln_w, ln_b, shift, wf, bf, wq, wk, wv, wo, fcw, fcb,
      mrow, mcol)

    return jnp.transpose(out_nlc, (0, 2, 1)).astype(x.dtype)


# --------------------------------------------------------------------------
# Pure-JAX reference (mirrors the PyTorch module op-for-op, NCL layout).
# --------------------------------------------------------------------------
def _layer_norm_ref(x, w, b):
    mu = jnp.mean(x, axis=(1, 2), keepdims=True)
    var = jnp.mean((x - mu) ** 2, axis=(1, 2), keepdims=True)
    return (x - mu) * lax.rsqrt(var + _LN_EPS) * w[None] + b[None]


def _ds_conv_ref(x, w_dw, b_dw, w_pw, b_pw, ksize):
    pad = ksize // 2
    cin = x.shape[1]
    y = lax.conv_general_dilated(
        x, w_dw, window_strides=(1,), padding=[(pad, pad)],
        dimension_numbers=("NCH", "OIH", "NCH"), feature_group_count=cin)
    y = y + b_dw[None, :, None]
    z = lax.conv_general_dilated(
        y, w_pw, window_strides=(1,), padding=[(0, 0)],
        dimension_numbers=("NCH", "OIH", "NCH"))
    return z + b_pw[None, :, None]


def _self_attention_ref(x, mask, wq, wk, wv, wo):
    xt = jnp.transpose(x, (0, 2, 1))                      # (N, L, D)
    nh, _, dk = wq.shape
    hmask = mask[:, None, :]
    vmask = mask[:, :, None]
    scale = 1.0 / math.sqrt(dk)
    heads = []
    for h in range(nh):
        q = xt @ wq[h]
        kk = xt @ wk[h]
        vv = xt @ wv[h]
        s = jnp.einsum("nld,nmd->nlm", q, kk) * scale
        s = s * hmask + (1.0 - hmask) * _NEG_INF
        p = jax.nn.softmax(s, axis=2) * vmask
        heads.append(jnp.einsum("nlm,nmd->nld", p, vv))
    head = jnp.concatenate(heads, axis=2)
    out = head @ wo
    return jnp.transpose(out, (0, 2, 1))


def encoder_block_reference(x, mask, params, ksize):
    conv_num = params["w_dw"].shape[0]
    out = x + params["pos"][None]
    res = out
    out = _layer_norm_ref(out, params["ln_w"][0], params["ln_b"][0])
    for i in range(conv_num):
        out = _ds_conv_ref(out, params["w_dw"][i], params["b_dw"][i],
                           params["w_pw"][i], params["b_pw"][i], ksize)
        out = jnp.maximum(out, 0.0)
        out = out + res
        res = out
        out = _layer_norm_ref(out, params["ln_w"][1 + i], params["ln_b"][1 + i])
    out = _self_attention_ref(out, mask, params["wq"], params["wk"],
                              params["wv"], params["wo"])
    out = out + res
    res = out
    out = _layer_norm_ref(out, params["ln_w"][1 + conv_num],
                          params["ln_b"][1 + conv_num])
    xt = jnp.transpose(out, (0, 2, 1))
    y = xt @ params["fc_w"].T + params["fc_b"][None, None, :]
    out = jnp.transpose(y, (0, 2, 1))
    out = jnp.maximum(out, 0.0)
    return out + res


def _make_pos_encoding(D, length):
    i = jnp.arange(D, dtype=jnp.float32)
    even = (jnp.arange(D) % 2) == 0
    freqs = jnp.where(even, 10000.0 ** (-i / D), -(10000.0 ** ((1.0 - i) / D)))
    phases = jnp.where(even, 0.0, math.pi / 2)
    pos = jnp.arange(length, dtype=jnp.float32)[None, :]
    return jnp.sin(pos * freqs[:, None] + phases[:, None])           # (D, length)


if __name__ == "__main__":
    N, D, L = 2, 32, 16          # batch, channels (= model dim D), length
    CONV_NUM, K = 2, 5           # conv layers, depthwise kernel size (odd)
    NH = 4                       # attention heads
    DK = DV = D // NH            # per-head dims (Dv * Nh == D, as the module assumes)

    key = jax.random.PRNGKey(0)
    ks = jax.random.split(key, 13)

    x = jax.random.normal(ks[0], (N, D, L), dtype=jnp.float32)
    mask = jnp.ones((N, L), dtype=jnp.float32).at[1, L - 3:].set(0.0)

    params = {
        "pos": _make_pos_encoding(D, L),
        # depthwise-separable convs (PyTorch Conv1d weight layouts), stacked
        "w_dw": jax.random.normal(ks[1], (CONV_NUM, D, 1, K), jnp.float32)
                * math.sqrt(2.0 / K),
        "b_dw": 0.1 * jax.random.normal(ks[2], (CONV_NUM, D), jnp.float32),
        "w_pw": jax.random.normal(ks[3], (CONV_NUM, D, D, 1), jnp.float32)
                * math.sqrt(2.0 / D),
        "b_pw": 0.1 * jax.random.normal(ks[4], (CONV_NUM, D), jnp.float32),
        # layer norms: [normb, norms[0..CONV_NUM-1], norme], torch layout (D, L)
        "ln_w": 1.0 + 0.05 * jax.random.normal(ks[5], (CONV_NUM + 2, D, L), jnp.float32),
        "ln_b": 0.05 * jax.random.normal(ks[6], (CONV_NUM + 2, D, L), jnp.float32),
        # self-attention projections
        "wq": jax.random.normal(ks[7], (NH, D, DK), jnp.float32) / math.sqrt(D),
        "wk": jax.random.normal(ks[8], (NH, D, DK), jnp.float32) / math.sqrt(D),
        "wv": jax.random.normal(ks[9], (NH, D, DV), jnp.float32) / math.sqrt(D),
        "wo": jax.random.normal(ks[10], (D, NH * DV), jnp.float32) / math.sqrt(D),
        # final fc (torch nn.Linear layout: (out, in) + bias)
        "fc_w": jax.random.normal(ks[11], (D, D), jnp.float32) / math.sqrt(D),
        "fc_b": 0.1 * jax.random.normal(ks[12], (D,), jnp.float32),
    }

    fwd = jax.jit(functools.partial(encoder_block_forward, ksize=K))
    out = jax.block_until_ready(fwd(x, mask, params))

    ref = jax.block_until_ready(
        jax.jit(functools.partial(encoder_block_reference, ksize=K))(x, mask, params))

    assert out.shape == (N, D, L)
    max_err = float(jnp.max(jnp.abs(out - ref)))
    assert jnp.allclose(out, ref, atol=5e-3, rtol=5e-3), f"max_abs_err={max_err}"
    print("KERNEL_OK")
</pallas_src>

<mosaic_0001>
module attributes {stable_mosaic.version = 11 : i64} {
  func.func @_encoder_block_kernel(%arg0: i32, %arg1: memref<1x16x32xf32, #tpu.memory_space<vmem>>, %arg2: memref<16x32xf32, #tpu.memory_space<vmem>>, %arg3: memref<4x16x32xf32, #tpu.memory_space<vmem>>, %arg4: memref<4x16x32xf32, #tpu.memory_space<vmem>>, %arg5: memref<5x16x16xf32, #tpu.memory_space<vmem>>, %arg6: memref<2x5x32x32xf32, #tpu.memory_space<vmem>>, %arg7: memref<2x1x32xf32, #tpu.memory_space<vmem>>, %arg8: memref<4x32x8xf32, #tpu.memory_space<vmem>>, %arg9: memref<4x32x8xf32, #tpu.memory_space<vmem>>, %arg10: memref<4x32x8xf32, #tpu.memory_space<vmem>>, %arg11: memref<4x8x32xf32, #tpu.memory_space<vmem>>, %arg12: memref<32x32xf32, #tpu.memory_space<vmem>>, %arg13: memref<1x32xf32, #tpu.memory_space<vmem>>, %arg14: memref<1x1x16xf32, #tpu.memory_space<vmem>>, %arg15: memref<1x16x1xf32, #tpu.memory_space<vmem>>, %arg16: memref<1x16x32xf32, #tpu.memory_space<vmem>>) attributes {dimension_semantics = [#tpu.dimension_semantics<parallel>], iteration_bounds = array<i64: 2>, scalar_prefetch = 0 : i64, scratch_operands = 0 : i64, tpu.core_type = #tpu.core_type<tc>, window_params = [{transform_indices = @transform_0, window_bounds = array<i64: 1, 16, 32>}, {pipeline_mode = #tpu.pipeline_mode<synchronous>, transform_indices = @transform_1, window_bounds = array<i64: 16, 32>}, {pipeline_mode = #tpu.pipeline_mode<synchronous>, transform_indices = @transform_2, window_bounds = array<i64: 4, 16, 32>}, {pipeline_mode = #tpu.pipeline_mode<synchronous>, transform_indices = @transform_3, window_bounds = array<i64: 4, 16, 32>}, {pipeline_mode = #tpu.pipeline_mode<synchronous>, transform_indices = @transform_4, window_bounds = array<i64: 5, 16, 16>}, {pipeline_mode = #tpu.pipeline_mode<synchronous>, transform_indices = @transform_5, window_bounds = array<i64: 2, 5, 32, 32>}, {pipeline_mode = #tpu.pipeline_mode<synchronous>, transform_indices = @transform_6, window_bounds = array<i64: 2, 1, 32>}, {pipeline_mode = #tpu.pipeline_mode<synchronous>, transform_indices = @transform_7, window_bounds = array<i64: 4, 32, 8>}, {pipeline_mode = #tpu.pipeline_mode<synchronous>, transform_indices = @transform_8, window_bounds = array<i64: 4, 32, 8>}, {pipeline_mode = #tpu.pipeline_mode<synchronous>, transform_indices = @transform_9, window_bounds = array<i64: 4, 32, 8>}, {pipeline_mode = #tpu.pipeline_mode<synchronous>, transform_indices = @transform_10, window_bounds = array<i64: 4, 8, 32>}, {pipeline_mode = #tpu.pipeline_mode<synchronous>, transform_indices = @transform_11, window_bounds = array<i64: 32, 32>}, {pipeline_mode = #tpu.pipeline_mode<synchronous>, transform_indices = @transform_12, window_bounds = array<i64: 1, 32>}, {transform_indices = @transform_13, window_bounds = array<i64: 1, 1, 16>}, {transform_indices = @transform_14, window_bounds = array<i64: 1, 16, 1>}, {transform_indices = @transform_15, window_bounds = array<i64: 1, 16, 32>}]} {
    %c0 = arith.constant 0 : index
    %c0_0 = arith.constant 0 : index
    %c0_1 = arith.constant 0 : index
    %0 = vector.load %arg1[%c0, %c0_0, %c0_1] : memref<1x16x32xf32, #tpu.memory_space<vmem>>, vector<1x16x32xf32>
    %1 = vector.shape_cast %0 : vector<1x16x32xf32> to vector<16x32xf32>
    %c0_2 = arith.constant 0 : index
    %c0_3 = arith.constant 0 : index
    %2 = vector.load %arg2[%c0_2, %c0_3] : memref<16x32xf32, #tpu.memory_space<vmem>>, vector<16x32xf32>
    %3 = arith.addf %1, %2 : vector<16x32xf32>
    %cst = arith.constant dense<0.000000e+00> : vector<16xf32>
    %4 = vector.multi_reduction <add>, %3, %cst [1] : vector<16x32xf32> to vector<16xf32>
    %5 = vector.shape_cast %4 : vector<16xf32> to vector<16x1xf32>
    %cst_4 = arith.constant dense<0.000000e+00> : vector<1xf32>
    %6 = vector.multi_reduction <add>, %5, %cst_4 [0] : vector<16x1xf32> to vector<1xf32>
    %7 = vector.shape_cast %6 : vector<1xf32> to vector<1x1xf32>
    %cst_5 = arith.constant 0.001953125 : f32
    %8 = vector.broadcast %cst_5 : f32 to vector<1x1xf32>
    %9 = arith.mulf %7, %8 : vector<1x1xf32>
    %10 = vector.broadcast %9 : vector<1x1xf32> to vector<16x32xf32>
    %11 = arith.subf %3, %10 : vector<16x32xf32>
    %12 = arith.mulf %11, %11 : vector<16x32xf32>
    %cst_6 = arith.constant dense<0.000000e+00> : vector<16xf32>
    %13 = vector.multi_reduction <add>, %12, %cst_6 [1] : vector<16x32xf32> to vector<16xf32>
    %14 = vector.shape_cast %13 : vector<16xf32> to vector<16x1xf32>
    %cst_7 = arith.constant dense<0.000000e+00> : vector<1xf32>
    %15 = vector.multi_reduction <add>, %14, %cst_7 [0] : vector<16x1xf32> to vector<1xf32>
    %16 = vector.shape_cast %15 : vector<1xf32> to vector<1x1xf32>
    %cst_8 = arith.constant 0.001953125 : f32
    %17 = vector.broadcast %cst_8 : f32 to vector<1x1xf32>
    %18 = arith.mulf %16, %17 : vector<1x1xf32>
    %cst_9 = arith.constant 9.99999974E-6 : f32
    %19 = vector.broadcast %cst_9 : f32 to vector<1x1xf32>
    %20 = arith.addf %18, %19 : vector<1x1xf32>
    %21 = math.rsqrt %20 : vector<1x1xf32>
    %22 = vector.broadcast %21 : vector<1x1xf32> to vector<16x32xf32>
    %23 = arith.mulf %11, %22 : vector<16x32xf32>
    %c0_10 = arith.constant 0 : index
    %c0_11 = arith.constant 0 : index
    %c0_12 = arith.constant 0 : index
    %24 = vector.load %arg3[%c0_10, %c0_11, %c0_12] : memref<4x16x32xf32, #tpu.memory_space<vmem>>, vector<1x16x32xf32>
    %25 = vector.shape_cast %24 : vector<1x16x32xf32> to vector<16x32xf32>
    %26 = arith.mulf %23, %25 : vector<16x32xf32>
    %c0_13 = arith.constant 0 : index
    %c0_14 = arith.constant 0 : index
    %c0_15 = arith.constant 0 : index
    %27 = vector.load %arg4[%c0_13, %c0_14, %c0_15] : memref<4x16x32xf32, #tpu.memory_space<vmem>>, vector<1x16x32xf32>
    %28 = vector.shape_cast %27 : vector<1x16x32xf32> to vector<16x32xf32>
    %29 = arith.addf %26, %28 : vector<16x32xf32>
    %cst_16 = arith.constant 0.000000e+00 : f32
    %30 = vector.broadcast %cst_16 : f32 to vector<16x32xf32>
    %c0_17 = arith.constant 0 : index
    %c0_18 = arith.constant 0 : index
    %c0_19 = arith.constant 0 : index
    %31 = vector.load %arg7[%c0_17, %c0_18, %c0_19] : memref<2x1x32xf32, #tpu.memory_space<vmem>>, vector<1x1x32xf32>
    %32 = vector.shape_cast %31 : vector<1x1x32xf32> to vector<1x32xf32>
    %33 = vector.broadcast %32 : vector<1x32xf32> to vector<16x32xf32>
    %34 = arith.addf %30, %33 : vector<16x32xf32>
    %c0_20 = arith.constant 0 : index
    %c0_21 = arith.constant 0 : index
    %c0_22 = arith.constant 0 : index
    %35 = vector.load %arg5[%c0_20, %c0_21, %c0_22] : memref<5x16x16xf32, #tpu.memory_space<vmem>>, vector<1x16x16xf32>
    %36 = vector.shape_cast %35 : vector<1x16x16xf32> to vector<16x16xf32>
    %cst_23 = arith.constant dense<0.000000e+00> : vector<16x32xf32>
    %37 = tpu.matmul %36, %29, %cst_23 {dimension_numbers = #tpu.dot_dimension_numbers<[1], [0], [0], [1], [0, 0, 1, 1], [], []>} : vector<16x16xf32>, vector<16x32xf32>, vector<16x32xf32> -> vector<16x32xf32>
    %c0_24 = arith.constant 0 : index
    %c0_25 = arith.constant 0 : index
    %c0_26 = arith.constant 0 : index
    %c0_27 = arith.constant 0 : index
    %38 = vector.load %arg6[%c0_24, %c0_25, %c0_26, %c0_27] : memref<2x5x32x32xf32, #tpu.memory_space<vmem>>, vector<1x1x32x32xf32>
    %39 = vector.shape_cast %38 : vector<1x1x32x32xf32> to vector<32x32xf32>
    %cst_28 = arith.constant dense<0.000000e+00> : vector<16x32xf32>
    %40 = tpu.matmul %37, %39, %cst_28 {dimension_numbers = #tpu.dot_dimension_numbers<[1], [0], [0], [1], [0, 0, 1, 1], [], []>} : vector<16x32xf32>, vector<32x32xf32>, vector<16x32xf32> -> vector<16x32xf32>
    %41 = arith.addf %34, %40 : vector<16x32xf32>
    %c1 = arith.constant 1 : index
    %c0_29 = arith.constant 0 : index
    %c0_30 = arith.constant 0 : index
    %42 = vector.load %arg5[%c1, %c0_29, %c0_30] : memref<5x16x16xf32, #tpu.memory_space<vmem>>, vector<1x16x16xf32>
    %43 = vector.shape_cast %42 : vector<1x16x16xf32> to vector<16x16xf32>
    %cst_31 = arith.constant dense<0.000000e+00> : vector<16x32xf32>
    %44 = tpu.matmul %43, %29, %cst_31 {dimension_numbers = #tpu.dot_dimension_numbers<[1], [0], [0], [1], [0, 0, 1, 1], [], []>} : vector<16x16xf32>, vector<16x32xf32>, vector<16x32xf32> -> vector<16x32xf32>
    %c0_32 = arith.constant 0 : index
    %c1_33 = arith.constant 1 : index
    %c0_34 = arith.constant 0 : index
    %c0_35 = arith.constant 0 : index
    %45 = vector.load %arg6[%c0_32, %c1_33, %c0_34, %c0_35] : memref<2x5x32x32xf32, #tpu.memory_space<vmem>>, vector<1x1x32x32xf32>
    %46 = vector.shape_cast %45 : vector<1x1x32x32xf32> to vector<32x32xf32>
    %cst_36 = arith.constant dense<0.000000e+00> : vector<16x32xf32>
    %47 = tpu.matmul %44, %46, %cst_36 {dimension_numbers = #tpu.dot_dimension_numbers<[1], [0], [0], [1], [0, 0, 1, 1], [], []>} : vector<16x32xf32>, vector<32x32xf32>, vector<16x32xf32> -> vector<16x32xf32>
    %48 = arith.addf %41, %47 : vector<16x32xf32>
    %c2 = arith.constant 2 : index
    %c0_37 = arith.constant 0 : index
    %c0_38 = arith.constant 0 : index
    %49 = vector.load %arg5[%c2, %c0_37, %c0_38] : memref<5x16x16xf32, #tpu.memory_space<vmem>>, vector<1x16x16xf32>
    %50 = vector.shape_cast %49 : vector<1x16x16xf32> to vector<16x16xf32>
    %cst_39 = arith.constant dense<0.000000e+00> : vector<16x32xf32>
    %51 = tpu.matmul %50, %29, %cst_39 {dimension_numbers = #tpu.dot_dimension_numbers<[1], [0], [0], [1], [0, 0, 1, 1], [], []>} : vector<16x16xf32>, vector<16x32xf32>, vector<16x32xf32> -> vector<16x32xf32>
    %c0_40 = arith.constant 0 : index
    %c2_41 = arith.constant 2 : index
    %c0_42 = arith.constant 0 : index
    %c0_43 = arith.constant 0 : index
    %52 = vector.load %arg6[%c0_40, %c2_41, %c0_42, %c0_43] : memref<2x5x32x32xf32, #tpu.memory_space<vmem>>, vector<1x1x32x32xf32>
    %53 = vector.shape_cast %52 : vector<1x1x32x32xf32> to vector<32x32xf32>
    %cst_44 = arith.constant dense<0.000000e+00> : vector<16x32xf32>
    %54 = tpu.matmul %51, %53, %cst_44 {dimension_numbers = #tpu.dot_dimension_numbers<[1], [0], [0], [1], [0, 0, 1, 1], [], []>} : vector<16x32xf32>, vector<32x32xf32>, vector<16x32xf32> -> vector<16x32xf32>
    %55 = arith.addf %48, %54 : vector<16x32xf32>
    %c3 = arith.constant 3 : index
    %c0_45 = arith.constant 0 : index
    %c0_46 = arith.constant 0 : index
    %56 = vector.load %arg5[%c3, %c0_45, %c0_46] : memref<5x16x16xf32, #tpu.memory_space<vmem>>, vector<1x16x16xf32>
    %57 = vector.shape_cast %56 : vector<1x16x16xf32> to vector<16x16xf32>
    %cst_47 = arith.constant dense<0.000000e+00> : vector<16x32xf32>
    %58 = tpu.matmul %57, %29, %cst_47 {dimension_numbers = #tpu.dot_dimension_numbers<[1], [0], [0], [1], [0, 0, 1, 1], [], []>} : vector<16x16xf32>, vector<16x32xf32>, vector<16x32xf32> -> vector<16x32xf32>
    %c0_48 = arith.constant 0 : index
    %c3_49 = arith.constant 3 : index
    %c0_50 = arith.constant 0 : index
    %c0_51 = arith.constant 0 : index
    %59 = vector.load %arg6[%c0_48, %c3_49, %c0_50, %c0_51] : memref<2x5x32x32xf32, #tpu.memory_space<vmem>>, vector<1x1x32x32xf32>
    %60 = vector.shape_cast %59 : vector<1x1x32x32xf32> to vector<32x32xf32>
    %cst_52 = arith.constant dense<0.000000e+00> : vector<16x32xf32>
    %61 = tpu.matmul %58, %60, %cst_52 {dimension_numbers = #tpu.dot_dimension_numbers<[1], [0], [0], [1], [0, 0, 1, 1], [], []>} : vector<16x32xf32>, vector<32x32xf32>, vector<16x32xf32> -> vector<16x32xf32>
    %62 = arith.addf %55, %61 : vector<16x32xf32>
    %c4 = arith.constant 4 : index
    %c0_53 = arith.constant 0 : index
    %c0_54 = arith.constant 0 : index
    %63 = vector.load %arg5[%c4, %c0_53, %c0_54] : memref<5x16x16xf32, #tpu.memory_space<vmem>>, vector<1x16x16xf32>
    %64 = vector.shape_cast %63 : vector<1x16x16xf32> to vector<16x16xf32>
    %cst_55 = arith.constant dense<0.000000e+00> : vector<16x32xf32>
    %65 = tpu.matmul %64, %29, %cst_55 {dimension_numbers = #tpu.dot_dimension_numbers<[1], [0], [0], [1], [0, 0, 1, 1], [], []>} : vector<16x16xf32>, vector<16x32xf32>, vector<16x32xf32> -> vector<16x32xf32>
    %c0_56 = arith.constant 0 : index
    %c4_57 = arith.constant 4 : index
    %c0_58 = arith.constant 0 : index
    %c0_59 = arith.constant 0 : index
    %66 = vector.load %arg6[%c0_56, %c4_57, %c0_58, %c0_59] : memref<2x5x32x32xf32, #tpu.memory_space<vmem>>, vector<1x1x32x32xf32>
    %67 = vector.shape_cast %66 : vector<1x1x32x32xf32> to vector<32x32xf32>
    %cst_60 = arith.constant dense<0.000000e+00> : vector<16x32xf32>
    %68 = tpu.matmul %65, %67, %cst_60 {dimension_numbers = #tpu.dot_dimension_numbers<[1], [0], [0], [1], [0, 0, 1, 1], [], []>} : vector<16x32xf32>, vector<32x32xf32>, vector<16x32xf32> -> vector<16x32xf32>
    %69 = arith.addf %62, %68 : vector<16x32xf32>
    %cst_61 = arith.constant 0.000000e+00 : f32
    %70 = vector.broadcast %cst_61 : f32 to vector<16x32xf32>
    %71 = arith.maximumf %69, %70 : vector<16x32xf32>
    %72 = arith.addf %71, %3 : vector<16x32xf32>
    %cst_62 = arith.constant dense<0.000000e+00> : vector<16xf32>
    %73 = vector.multi_reduction <add>, %72, %cst_62 [1] : vector<16x32xf32> to vector<16xf32>
    %74 = vector.shape_cast %73 : vector<16xf32> to vector<16x1xf32>
    %cst_63 = arith.constant dense<0.000000e+00> : vector<1xf32>
    %75 = vector.multi_reduction <add>, %74, %cst_63 [0] : vector<16x1xf32> to vector<1xf32>
    %76 = vector.shape_cast %75 : vector<1xf32> to vector<1x1xf32>
    %cst_64 = arith.constant 0.001953125 : f32
    %77 = vector.broadcast %cst_64 : f32 to vector<1x1xf32>
    %78 = arith.mulf %76, %77 : vector<1x1xf32>
    %79 = vector.broadcast %78 : vector<1x1xf32> to vector<16x32xf32>
    %80 = arith.subf %72, %79 : vector<16x32xf32>
    %81 = arith.mulf %80, %80 : vector<16x32xf32>
    %cst_65 = arith.constant dense<0.000000e+00> : vector<16xf32>
    %82 = vector.multi_reduction <add>, %81, %cst_65 [1] : vector<16x32xf32> to vector<16xf32>
    %83 = vector.shape_cast %82 : vector<16xf32> to vector<16x1xf32>
    %cst_66 = arith.constant dense<0.000000e+00> : vector<1xf32>
    %84 = vector.multi_reduction <add>, %83, %cst_66 [0] : vector<16x1xf32> to vector<1xf32>
    %85 = vector.shape_cast %84 : vector<1xf32> to vector<1x1xf32>
    %cst_67 = arith.constant 0.001953125 : f32
    %86 = vector.broadcast %cst_67 : f32 to vector<1x1xf32>
    %87 = arith.mulf %85, %86 : vector<1x1xf32>
    %cst_68 = arith.constant 9.99999974E-6 : f32
    %88 = vector.broadcast %cst_68 : f32 to vector<1x1xf32>
    %89 = arith.addf %87, %88 : vector<1x1xf32>
    %90 = math.rsqrt %89 : vector<1x1xf32>
    %91 = vector.broadcast %90 : vector<1x1xf32> to vector<16x32xf32>
    %92 = arith.mulf %80, %91 : vector<16x32xf32>
    %c1_69 = arith.constant 1 : index
    %c0_70 = arith.constant 0 : index
    %c0_71 = arith.constant 0 : index
    %93 = vector.load %arg3[%c1_69, %c0_70, %c0_71] : memref<4x16x32xf32, #tpu.memory_space<vmem>>, vector<1x16x32xf32>
    %94 = vector.shape_cast %93 : vector<1x16x32xf32> to vector<16x32xf32>
    %95 = arith.mulf %92, %94 : vector<16x32xf32>
    %c1_72 = arith.constant 1 : index
    %c0_73 = arith.constant 0 : index
    %c0_74 = arith.constant 0 : index
    %96 = vector.load %arg4[%c1_72, %c0_73, %c0_74] : memref<4x16x32xf32, #tpu.memory_space<vmem>>, vector<1x16x32xf32>
    %97 = vector.shape_cast %96 : vector<1x16x32xf32> to vector<16x32xf32>
    %98 = arith.addf %95, %97 : vector<16x32xf32>
    %cst_75 = arith.constant 0.000000e+00 : f32
    %99 = vector.broadcast %cst_75 : f32 to vector<16x32xf32>
    %c1_76 = arith.constant 1 : index
    %c0_77 = arith.constant 0 : index
    %c0_78 = arith.constant 0 : index
    %100 = vector.load %arg7[%c1_76, %c0_77, %c0_78] : memref<2x1x32xf32, #tpu.memory_space<vmem>>, vector<1x1x32xf32>
    %101 = vector.shape_cast %100 : vector<1x1x32xf32> to vector<1x32xf32>
    %102 = vector.broadcast %101 : vector<1x32xf32> to vector<16x32xf32>
    %103 = arith.addf %99, %102 : vector<16x32xf32>
    %c0_79 = arith.constant 0 : index
    %c0_80 = arith.constant 0 : index
    %c0_81 = arith.constant 0 : index
    %104 = vector.load %arg5[%c0_79, %c0_80, %c0_81] : memref<5x16x16xf32, #tpu.memory_space<vmem>>, vector<1x16x16xf32>
    %105 = vector.shape_cast %104 : vector<1x16x16xf32> to vector<16x16xf32>
    %cst_82 = arith.constant dense<0.000000e+00> : vector<16x32xf32>
    %106 = tpu.matmul %105, %98, %cst_82 {dimension_numbers = #tpu.dot_dimension_numbers<[1], [0], [0], [1], [0, 0, 1, 1], [], []>} : vector<16x16xf32>, vector<16x32xf32>, vector<16x32xf32> -> vector<16x32xf32>
    %c1_83 = arith.constant 1 : index
    %c0_84 = arith.constant 0 : index
    %c0_85 = arith.constant 0 : index
    %c0_86 = arith.constant 0 : index
    %107 = vector.load %arg6[%c1_83, %c0_84, %c0_85, %c0_86] : memref<2x5x32x32xf32, #tpu.memory_space<vmem>>, vector<1x1x32x32xf32>
    %108 = vector.shape_cast %107 : vector<1x1x32x32xf32> to vector<32x32xf32>
    %cst_87 = arith.constant dense<0.000000e+00> : vector<16x32xf32>
    %109 = tpu.matmul %106, %108, %cst_87 {dimension_numbers = #tpu.dot_dimension_numbers<[1], [0], [0], [1], [0, 0, 1, 1], [], []>} : vector<16x32xf32>, vector<32x32xf32>, vector<16x32xf32> -> vector<16x32xf32>
    %110 = arith.addf %103, %109 : vector<16x32xf32>
    %c1_88 = arith.constant 1 : index
    %c0_89 = arith.constant 0 : index
    %c0_90 = arith.constant 0 : index
    %111 = vector.load %arg5[%c1_88, %c0_89, %c0_90] : memref<5x16x16xf32, #tpu.memory_space<vmem>>, vector<1x16x16xf32>
    %112 = vector.shape_cast %111 : vector<1x16x16xf32> to vector<16x16xf32>
    %cst_91 = arith.constant dense<0.000000e+00> : vector<16x32xf32>
    %113 = tpu.matmul %112, %98, %cst_91 {dimension_numbers = #tpu.dot_dimension_numbers<[1], [0], [0], [1], [0, 0, 1, 1], [], []>} : vector<16x16xf32>, vector<16x32xf32>, vector<16x32xf32> -> vector<16x32xf32>
    %c1_92 = arith.constant 1 : index
    %c1_93 = arith.constant 1 : index
    %c0_94 = arith.constant 0 : index
    %c0_95 = arith.constant 0 : index
    %114 = vector.load %arg6[%c1_92, %c1_93, %c0_94, %c0_95] : memref<2x5x32x32xf32, #tpu.memory_space<vmem>>, vector<1x1x32x32xf32>
    %115 = vector.shape_cast %114 : vector<1x1x32x32xf32> to vector<32x32xf32>
    %cst_96 = arith.constant dense<0.000000e+00> : vector<16x32xf32>
    %116 = tpu.matmul %113, %115, %cst_96 {dimension_numbers = #tpu.dot_dimension_numbers<[1], [0], [0], [1], [0, 0, 1, 1], [], []>} : vector<16x32xf32>, vector<32x32xf32>, vector<16x32xf32> -> vector<16x32xf32>
    %117 = arith.addf %110, %116 : vector<16x32xf32>
    %c2_97 = arith.constant 2 : index
    %c0_98 = arith.constant 0 : index
    %c0_99 = arith.constant 0 : index
    %118 = vector.load %arg5[%c2_97, %c0_98, %c0_99] : memref<5x16x16xf32, #tpu.memory_space<vmem>>, vector<1x16x16xf32>
    %119 = vector.shape_cast %118 : vector<1x16x16xf32> to vector<16x16xf32>
    %cst_100 = arith.constant dense<0.000000e+00> : vector<16x32xf32>
    %120 = tpu.matmul %119, %98, %cst_100 {dimension_numbers = #tpu.dot_dimension_numbers<[1], [0], [0], [1], [0, 0, 1, 1], [], []>} : vector<16x16xf32>, vector<16x32xf32>, vector<16x32xf32> -> vector<16x32xf32>
    %c1_101 = arith.constant 1 : index
    %c2_102 = arith.constant 2 : index
    %c0_103 = arith.constant 0 : index
    %c0_104 = arith.constant 0 : index
    %121 = vector.load %arg6[%c1_101, %c2_102, %c0_103, %c0_104] : memref<2x5x32x32xf32, #tpu.memory_space<vmem>>, vector<1x1x32x32xf32>
    %122 = vector.shape_cast %121 : vector<1x1x32x32xf32> to vector<32x32xf32>
    %cst_105 = arith.constant dense<0.000000e+00> : vector<16x32xf32>
    %123 = tpu.matmul %120, %122, %cst_105 {dimension_numbers = #tpu.dot_dimension_numbers<[1], [0], [0], [1], [0, 0, 1, 1], [], []>} : vector<16x32xf32>, vector<32x32xf32>, vector<16x32xf32> -> vector<16x32xf32>
    %124 = arith.addf %117, %123 : vector<16x32xf32>
    %c3_106 = arith.constant 3 : index
    %c0_107 = arith.constant 0 : index
    %c0_108 = arith.constant 0 : index
    %125 = vector.load %arg5[%c3_106, %c0_107, %c0_108] : memref<5x16x16xf32, #tpu.memory_space<vmem>>, vector<1x16x16xf32>
    %126 = vector.shape_cast %125 : vector<1x16x16xf32> to vector<16x16xf32>
    %cst_109 = arith.constant dense<0.000000e+00> : vector<16x32xf32>
    %127 = tpu.matmul %126, %98, %cst_109 {dimension_numbers = #tpu.dot_dimension_numbers<[1], [0], [0], [1], [0, 0, 1, 1], [], []>} : vector<16x16xf32>, vector<16x32xf32>, vector<16x32xf32> -> vector<16x32xf32>
    %c1_110 = arith.constant 1 : index
    %c3_111 = arith.constant 3 : index
    %c0_112 = arith.constant 0 : index
    %c0_113 = arith.constant 0 : index
    %128 = vector.load %arg6[%c1_110, %c3_111, %c0_112, %c0_113] : memref<2x5x32x32xf32, #tpu.memory_space<vmem>>, vector<1x1x32x32xf32>
    %129 = vector.shape_cast %128 : vector<1x1x32x32xf32> to vector<32x32xf32>
    %cst_114 = arith.constant dense<0.000000e+00> : vector<16x32xf32>
    %130 = tpu.matmul %127, %129, %cst_114 {dimension_numbers = #tpu.dot_dimension_numbers<[1], [0], [0], [1], [0, 0, 1, 1], [], []>} : vector<16x32xf32>, vector<32x32xf32>, vector<16x32xf32> -> vector<16x32xf32>
    %131 = arith.addf %124, %130 : vector<16x32xf32>
    %c4_115 = arith.constant 4 : index
    %c0_116 = arith.constant 0 : index
    %c0_117 = arith.constant 0 : index
    %132 = vector.load %arg5[%c4_115, %c0_116, %c0_117] : memref<5x16x16xf32, #tpu.memory_space<vmem>>, vector<1x16x16xf32>
    %133 = vector.shape_cast %132 : vector<1x16x16xf32> to vector<16x16xf32>
    %cst_118 = arith.constant dense<0.000000e+00> : vector<16x32xf32>
    %134 = tpu.matmul %133, %98, %cst_118 {dimension_numbers = #tpu.dot_dimension_numbers<[1], [0], [0], [1], [0, 0, 1, 1], [], []>} : vector<16x16xf32>, vector<16x32xf32>, vector<16x32xf32> -> vector<16x32xf32>
    %c1_119 = arith.constant 1 : index
    %c4_120 = arith.constant 4 : index
    %c0_121 = arith.constant 0 : index
    %c0_122 = arith.constant 0 : index
    %135 = vector.load %arg6[%c1_119, %c4_120, %c0_121, %c0_122] : memref<2x5x32x32xf32, #tpu.memory_space<vmem>>, vector<1x1x32x32xf32>
    %136 = vector.shape_cast %135 : vector<1x1x32x32xf32> to vector<32x32xf32>
    %cst_123 = arith.constant dense<0.000000e+00> : vector<16x32xf32>
    %137 = tpu.matmul %134, %136, %cst_123 {dimension_numbers = #tpu.dot_dimension_numbers<[1], [0], [0], [1], [0, 0, 1, 1], [], []>} : vector<16x32xf32>, vector<32x32xf32>, vector<16x32xf32> -> vector<16x32xf32>
    %138 = arith.addf %131, %137 : vector<16x32xf32>
    %cst_124 = arith.constant 0.000000e+00 : f32
    %139 = vector.broadcast %cst_124 : f32 to vector<16x32xf32>
    %140 = arith.maximumf %138, %139 : vector<16x32xf32>
    %141 = arith.addf %140, %72 : vector<16x32xf32>
    %cst_125 = arith.constant dense<0.000000e+00> : vector<16xf32>
    %142 = vector.multi_reduction <add>, %141, %cst_125 [1] : vector<16x32xf32> to vector<16xf32>
    %143 = vector.shape_cast %142 : vector<16xf32> to vector<16x1xf32>
    %cst_126 = arith.constant dense<0.000000e+00> : vector<1xf32>
    %144 = vector.multi_reduction <add>, %143, %cst_126 [0] : vector<16x1xf32> to vector<1xf32>
    %145 = vector.shape_cast %144 : vector<1xf32> to vector<1x1xf32>
    %cst_127 = arith.constant 0.001953125 : f32
    %146 = vector.broadcast %cst_127 : f32 to vector<1x1xf32>
    %147 = arith.mulf %145, %146 : vector<1x1xf32>
    %148 = vector.broadcast %147 : vector<1x1xf32> to vector<16x32xf32>
    %149 = arith.subf %141, %148 : vector<16x32xf32>
    %150 = arith.mulf %149, %149 : vector<16x32xf32>
    %cst_128 = arith.constant dense<0.000000e+00> : vector<16xf32>
    %151 = vector.multi_reduction <add>, %150, %cst_128 [1] : vector<16x32xf32> to vector<16xf32>
    %152 = vector.shape_cast %151 : vector<16xf32> to vector<16x1xf32>
    %cst_129 = arith.constant dense<0.000000e+00> : vector<1xf32>
    %153 = vector.multi_reduction <add>, %152, %cst_129 [0] : vector<16x1xf32> to vector<1xf32>
    %154 = vector.shape_cast %153 : vector<1xf32> to vector<1x1xf32>
    %cst_130 = arith.constant 0.001953125 : f32
    %155 = vector.broadcast %cst_130 : f32 to vector<1x1xf32>
    %156 = arith.mulf %154, %155 : vector<1x1xf32>
    %cst_131 = arith.constant 9.99999974E-6 : f32
    %157 = vector.broadcast %cst_131 : f32 to vector<1x1xf32>
    %158 = arith.addf %156, %157 : vector<1x1xf32>
    %159 = math.rsqrt %158 : vector<1x1xf32>
    %160 = vector.broadcast %159 : vector<1x1xf32> to vector<16x32xf32>
    %161 = arith.mulf %149, %160 : vector<16x32xf32>
    %c2_132 = arith.constant 2 : index
    %c0_133 = arith.constant 0 : index
    %c0_134 = arith.constant 0 : index
    %162 = vector.load %arg3[%c2_132, %c0_133, %c0_134] : memref<4x16x32xf32, #tpu.memory_space<vmem>>, vector<1x16x32xf32>
    %163 = vector.shape_cast %162 : vector<1x16x32xf32> to vector<16x32xf32>
    %164 = arith.mulf %161, %163 : vector<16x32xf32>
    %c2_135 = arith.constant 2 : index
    %c0_136 = arith.constant 0 : index
    %c0_137 = arith.constant 0 : index
    %165 = vector.load %arg4[%c2_135, %c0_136, %c0_137] : memref<4x16x32xf32, #tpu.memory_space<vmem>>, vector<1x16x32xf32>
    %166 = vector.shape_cast %165 : vector<1x16x32xf32> to vector<16x32xf32>
    %167 = arith.addf %164, %166 : vector<16x32xf32>
    %c0_138 = arith.constant 0 : index
    %c0_139 = arith.constant 0 : index
    %c0_140 = arith.constant 0 : index
    %168 = vector.load %arg14[%c0_138, %c0_139, %c0_140] : memref<1x1x16xf32, #tpu.memory_space<vmem>>, vector<1x1x16xf32>
    %169 = vector.shape_cast %168 : vector<1x1x16xf32> to vector<1x16xf32>
    %c0_141 = arith.constant 0 : index
    %c0_142 = arith.constant 0 : index
    %c0_143 = arith.constant 0 : index
    %170 = vector.load %arg15[%c0_141, %c0_142, %c0_143] : memref<1x16x1xf32, #tpu.memory_space<vmem>>, vector<1x16x1xf32>
    %171 = vector.shape_cast %170 : vector<1x16x1xf32> to vector<16x1xf32>
    %cst_144 = arith.constant 0.000000e+00 : f32
    %172 = vector.broadcast %cst_144 : f32 to vector<16x32xf32>
    %c0_145 = arith.constant 0 : index
    %c0_146 = arith.constant 0 : index
    %c0_147 = arith.constant 0 : index
    %173 = vector.load %arg8[%c0_145, %c0_146, %c0_147] : memref<4x32x8xf32, #tpu.memory_space<vmem>>, vector<1x32x8xf32>
    %174 = vector.shape_cast %173 : vector<1x32x8xf32> to vector<32x8xf32>
    %cst_148 = arith.constant dense<0.000000e+00> : vector<16x8xf32>
    %175 = tpu.matmul %167, %174, %cst_148 {dimension_numbers = #tpu.dot_dimension_numbers<[1], [0], [0], [1], [0, 0, 1, 1], [], []>} : vector<16x32xf32>, vector<32x8xf32>, vector<16x8xf32> -> vector<16x8xf32>
    %c0_149 = arith.constant 0 : index
    %c0_150 = arith.constant 0 : index
    %c0_151 = arith.constant 0 : index
    %176 = vector.load %arg9[%c0_149, %c0_150, %c0_151] : memref<4x32x8xf32, #tpu.memory_space<vmem>>, vector<1x32x8xf32>
    %177 = vector.shape_cast %176 : vector<1x32x8xf32> to vector<32x8xf32>
    %cst_152 = arith.constant dense<0.000000e+00> : vector<16x8xf32>
    %178 = tpu.matmul %167, %177, %cst_152 {dimension_numbers = #tpu.dot_dimension_numbers<[1], [0], [0], [1], [0, 0, 1, 1], [], []>} : vector<16x32xf32>, vector<32x8xf32>, vector<16x8xf32> -> vector<16x8xf32>
    %c0_153 = arith.constant 0 : index
    %c0_154 = arith.constant 0 : index
    %c0_155 = arith.constant 0 : index
    %179 = vector.load %arg10[%c0_153, %c0_154, %c0_155] : memref<4x32x8xf32, #tpu.memory_space<vmem>>, vector<1x32x8xf32>
    %180 = vector.shape_cast %179 : vector<1x32x8xf32> to vector<32x8xf32>
    %cst_156 = arith.constant dense<0.000000e+00> : vector<16x8xf32>
    %181 = tpu.matmul %167, %180, %cst_156 {dimension_numbers = #tpu.dot_dimension_numbers<[1], [0], [0], [1], [0, 0, 1, 1], [], []>} : vector<16x32xf32>, vector<32x8xf32>, vector<16x8xf32> -> vector<16x8xf32>
    %cst_157 = arith.constant dense<0.000000e+00> : vector<16x16xf32>
    %182 = tpu.matmul %175, %178, %cst_157 {dimension_numbers = #tpu.dot_dimension_numbers<[1], [1], [0], [0], [0, 0, 1, 0], [], []>} : vector<16x8xf32>, vector<16x8xf32>, vector<16x16xf32> -> vector<16x16xf32>
    %cst_158 = arith.constant 0.353553385 : f32
    %183 = vector.broadcast %cst_158 : f32 to vector<16x16xf32>
    %184 = arith.mulf %182, %183 : vector<16x16xf32>
    %185 = vector.broadcast %169 : vector<1x16xf32> to vector<16x16xf32>
    %186 = arith.mulf %184, %185 : vector<16x16xf32>
    %cst_159 = arith.constant 1.000000e+00 : f32
    %187 = vector.broadcast %cst_159 : f32 to vector<1x16xf32>
    %188 = arith.subf %187, %169 : vector<1x16xf32>
    %cst_160 = arith.constant -1.000000e+30 : f32
    %189 = vector.broadcast %cst_160 : f32 to vector<1x16xf32>
    %190 = arith.mulf %188, %189 : vector<1x16xf32>
    %191 = vector.broadcast %190 : vector<1x16xf32> to vector<16x16xf32>
    %192 = arith.addf %186, %191 : vector<16x16xf32>
    %cst_161 = arith.constant dense<0xFF800000> : vector<16xf32>
    %193 = vector.multi_reduction <maximumf>, %192, %cst_161 [1] : vector<16x16xf32> to vector<16xf32>
    %194 = vector.shape_cast %193 : vector<16xf32> to vector<16x1xf32>
    %195 = vector.broadcast %194 : vector<16x1xf32> to vector<16x16xf32>
    %196 = arith.subf %192, %195 : vector<16x16xf32>
    %197 = math.exp %196 : vector<16x16xf32>
    %cst_162 = arith.constant dense<0.000000e+00> : vector<16xf32>
    %198 = vector.multi_reduction <add>, %197, %cst_162 [1] : vector<16x16xf32> to vector<16xf32>
    %199 = vector.shape_cast %198 : vector<16xf32> to vector<16x1xf32>
    %200 = vector.broadcast %199 : vector<16x1xf32> to vector<16x16xf32>
    %201 = arith.divf %197, %200 : vector<16x16xf32>
    %202 = vector.broadcast %171 : vector<16x1xf32> to vector<16x16xf32>
    %203 = arith.mulf %201, %202 : vector<16x16xf32>
    %cst_163 = arith.constant dense<0.000000e+00> : vector<16x8xf32>
    %204 = tpu.matmul %203, %181, %cst_163 {dimension_numbers = #tpu.dot_dimension_numbers<[1], [0], [0], [1], [0, 0, 1, 1], [], []>} : vector<16x16xf32>, vector<16x8xf32>, vector<16x8xf32> -> vector<16x8xf32>
    %c0_164 = arith.constant 0 : index
    %c0_165 = arith.constant 0 : index
    %c0_166 = arith.constant 0 : index
    %205 = vector.load %arg11[%c0_164, %c0_165, %c0_166] : memref<4x8x32xf32, #tpu.memory_space<vmem>>, vector<1x8x32xf32>
    %206 = vector.shape_cast %205 : vector<1x8x32xf32> to vector<8x32xf32>
    %cst_167 = arith.constant dense<0.000000e+00> : vector<16x32xf32>
    %207 = tpu.matmul %204, %206, %cst_167 {dimension_numbers = #tpu.dot_dimension_numbers<[1], [0], [0], [1], [0, 0, 1, 1], [], []>} : vector<16x8xf32>, vector<8x32xf32>, vector<16x32xf32> -> vector<16x32xf32>
    %208 = arith.addf %172, %207 : vector<16x32xf32>
    %c1_168 = arith.constant 1 : index
    %c0_169 = arith.constant 0 : index
    %c0_170 = arith.constant 0 : index
    %209 = vector.load %arg8[%c1_168, %c0_169, %c0_170] : memref<4x32x8xf32, #tpu.memory_space<vmem>>, vector<1x32x8xf32>
    %210 = vector.shape_cast %209 : vector<1x32x8xf32> to vector<32x8xf32>
    %cst_171 = arith.constant dense<0.000000e+00> : vector<16x8xf32>
    %211 = tpu.matmul %167, %210, %cst_171 {dimension_numbers = #tpu.dot_dimension_numbers<[1], [0], [0], [1], [0, 0, 1, 1], [], []>} : vector<16x32xf32>, vector<32x8xf32>, vector<16x8xf32> -> vector<16x8xf32>
    %c1_172 = arith.constant 1 : index
    %c0_173 = arith.constant 0 : index
    %c0_174 = arith.constant 0 : index
    %212 = vector.load %arg9[%c1_172, %c0_173, %c0_174] : memref<4x32x8xf32, #tpu.memory_space<vmem>>, vector<1x32x8xf32>
    %213 = vector.shape_cast %212 : vector<1x32x8xf32> to vector<32x8xf32>
    %cst_175 = arith.constant dense<0.000000e+00> : vector<16x8xf32>
    %214 = tpu.matmul %167, %213, %cst_175 {dimension_numbers = #tpu.dot_dimension_numbers<[1], [0], [0], [1], [0, 0, 1, 1], [], []>} : vector<16x32xf32>, vector<32x8xf32>, vector<16x8xf32> -> vector<16x8xf32>
    %c1_176 = arith.constant 1 : index
    %c0_177 = arith.constant 0 : index
    %c0_178 = arith.constant 0 : index
    %215 = vector.load %arg10[%c1_176, %c0_177, %c0_178] : memref<4x32x8xf32, #tpu.memory_space<vmem>>, vector<1x32x8xf32>
    %216 = vector.shape_cast %215 : vector<1x32x8xf32> to vector<32x8xf32>
    %cst_179 = arith.constant dense<0.000000e+00> : vector<16x8xf32>
    %217 = tpu.matmul %167, %216, %cst_179 {dimension_numbers = #tpu.dot_dimension_numbers<[1], [0], [0], [1], [0, 0, 1, 1], [], []>} : vector<16x32xf32>, vector<32x8xf32>, vector<16x8xf32> -> vector<16x8xf32>
    %cst_180 = arith.constant dense<0.000000e+00> : vector<16x16xf32>
    %218 = tpu.matmul %211, %214, %cst_180 {dimension_numbers = #tpu.dot_dimension_numbers<[1], [1], [0], [0], [0, 0, 1, 0], [], []>} : vector<16x8xf32>, vector<16x8xf32>, vector<16x16xf32> -> vector<16x16xf32>
    %cst_181 = arith.constant 0.353553385 : f32
    %219 = vector.broadcast %cst_181 : f32 to vector<16x16xf32>
    %220 = arith.mulf %218, %219 : vector<16x16xf32>
    %221 = vector.broadcast %169 : vector<1x16xf32> to vector<16x16xf32>
    %222 = arith.mulf %220, %221 : vector<16x16xf32>
    %cst_182 = arith.constant 1.000000e+00 : f32
    %223 = vector.broadcast %cst_182 : f32 to vector<1x16xf32>
    %224 = arith.subf %223, %169 : vector<1x16xf32>
    %cst_183 = arith.constant -1.000000e+30 : f32
    %225 = vector.broadcast %cst_183 : f32 to vector<1x16xf32>
    %226 = arith.mulf %224, %225 : vector<1x16xf32>
    %227 = vector.broadcast %226 : vector<1x16xf32> to vector<16x16xf32>
    %228 = arith.addf %222, %227 : vector<16x16xf32>
    %cst_184 = arith.constant dense<0xFF800000> : vector<16xf32>
    %229 = vector.multi_reduction <maximumf>, %228, %cst_184 [1] : vector<16x16xf32> to vector<16xf32>
    %230 = vector.shape_cast %229 : vector<16xf32> to vector<16x1xf32>
    %231 = vector.broadcast %230 : vector<16x1xf32> to vector<16x16xf32>
    %232 = arith.subf %228, %231 : vector<16x16xf32>
    %233 = math.exp %232 : vector<16x16xf32>
    %cst_185 = arith.constant dense<0.000000e+00> : vector<16xf32>
    %234 = vector.multi_reduction <add>, %233, %cst_185 [1] : vector<16x16xf32> to vector<16xf32>
    %235 = vector.shape_cast %234 : vector<16xf32> to vector<16x1xf32>
    %236 = vector.broadcast %235 : vector<16x1xf32> to vector<16x16xf32>
    %237 = arith.divf %233, %236 : vector<16x16xf32>
    %238 = vector.broadcast %171 : vector<16x1xf32> to vector<16x16xf32>
    %239 = arith.mulf %237, %238 : vector<16x16xf32>
    %cst_186 = arith.constant dense<0.000000e+00> : vector<16x8xf32>
    %240 = tpu.matmul %239, %217, %cst_186 {dimension_numbers = #tpu.dot_dimension_numbers<[1], [0], [0], [1], [0, 0, 1, 1], [], []>} : vector<16x16xf32>, vector<16x8xf32>, vector<16x8xf32> -> vector<16x8xf32>
    %c1_187 = arith.constant 1 : index
    %c0_188 = arith.constant 0 : index
    %c0_189 = arith.constant 0 : index
    %241 = vector.load %arg11[%c1_187, %c0_188, %c0_189] : memref<4x8x32xf32, #tpu.memory_space<vmem>>, vector<1x8x32xf32>
    %242 = vector.shape_cast %241 : vector<1x8x32xf32> to vector<8x32xf32>
    %cst_190 = arith.constant dense<0.000000e+00> : vector<16x32xf32>
    %243 = tpu.matmul %240, %242, %cst_190 {dimension_numbers = #tpu.dot_dimension_numbers<[1], [0], [0], [1], [0, 0, 1, 1], [], []>} : vector<16x8xf32>, vector<8x32xf32>, vector<16x32xf32> -> vector<16x32xf32>
    %244 = arith.addf %208, %243 : vector<16x32xf32>
    %c2_191 = arith.constant 2 : index
    %c0_192 = arith.constant 0 : index
    %c0_193 = arith.constant 0 : index
    %245 = vector.load %arg8[%c2_191, %c0_192, %c0_193] : memref<4x32x8xf32, #tpu.memory_space<vmem>>, vector<1x32x8xf32>
    %246 = vector.shape_cast %245 : vector<1x32x8xf32> to vector<32x8xf32>
    %cst_194 = arith.constant dense<0.000000e+00> : vector<16x8xf32>
    %247 = tpu.matmul %167, %246, %cst_194 {dimension_numbers = #tpu.dot_dimension_numbers<[1], [0], [0], [1], [0, 0, 1, 1], [], []>} : vector<16x32xf32>, vector<32x8xf32>, vector<16x8xf32> -> vector<16x8xf32>
    %c2_195 = arith.constant 2 : index
    %c0_196 = arith.constant 0 : index
    %c0_197 = arith.constant 0 : index
    %248 = vector.load %arg9[%c2_195, %c0_196, %c0_197] : memref<4x32x8xf32, #tpu.memory_space<vmem>>, vector<1x32x8xf32>
    %249 = vector.shape_cast %248 : vector<1x32x8xf32> to vector<32x8xf32>
    %cst_198 = arith.constant dense<0.000000e+00> : vector<16x8xf32>
    %250 = tpu.matmul %167, %249, %cst_198 {dimension_numbers = #tpu.dot_dimension_numbers<[1], [0], [0], [1], [0, 0, 1, 1], [], []>} : vector<16x32xf32>, vector<32x8xf32>, vector<16x8xf32> -> vector<16x8xf32>
    %c2_199 = arith.constant 2 : index
    %c0_200 = arith.constant 0 : index
    %c0_201 = arith.constant 0 : index
    %251 = vector.load %arg10[%c2_199, %c0_200, %c0_201] : memref<4x32x8xf32, #tpu.memory_space<vmem>>, vector<1x32x8xf32>
    %252 = vector.shape_cast %251 : vector<1x32x8xf32> to vector<32x8xf32>
    %cst_202 = arith.constant dense<0.000000e+00> : vector<16x8xf32>
    %253 = tpu.matmul %167, %252, %cst_202 {dimension_numbers = #tpu.dot_dimension_numbers<[1], [0], [0], [1], [0, 0, 1, 1], [], []>} : vector<16x32xf32>, vector<32x8xf32>, vector<16x8xf32> -> vector<16x8xf32>
    %cst_203 = arith.constant dense<0.000000e+00> : vector<16x16xf32>
    %254 = tpu.matmul %247, %250, %cst_203 {dimension_numbers = #tpu.dot_dimension_numbers<[1], [1], [0], [0], [0, 0, 1, 0], [], []>} : vector<16x8xf32>, vector<16x8xf32>, vector<16x16xf32> -> vector<16x16xf32>
    %cst_204 = arith.constant 0.353553385 : f32
    %255 = vector.broadcast %cst_204 : f32 to vector<16x16xf32>
    %256 = arith.mulf %254, %255 : vector<16x16xf32>
    %257 = vector.broadcast %169 : vector<1x16xf32> to vector<16x16xf32>
    %258 = arith.mulf %256, %257 : vector<16x16xf32>
    %cst_205 = arith.constant 1.000000e+00 : f32
    %259 = vector.broadcast %cst_205 : f32 to vector<1x16xf32>
    %260 = arith.subf %259, %169 : vector<1x16xf32>
    %cst_206 = arith.constant -1.000000e+30 : f32
    %261 = vector.broadcast %cst_206 : f32 to vector<1x16xf32>
    %262 = arith.mulf %260, %261 : vector<1x16xf32>
    %263 = vector.broadcast %262 : vector<1x16xf32> to vector<16x16xf32>
    %264 = arith.addf %258, %263 : vector<16x16xf32>
    %cst_207 = arith.constant dense<0xFF800000> : vector<16xf32>
    %265 = vector.multi_reduction <maximumf>, %264, %cst_207 [1] : vector<16x16xf32> to vector<16xf32>
    %266 = vector.shape_cast %265 : vector<16xf32> to vector<16x1xf32>
    %267 = vector.broadcast %266 : vector<16x1xf32> to vector<16x16xf32>
    %268 = arith.subf %264, %267 : vector<16x16xf32>
    %269 = math.exp %268 : vector<16x16xf32>
    %cst_208 = arith.constant dense<0.000000e+00> : vector<16xf32>
    %270 = vector.multi_reduction <add>, %269, %cst_208 [1] : vector<16x16xf32> to vector<16xf32>
    %271 = vector.shape_cast %270 : vector<16xf32> to vector<16x1xf32>
    %272 = vector.broadcast %271 : vector<16x1xf32> to vector<16x16xf32>
    %273 = arith.divf %269, %272 : vector<16x16xf32>
    %274 = vector.broadcast %171 : vector<16x1xf32> to vector<16x16xf32>
    %275 = arith.mulf %273, %274 : vector<16x16xf32>
    %cst_209 = arith.constant dense<0.000000e+00> : vector<16x8xf32>
    %276 = tpu.matmul %275, %253, %cst_209 {dimension_numbers = #tpu.dot_dimension_numbers<[1], [0], [0], [1], [0, 0, 1, 1], [], []>} : vector<16x16xf32>, vector<16x8xf32>, vector<16x8xf32> -> vector<16x8xf32>
    %c2_210 = arith.constant 2 : index
    %c0_211 = arith.constant 0 : index
    %c0_212 = arith.constant 0 : index
    %277 = vector.load %arg11[%c2_210, %c0_211, %c0_212] : memref<4x8x32xf32, #tpu.memory_space<vmem>>, vector<1x8x32xf32>
    %278 = vector.shape_cast %277 : vector<1x8x32xf32> to vector<8x32xf32>
    %cst_213 = arith.constant dense<0.000000e+00> : vector<16x32xf32>
    %279 = tpu.matmul %276, %278, %cst_213 {dimension_numbers = #tpu.dot_dimension_numbers<[1], [0], [0], [1], [0, 0, 1, 1], [], []>} : vector<16x8xf32>, vector<8x32xf32>, vector<16x32xf32> -> vector<16x32xf32>
    %280 = arith.addf %244, %279 : vector<16x32xf32>
    %c3_214 = arith.constant 3 : index
    %c0_215 = arith.constant 0 : index
    %c0_216 = arith.constant 0 : index
    %281 = vector.load %arg8[%c3_214, %c0_215, %c0_216] : memref<4x32x8xf32, #tpu.memory_space<vmem>>, vector<1x32x8xf32>
    %282 = vector.shape_cast %281 : vector<1x32x8xf32> to vector<32x8xf32>
    %cst_217 = arith.constant dense<0.000000e+00> : vector<16x8xf32>
    %283 = tpu.matmul %167, %282, %cst_217 {dimension_numbers = #tpu.dot_dimension_numbers<[1], [0], [0], [1], [0, 0, 1, 1], [], []>} : vector<16x32xf32>, vector<32x8xf32>, vector<16x8xf32> -> vector<16x8xf32>
    %c3_218 = arith.constant 3 : index
    %c0_219 = arith.constant 0 : index
    %c0_220 = arith.constant 0 : index
    %284 = vector.load %arg9[%c3_218, %c0_219, %c0_220] : memref<4x32x8xf32, #tpu.memory_space<vmem>>, vector<1x32x8xf32>
    %285 = vector.shape_cast %284 : vector<1x32x8xf32> to vector<32x8xf32>
    %cst_221 = arith.constant dense<0.000000e+00> : vector<16x8xf32>
    %286 = tpu.matmul %167, %285, %cst_221 {dimension_numbers = #tpu.dot_dimension_numbers<[1], [0], [0], [1], [0, 0, 1, 1], [], []>} : vector<16x32xf32>, vector<32x8xf32>, vector<16x8xf32> -> vector<16x8xf32>
    %c3_222 = arith.constant 3 : index
    %c0_223 = arith.constant 0 : index
    %c0_224 = arith.constant 0 : index
    %287 = vector.load %arg10[%c3_222, %c0_223, %c0_224] : memref<4x32x8xf32, #tpu.memory_space<vmem>>, vector<1x32x8xf32>
    %288 = vector.shape_cast %287 : vector<1x32x8xf32> to vector<32x8xf32>
    %cst_225 = arith.constant dense<0.000000e+00> : vector<16x8xf32>
    %289 = tpu.matmul %167, %288, %cst_225 {dimension_numbers = #tpu.dot_dimension_numbers<[1], [0], [0], [1], [0, 0, 1, 1], [], []>} : vector<16x32xf32>, vector<32x8xf32>, vector<16x8xf32> -> vector<16x8xf32>
    %cst_226 = arith.constant dense<0.000000e+00> : vector<16x16xf32>
    %290 = tpu.matmul %283, %286, %cst_226 {dimension_numbers = #tpu.dot_dimension_numbers<[1], [1], [0], [0], [0, 0, 1, 0], [], []>} : vector<16x8xf32>, vector<16x8xf32>, vector<16x16xf32> -> vector<16x16xf32>
    %cst_227 = arith.constant 0.353553385 : f32
    %291 = vector.broadcast %cst_227 : f32 to vector<16x16xf32>
    %292 = arith.mulf %290, %291 : vector<16x16xf32>
    %293 = vector.broadcast %169 : vector<1x16xf32> to vector<16x16xf32>
    %294 = arith.mulf %292, %293 : vector<16x16xf32>
    %cst_228 = arith.constant 1.000000e+00 : f32
    %295 = vector.broadcast %cst_228 : f32 to vector<1x16xf32>
    %296 = arith.subf %295, %169 : vector<1x16xf32>
    %cst_229 = arith.constant -1.000000e+30 : f32
    %297 = vector.broadcast %cst_229 : f32 to vector<1x16xf32>
    %298 = arith.mulf %296, %297 : vector<1x16xf32>
    %299 = vector.broadcast %298 : vector<1x16xf32> to vector<16x16xf32>
    %300 = arith.addf %294, %299 : vector<16x16xf32>
    %cst_230 = arith.constant dense<0xFF800000> : vector<16xf32>
    %301 = vector.multi_reduction <maximumf>, %300, %cst_230 [1] : vector<16x16xf32> to vector<16xf32>
    %302 = vector.shape_cast %301 : vector<16xf32> to vector<16x1xf32>
    %303 = vector.broadcast %302 : vector<16x1xf32> to vector<16x16xf32>
    %304 = arith.subf %300, %303 : vector<16x16xf32>
    %305 = math.exp %304 : vector<16x16xf32>
    %cst_231 = arith.constant dense<0.000000e+00> : vector<16xf32>
    %306 = vector.multi_reduction <add>, %305, %cst_231 [1] : vector<16x16xf32> to vector<16xf32>
    %307 = vector.shape_cast %306 : vector<16xf32> to vector<16x1xf32>
    %308 = vector.broadcast %307 : vector<16x1xf32> to vector<16x16xf32>
    %309 = arith.divf %305, %308 : vector<16x16xf32>
    %310 = vector.broadcast %171 : vector<16x1xf32> to vector<16x16xf32>
    %311 = arith.mulf %309, %310 : vector<16x16xf32>
    %cst_232 = arith.constant dense<0.000000e+00> : vector<16x8xf32>
    %312 = tpu.matmul %311, %289, %cst_232 {dimension_numbers = #tpu.dot_dimension_numbers<[1], [0], [0], [1], [0, 0, 1, 1], [], []>} : vector<16x16xf32>, vector<16x8xf32>, vector<16x8xf32> -> vector<16x8xf32>
    %c3_233 = arith.constant 3 : index
    %c0_234 = arith.constant 0 : index
    %c0_235 = arith.constant 0 : index
    %313 = vector.load %arg11[%c3_233, %c0_234, %c0_235] : memref<4x8x32xf32, #tpu.memory_space<vmem>>, vector<1x8x32xf32>
    %314 = vector.shape_cast %313 : vector<1x8x32xf32> to vector<8x32xf32>
    %cst_236 = arith.constant dense<0.000000e+00> : vector<16x32xf32>
    %315 = tpu.matmul %312, %314, %cst_236 {dimension_numbers = #tpu.dot_dimension_numbers<[1], [0], [0], [1], [0, 0, 1, 1], [], []>} : vector<16x8xf32>, vector<8x32xf32>, vector<16x32xf32> -> vector<16x32xf32>
    %316 = arith.addf %280, %315 : vector<16x32xf32>
    %317 = arith.addf %316, %141 : vector<16x32xf32>
    %cst_237 = arith.constant dense<0.000000e+00> : vector<16xf32>
    %318 = vector.multi_reduction <add>, %317, %cst_237 [1] : vector<16x32xf32> to vector<16xf32>
    %319 = vector.shape_cast %318 : vector<16xf32> to vector<16x1xf32>
    %cst_238 = arith.constant dense<0.000000e+00> : vector<1xf32>
    %320 = vector.multi_reduction <add>, %319, %cst_238 [0] : vector<16x1xf32> to vector<1xf32>
    %321 = vector.shape_cast %320 : vector<1xf32> to vector<1x1xf32>
    %cst_239 = arith.constant 0.001953125 : f32
    %322 = vector.broadcast %cst_239 : f32 to vector<1x1xf32>
    %323 = arith.mulf %321, %322 : vector<1x1xf32>
    %324 = vector.broadcast %323 : vector<1x1xf32> to vector<16x32xf32>
    %325 = arith.subf %317, %324 : vector<16x32xf32>
    %326 = arith.mulf %325, %325 : vector<16x32xf32>
    %cst_240 = arith.constant dense<0.000000e+00> : vector<16xf32>
    %327 = vector.multi_reduction <add>, %326, %cst_240 [1] : vector<16x32xf32> to vector<16xf32>
    %328 = vector.shape_cast %327 : vector<16xf32> to vector<16x1xf32>
    %cst_241 = arith.constant dense<0.000000e+00> : vector<1xf32>
    %329 = vector.multi_reduction <add>, %328, %cst_241 [0] : vector<16x1xf32> to vector<1xf32>
    %330 = vector.shape_cast %329 : vector<1xf32> to vector<1x1xf32>
    %cst_242 = arith.constant 0.001953125 : f32
    %331 = vector.broadcast %cst_242 : f32 to vector<1x1xf32>
    %332 = arith.mulf %330, %331 : vector<1x1xf32>
    %cst_243 = arith.constant 9.99999974E-6 : f32
    %333 = vector.broadcast %cst_243 : f32 to vector<1x1xf32>
    %334 = arith.addf %332, %333 : vector<1x1xf32>
    %335 = math.rsqrt %334 : vector<1x1xf32>
    %336 = vector.broadcast %335 : vector<1x1xf32> to vector<16x32xf32>
    %337 = arith.mulf %325, %336 : vector<16x32xf32>
    %c3_244 = arith.constant 3 : index
    %c0_245 = arith.constant 0 : index
    %c0_246 = arith.constant 0 : index
    %338 = vector.load %arg3[%c3_244, %c0_245, %c0_246] : memref<4x16x32xf32, #tpu.memory_space<vmem>>, vector<1x16x32xf32>
    %339 = vector.shape_cast %338 : vector<1x16x32xf32> to vector<16x32xf32>
    %340 = arith.mulf %337, %339 : vector<16x32xf32>
    %c3_247 = arith.constant 3 : index
    %c0_248 = arith.constant 0 : index
    %c0_249 = arith.constant 0 : index
    %341 = vector.load %arg4[%c3_247, %c0_248, %c0_249] : memref<4x16x32xf32, #tpu.memory_space<vmem>>, vector<1x16x32xf32>
    %342 = vector.shape_cast %341 : vector<1x16x32xf32> to vector<16x32xf32>
    %343 = arith.addf %340, %342 : vector<16x32xf32>
    %c0_250 = arith.constant 0 : index
    %c0_251 = arith.constant 0 : index
    %344 = vector.load %arg12[%c0_250, %c0_251] : memref<32x32xf32, #tpu.memory_space<vmem>>, vector<32x32xf32>
    %cst_252 = arith.constant dense<0.000000e+00> : vector<16x32xf32>
    %345 = tpu.matmul %343, %344, %cst_252 {dimension_numbers = #tpu.dot_dimension_numbers<[1], [0], [0], [1], [0, 0, 1, 1], [], []>} : vector<16x32xf32>, vector<32x32xf32>, vector<16x32xf32> -> vector<16x32xf32>
    %c0_253 = arith.constant 0 : index
    %c0_254 = arith.constant 0 : index
    %346 = vector.load %arg13[%c0_253, %c0_254] : memref<1x32xf32, #tpu.memory_space<vmem>>, vector<1x32xf32>
    %347 = vector.broadcast %346 : vector<1x32xf32> to vector<16x32xf32>
    %348 = arith.addf %345, %347 : vector<16x32xf32>
    %cst_255 = arith.constant 0.000000e+00 : f32
    %349 = vector.broadcast %cst_255 : f32 to vector<16x32xf32>
    %350 = arith.maximumf %348, %349 : vector<16x32xf32>
    %351 = arith.addf %350, %317 : vector<16x32xf32>
    %c0_256 = arith.constant 0 : index
    %c0_257 = arith.constant 0 : index
    %c0_258 = arith.constant 0 : index
    %352 = vector.load %arg16[%c0_256, %c0_257, %c0_258] : memref<1x16x32xf32, #tpu.memory_space<vmem>>, vector<1x16x32xf32>
    %353 = vector.shape_cast %352 : vector<1x16x32xf32> to vector<16x32xf32>
    %354 = vector.shape_cast %351 : vector<16x32xf32> to vector<1x16x32xf32>
    tpu.vector_store %arg16[%c0_256, %c0_257, %c0_258], %354 {strides = array<i32>} : memref<1x16x32xf32, #tpu.memory_space<vmem>>, vector<1x16x32xf32>,
    return
  }
  func.func @transform_0(%arg0: i32) -> (i32, i32, i32) {
    %c0_i32 = arith.constant 0 : i32
    %c0_i32_0 = arith.constant 0 : i32
    %c0_i32_1 = arith.constant 0 : i32
    return %arg0, %c0_i32, %c0_i32_0 : i32, i32, i32
  }
  func.func @transform_1(%arg0: i32) -> (i32, i32) {
    %c0_i32 = arith.constant 0 : i32
    %c0_i32_0 = arith.constant 0 : i32
    %c0_i32_1 = arith.constant 0 : i32
    return %c0_i32, %c0_i32_0 : i32, i32
  }
  func.func @transform_2(%arg0: i32) -> (i32, i32, i32) {
    %c0_i32 = arith.constant 0 : i32
    %c0_i32_0 = arith.constant 0 : i32
    %c0_i32_1 = arith.constant 0 : i32
    %c0_i32_2 = arith.constant 0 : i32
    return %c0_i32, %c0_i32_0, %c0_i32_1 : i32, i32, i32
  }
  func.func @transform_3(%arg0: i32) -> (i32, i32, i32) {
    %c0_i32 = arith.constant 0 : i32
    %c0_i32_0 = arith.constant 0 : i32
    %c0_i32_1 = arith.constant 0 : i32
    %c0_i32_2 = arith.constant 0 : i32
    return %c0_i32, %c0_i32_0, %c0_i32_1 : i32, i32, i32
  }
  func.func @transform_4(%arg0: i32) -> (i32, i32, i32) {
    %c0_i32 = arith.constant 0 : i32
    %c0_i32_0 = arith.constant 0 : i32
    %c0_i32_1 = arith.constant 0 : i32
    %c0_i32_2 = arith.constant 0 : i32
    return %c0_i32, %c0_i32_0, %c0_i32_1 : i32, i32, i32
  }
  func.func @transform_5(%arg0: i32) -> (i32, i32, i32, i32) {
    %c0_i32 = arith.constant 0 : i32
    %c0_i32_0 = arith.constant 0 : i32
    %c0_i32_1 = arith.constant 0 : i32
    %c0_i32_2 = arith.constant 0 : i32
    %c0_i32_3 = arith.constant 0 : i32
    return %c0_i32, %c0_i32_0, %c0_i32_1, %c0_i32_2 : i32, i32, i32, i32
  }
  func.func @transform_6(%arg0: i32) -> (i32, i32, i32) {
    %c0_i32 = arith.constant 0 : i32
    %c0_i32_0 = arith.constant 0 : i32
    %c0_i32_1 = arith.constant 0 : i32
    %c0_i32_2 = arith.constant 0 : i32
    return %c0_i32, %c0_i32_0, %c0_i32_1 : i32, i32, i32
  }
  func.func @transform_7(%arg0: i32) -> (i32, i32, i32) {
    %c0_i32 = arith.constant 0 : i32
    %c0_i32_0 = arith.constant 0 : i32
    %c0_i32_1 = arith.constant 0 : i32
    %c0_i32_2 = arith.constant 0 : i32
    return %c0_i32, %c0_i32_0, %c0_i32_1 : i32, i32, i32
  }
  func.func @transform_8(%arg0: i32) -> (i32, i32, i32) {
    %c0_i32 = arith.constant 0 : i32
    %c0_i32_0 = arith.constant 0 : i32
    %c0_i32_1 = arith.constant 0 : i32
    %c0_i32_2 = arith.constant 0 : i32
    return %c0_i32, %c0_i32_0, %c0_i32_1 : i32, i32, i32
  }
  func.func @transform_9(%arg0: i32) -> (i32, i32, i32) {
    %c0_i32 = arith.constant 0 : i32
    %c0_i32_0 = arith.constant 0 : i32
    %c0_i32_1 = arith.constant 0 : i32
    %c0_i32_2 = arith.constant 0 : i32
    return %c0_i32, %c0_i32_0, %c0_i32_1 : i32, i32, i32
  }
  func.func @transform_10(%arg0: i32) -> (i32, i32, i32) {
    %c0_i32 = arith.constant 0 : i32
    %c0_i32_0 = arith.constant 0 : i32
    %c0_i32_1 = arith.constant 0 : i32
    %c0_i32_2 = arith.constant 0 : i32
    return %c0_i32, %c0_i32_0, %c0_i32_1 : i32, i32, i32
  }
  func.func @transform_11(%arg0: i32) -> (i32, i32) {
    %c0_i32 = arith.constant 0 : i32
    %c0_i32_0 = arith.constant 0 : i32
    %c0_i32_1 = arith.constant 0 : i32
    return %c0_i32, %c0_i32_0 : i32, i32
  }
  func.func @transform_12(%arg0: i32) -> (i32, i32) {
    %c0_i32 = arith.constant 0 : i32
    %c0_i32_0 = arith.constant 0 : i32
    %c0_i32_1 = arith.constant 0 : i32
    return %c0_i32, %c0_i32_0 : i32, i32
  }
  func.func @transform_13(%arg0: i32) -> (i32, i32, i32) {
    %c0_i32 = arith.constant 0 : i32
    %c0_i32_0 = arith.constant 0 : i32
    %c0_i32_1 = arith.constant 0 : i32
    return %arg0, %c0_i32, %c0_i32_0 : i32, i32, i32
  }
  func.func @transform_14(%arg0: i32) -> (i32, i32, i32) {
    %c0_i32 = arith.constant 0 : i32
    %c0_i32_0 = arith.constant 0 : i32
    %c0_i32_1 = arith.constant 0 : i32
    return %arg0, %c0_i32, %c0_i32_0 : i32, i32, i32
  }
  func.func @transform_15(%arg0: i32) -> (i32, i32, i32) {
    %c0_i32 = arith.constant 0 : i32
    %c0_i32_0 = arith.constant 0 : i32
    %c0_i32_1 = arith.constant 0 : i32
    return %arg0, %c0_i32, %c0_i32_0 : i32, i32, i32
  }
}

</mosaic_0001>

<llo_original>
// kernel: encoder_block_forward.1
$region0: #{encoder_block_forward.1}
  #allocation0 [shape = 'u32[]', space=smem, size = 0x4, offset = 0x4, fixed_abs, tag = 'smem constant byte address 0x4 - core index']
  #allocation1 [shape = 'u32[144,128]{1,0:T(1,128)}', space=vmem, size = 0x12000, scoped, tag = 'internal scratch']
  %s0 = inlined_call_operand.vmem [shape: f32[2,16,32], index: 0, kind: input, shape index: {}]
  %s1 = inlined_call_operand.vmem [shape: f32[16,32], index: 1, kind: input, shape index: {}]
  %s2 = inlined_call_operand.vmem [shape: f32[4,16,32], index: 2, kind: input, shape index: {}]
  %s3 = inlined_call_operand.vmem [shape: f32[4,16,32], index: 3, kind: input, shape index: {}]
  %s4 = inlined_call_operand.vmem [shape: f32[5,16,16], index: 4, kind: input, shape index: {}]
  %s5 = inlined_call_operand.vmem [shape: f32[2,5,32,32], index: 5, kind: input, shape index: {}]
  %s6 = inlined_call_operand.vmem [shape: f32[2,1,32], index: 6, kind: input, shape index: {}]
  %s7 = inlined_call_operand.vmem [shape: f32[4,32,8], index: 7, kind: input, shape index: {}]
  %s8 = inlined_call_operand.vmem [shape: f32[4,32,8], index: 8, kind: input, shape index: {}]
  %s9 = inlined_call_operand.vmem [shape: f32[4,32,8], index: 9, kind: input, shape index: {}]
  %s10 = inlined_call_operand.vmem [shape: f32[4,8,32], index: 10, kind: input, shape index: {}]
  %s11 = inlined_call_operand.vmem [shape: f32[32,32], index: 11, kind: input, shape index: {}]
  %s12 = inlined_call_operand.vmem [shape: f32[1,32], index: 12, kind: input, shape index: {}]
  %s13 = inlined_call_operand.vmem [shape: f32[2,1,16], index: 13, kind: input, shape index: {}]
  %s14 = inlined_call_operand.vmem [shape: f32[2,16,1], index: 14, kind: input, shape index: {}]
  %s15 = inlined_call_operand.hbm [shape: f32[2,16,32], index: 15, kind: output, shape index: {}]
  %s16 = sld [smem:[#allocation0]]
  $region93: #{encoder_block_forward.1} parent=0
    _
  %s18 = ssub.s32 1, %s16
  %s19 = scalar_select 0, %s18, %s16
  $region1: #{encoder_block_forward.1} parent=0
    #allocation2 [shape = 'u8[16384]{0}', space=vmem, size = 0x4000, scoped, tag = 'output window, operand 0']
    #allocation3 [shape = 's32[2]{0}', space=sflag, size = 0x8, scoped, tag = 'scoped memory for encoder_block_forward.1']
    %20 = vsyncpa [#allocation3], 0
    %s21 = scalar_lea.sflag [#allocation3], 1
    %22 = vsyncpa %s21, 0
    loop: start=0, step=1, limit=4
    $region2: #{encoder_block_forward.1} parent=1 // loop_pre_header
      _
    $region3: #{encoder_block_forward.1} parent=1 // loop_header
      %s24 = sphi 0, %s28
      %p25 = scmp.ge.s32.totalorder %s24, 4
      %s34 = sphi 0, %s36
      %s37 = sphi 0, %s34
      %s38 = sphi 0, %s37
      %s54 = sphi 0, %s38
      %s58 = sphi 0, %s58
      %s60 = sphi 0, %s58
      %s61 = sphi 0, %s60
      %s75 = sphi 0, %s61
      %s79 = sphi 0, %s79
      %s81 = sphi 0, %s79
      %s82 = sphi 0, %s81
      %s96 = sphi 0, %s82
      %s100 = sphi 0, %s100
      %s102 = sphi 0, %s100
      %s103 = sphi 0, %s102
      %s117 = sphi 0, %s103
      %s121 = sphi 0, %s121
      %s123 = sphi 0, %s121
      %s124 = sphi 0, %s123
      %s138 = sphi 0, %s124
      %s142 = sphi 0, %s142
      %s144 = sphi 0, %s142
      %s145 = sphi 0, %s144
      %s159 = sphi 0, %s145
      %s163 = sphi 0, %s163
      %s165 = sphi 0, %s163
      %s166 = sphi 0, %s165
      %s180 = sphi 0, %s166
      %s184 = sphi 0, %s184
      %s186 = sphi 0, %s184
      %s187 = sphi 0, %s186
      %s201 = sphi 0, %s187
      %s205 = sphi 0, %s205
      %s207 = sphi 0, %s205
      %s208 = sphi 0, %s207
      %s222 = sphi 0, %s208
      %s226 = sphi 0, %s226
      %s228 = sphi 0, %s226
      %s229 = sphi 0, %s228
      %s243 = sphi 0, %s229
      %s247 = sphi 0, %s247
      %s249 = sphi 0, %s247
      %s250 = sphi 0, %s249
      %s264 = sphi 0, %s250
      %s268 = sphi 0, %s268
      %s270 = sphi 0, %s268
      %s271 = sphi 0, %s270
      %s285 = sphi 0, %s271
      %s289 = sphi 0, %s289
      %s291 = sphi 0, %s289
      %s292 = sphi 0, %s291
      %s306 = sphi 0, %s292
      %s312 = sphi 0, %s314
      %s315 = sphi 0, %s312
      %s316 = sphi 0, %s315
      %s332 = sphi 0, %s316
      %s338 = sphi 0, %s340
      %s341 = sphi 0, %s338
      %s342 = sphi 0, %s341
      %s358 = sphi 0, %s342
      %s364 = sphi 0, %s366
      %s367 = sphi 0, %s364
      %s368 = sphi 0, %s367
      %s384 = sphi 0, %s368
    $region4: #{encoder_block_forward.1} parent=1 // loop_header_branch
      %27 = sbr.rel (%p25) target = $region8
    $region5: #{encoder_block_forward.1} parent=1 // loop_body
      %s29 = ssub.s32 %s24, 1
      %s30 = ssub.s32 %s24, 2
      %s31 = sadd.s32 %s24, 1
      %s32 = ssub.s32 %s24, %s31
      %p33 = scmp.eq.s32.totalorder %s32, 0
      %s35 = sadd.s32 %s34, 1
      %s36 = scalar_select %p33, %s34, %s35
      %p39 = pneg %p33
      %p40 = scmp.eq.s32.totalorder %s24, 1
      %p41 = por %p39, %p40
      %p42 = scmp.ne.s32.totalorder %s34, %s37
      %p43 = scmp.eq.s32.totalorder %s24, 0
      %p44 = por %p42, %p43
      %p45 = scmp.ne.s32.totalorder %s34, %s37
      %p46 = scmp.eq.s32.totalorder %s29, 1
      %p47 = por %p45, %p46
      %p48 = scmp.ne.s32.totalorder %s37, %s38
      %p49 = scmp.eq.s32.totalorder %s29, 0
      %p50 = por %p48, %p49
      %p51 = scmp.ne.s32.totalorder %s37, %s38
      %p52 = scmp.eq.s32.totalorder %s30, 1
      %p53 = por %p51, %p52
      %p55 = scmp.ne.s32.totalorder %s38, %s54
      %p56 = scmp.eq.s32.totalorder %s30, 0
      %p57 = por %p55, %p56
      %s59 = sadd.s32 %s58, 1
      %p62 = scmp.eq.s32.totalorder %s24, 1
      %p63 = scmp.ne.s32.totalorder %s58, %s60
      %p64 = scmp.eq.s32.totalorder %s24, 0
      %p65 = por %p63, %p64
      %p66 = scmp.ne.s32.totalorder %s58, %s60
      %p67 = scmp.eq.s32.totalorder %s29, 1
      %p68 = por %p66, %p67
      %p69 = scmp.ne.s32.totalorder %s60, %s61
      %p70 = scmp.eq.s32.totalorder %s29, 0
      %p71 = por %p69, %p70
      %p72 = scmp.ne.s32.totalorder %s60, %s61
      %p73 = scmp.eq.s32.totalorder %s30, 1
      %p74 = por %p72, %p73
      %p76 = scmp.ne.s32.totalorder %s61, %s75
      %p77 = scmp.eq.s32.totalorder %s30, 0
      %p78 = por %p76, %p77
      %s80 = sadd.s32 %s79, 1
      %p83 = scmp.eq.s32.totalorder %s24, 1
      %p84 = scmp.ne.s32.totalorder %s79, %s81
      %p85 = scmp.eq.s32.totalorder %s24, 0
      %p86 = por %p84, %p85
      %p87 = scmp.ne.s32.totalorder %s79, %s81
      %p88 = scmp.eq.s32.totalorder %s29, 1
      %p89 = por %p87, %p88
      %p90 = scmp.ne.s32.totalorder %s81, %s82
      %p91 = scmp.eq.s32.totalorder %s29, 0
      %p92 = por %p90, %p91
      %p93 = scmp.ne.s32.totalorder %s81, %s82
      %p94 = scmp.eq.s32.totalorder %s30, 1
      %p95 = por %p93, %p94
      %p97 = scmp.ne.s32.totalorder %s82, %s96
      %p98 = scmp.eq.s32.totalorder %s30, 0
      %p99 = por %p97, %p98
      %s101 = sadd.s32 %s100, 1
      %p104 = scmp.eq.s32.totalorder %s24, 1
      %p105 = scmp.ne.s32.totalorder %s100, %s102
      %p106 = scmp.eq.s32.totalorder %s24, 0
      %p107 = por %p105, %p106
      %p108 = scmp.ne.s32.totalorder %s100, %s102
      %p109 = scmp.eq.s32.totalorder %s29, 1
      %p110 = por %p108, %p109
      %p111 = scmp.ne.s32.totalorder %s102, %s103
      %p112 = scmp.eq.s32.totalorder %s29, 0
      %p113 = por %p111, %p112
      %p114 = scmp.ne.s32.totalorder %s102, %s103
      %p115 = scmp.eq.s32.totalorder %s30, 1
      %p116 = por %p114, %p115
      %p118 = scmp.ne.s32.totalorder %s103, %s117
      %p119 = scmp.eq.s32.totalorder %s30, 0
      %p120 = por %p118, %p119
      %s122 = sadd.s32 %s121, 1
      %p125 = scmp.eq.s32.totalorder %s24, 1
      %p126 = scmp.ne.s32.totalorder %s121, %s123
      %p127 = scmp.eq.s32.totalorder %s24, 0
      %p128 = por %p126, %p127
      %p129 = scmp.ne.s32.totalorder %s121, %s123
      %p130 = scmp.eq.s32.totalorder %s29, 1
      %p131 = por %p129, %p130
      %p132 = scmp.ne.s32.totalorder %s123, %s124
      %p133 = scmp.eq.s32.totalorder %s29, 0
      %p134 = por %p132, %p133
      %p135 = scmp.ne.s32.totalorder %s123, %s124
      %p136 = scmp.eq.s32.totalorder %s30, 1
      %p137 = por %p135, %p136
      %p139 = scmp.ne.s32.totalorder %s124, %s138
      %p140 = scmp.eq.s32.totalorder %s30, 0
      %p141 = por %p139, %p140
      %s143 = sadd.s32 %s142, 1
      %p146 = scmp.eq.s32.totalorder %s24, 1
      %p147 = scmp.ne.s32.totalorder %s142, %s144
      %p148 = scmp.eq.s32.totalorder %s24, 0
      %p149 = por %p147, %p148
      %p150 = scmp.ne.s32.totalorder %s142, %s144
      %p151 = scmp.eq.s32.totalorder %s29, 1
      %p152 = por %p150, %p151
      %p153 = scmp.ne.s32.totalorder %s144, %s145
      %p154 = scmp.eq.s32.totalorder %s29, 0
      %p155 = por %p153, %p154
      %p156 = scmp.ne.s32.totalorder %s144, %s145
      %p157 = scmp.eq.s32.totalorder %s30, 1
      %p158 = por %p156, %p157
      %p160 = scmp.ne.s32.totalorder %s145, %s159
      %p161 = scmp.eq.s32.totalorder %s30, 0
      %p162 = por %p160, %p161
      %s164 = sadd.s32 %s163, 1
      %p167 = scmp.eq.s32.totalorder %s24, 1
      %p168 = scmp.ne.s32.totalorder %s163, %s165
      %p169 = scmp.eq.s32.totalorder %s24, 0
      %p170 = por %p168, %p169
      %p171 = scmp.ne.s32.totalorder %s163, %s165
      %p172 = scmp.eq.s32.totalorder %s29, 1
      %p173 = por %p171, %p172
      %p174 = scmp.ne.s32.totalorder %s165, %s166
      %p175 = scmp.eq.s32.totalorder %s29, 0
      %p176 = por %p174, %p175
      %p177 = scmp.ne.s32.totalorder %s165, %s166
      %p178 = scmp.eq.s32.totalorder %s30, 1
      %p179 = por %p177, %p178
      %p181 = scmp.ne.s32.totalorder %s166, %s180
      %p182 = scmp.eq.s32.totalorder %s30, 0
      %p183 = por %p181, %p182
      %s185 = sadd.s32 %s184, 1
      %p188 = scmp.eq.s32.totalorder %s24, 1
      %p189 = scmp.ne.s32.totalorder %s184, %s186
      %p190 = scmp.eq.s32.totalorder %s24, 0
      %p191 = por %p189, %p190
      %p192 = scmp.ne.s32.totalorder %s184, %s186
      %p193 = scmp.eq.s32.totalorder %s29, 1
      %p194 = por %p192, %p193
      %p195 = scmp.ne.s32.totalorder %s186, %s187
      %p196 = scmp.eq.s32.totalorder %s29, 0
      %p197 = por %p195, %p196
      %p198 = scmp.ne.s32.totalorder %s186, %s187
      %p199 = scmp.eq.s32.totalorder %s30, 1
      %p200 = por %p198, %p199
      %p202 = scmp.ne.s32.totalorder %s187, %s201
      %p203 = scmp.eq.s32.totalorder %s30, 0
      %p204 = por %p202, %p203
      %s206 = sadd.s32 %s205, 1
      %p209 = scmp.eq.s32.totalorder %s24, 1
      %p210 = scmp.ne.s32.totalorder %s205, %s207
      %p211 = scmp.eq.s32.totalorder %s24, 0
      %p212 = por %p210, %p211
      %p213 = scmp.ne.s32.totalorder %s205, %s207
      %p214 = scmp.eq.s32.totalorder %s29, 1
      %p215 = por %p213, %p214
      %p216 = scmp.ne.s32.totalorder %s207, %s208
      %p217 = scmp.eq.s32.totalorder %s29, 0
      %p218 = por %p216, %p217
      %p219 = scmp.ne.s32.totalorder %s207, %s208
      %p220 = scmp.eq.s32.totalorder %s30, 1
      %p221 = por %p219, %p220
      %p223 = scmp.ne.s32.totalorder %s208, %s222
      %p224 = scmp.eq.s32.totalorder %s30, 0
      %p225 = por %p223, %p224
      %s227 = sadd.s32 %s226, 1
      %p230 = scmp.eq.s32.totalorder %s24, 1
      %p231 = scmp.ne.s32.totalorder %s226, %s228
      %p232 = scmp.eq.s32.totalorder %s24, 0
      %p233 = por %p231, %p232
      %p234 = scmp.ne.s32.totalorder %s226, %s228
      %p235 = scmp.eq.s32.totalorder %s29, 1
      %p236 = por %p234, %p235
      %p237 = scmp.ne.s32.totalorder %s228, %s229
      %p238 = scmp.eq.s32.totalorder %s29, 0
      %p239 = por %p237, %p238
      %p240 = scmp.ne.s32.totalorder %s228, %s229
      %p241 = scmp.eq.s32.totalorder %s30, 1
      %p242 = por %p240, %p241
      %p244 = scmp.ne.s32.totalorder %s229, %s243
      %p245 = scmp.eq.s32.totalorder %s30, 0
      %p246 = por %p244, %p245
      %s248 = sadd.s32 %s247, 1
      %p251 = scmp.eq.s32.totalorder %s24, 1
      %p252 = scmp.ne.s32.totalorder %s247, %s249
      %p253 = scmp.eq.s32.totalorder %s24, 0
      %p254 = por %p252, %p253
      %p255 = scmp.ne.s32.totalorder %s247, %s249
      %p256 = scmp.eq.s32.totalorder %s29, 1
      %p257 = por %p255, %p256
      %p258 = scmp.ne.s32.totalorder %s249, %s250
      %p259 = scmp.eq.s32.totalorder %s29, 0
      %p260 = por %p258, %p259
      %p261 = scmp.ne.s32.totalorder %s249, %s250
      %p262 = scmp.eq.s32.totalorder %s30, 1
      %p263 = por %p261, %p262
      %p265 = scmp.ne.s32.totalorder %s250, %s264
      %p266 = scmp.eq.s32.totalorder %s30, 0
      %p267 = por %p265, %p266
      %s269 = sadd.s32 %s268, 1
      %p272 = scmp.eq.s32.totalorder %s24, 1
      %p273 = scmp.ne.s32.totalorder %s268, %s270
      %p274 = scmp.eq.s32.totalorder %s24, 0
      %p275 = por %p273, %p274
      %p276 = scmp.ne.s32.totalorder %s268, %s270
      %p277 = scmp.eq.s32.totalorder %s29, 1
      %p278 = por %p276, %p277
      %p279 = scmp.ne.s32.totalorder %s270, %s271
      %p280 = scmp.eq.s32.totalorder %s29, 0
      %p281 = por %p279, %p280
      %p282 = scmp.ne.s32.totalorder %s270, %s271
      %p283 = scmp.eq.s32.totalorder %s30, 1
      %p284 = por %p282, %p283
      %p286 = scmp.ne.s32.totalorder %s271, %s285
      %p287 = scmp.eq.s32.totalorder %s30, 0
      %p288 = por %p286, %p287
      %s290 = sadd.s32 %s289, 1
      %p293 = scmp.eq.s32.totalorder %s24, 1
      %p294 = scmp.ne.s32.totalorder %s289, %s291
      %p295 = scmp.eq.s32.totalorder %s24, 0
      %p296 = por %p294, %p295
      %p297 = scmp.ne.s32.totalorder %s289, %s291
      %p298 = scmp.eq.s32.totalorder %s29, 1
      %p299 = por %p297, %p298
      %p300 = scmp.ne.s32.totalorder %s291, %s292
      %p301 = scmp.eq.s32.totalorder %s29, 0
      %p302 = por %p300, %p301
      %p303 = scmp.ne.s32.totalorder %s291, %s292
      %p304 = scmp.eq.s32.totalorder %s30, 1
      %p305 = por %p303, %p304
      %p307 = scmp.ne.s32.totalorder %s292, %s306
      %p308 = scmp.eq.s32.totalorder %s30, 0
      %p309 = por %p307, %p308
      %s310 = ssub.s32 %s24, %s31
      %p311 = scmp.eq.s32.totalorder %s310, 0
      %s313 = sadd.s32 %s312, 1
      %s314 = scalar_select %p311, %s312, %s313
      %p317 = pneg %p311
      %p318 = scmp.eq.s32.totalorder %s24, 1
      %p319 = por %p317, %p318
      %p320 = scmp.ne.s32.totalorder %s312, %s315
      %p321 = scmp.eq.s32.totalorder %s24, 0
      %p322 = por %p320, %p321
      %p323 = scmp.ne.s32.totalorder %s312, %s315
      %p324 = scmp.eq.s32.totalorder %s29, 1
      %p325 = por %p323, %p324
      %p326 = scmp.ne.s32.totalorder %s315, %s316
      %p327 = scmp.eq.s32.totalorder %s29, 0
      %p328 = por %p326, %p327
      %p329 = scmp.ne.s32.totalorder %s315, %s316
      %p330 = scmp.eq.s32.totalorder %s30, 1
      %p331 = por %p329, %p330
      %p333 = scmp.ne.s32.totalorder %s316, %s332
      %p334 = scmp.eq.s32.totalorder %s30, 0
      %p335 = por %p333, %p334
      %s336 = ssub.s32 %s24, %s31
      %p337 = scmp.eq.s32.totalorder %s336, 0
      %s339 = sadd.s32 %s338, 1
      %s340 = scalar_select %p337, %s338, %s339
      %p343 = pneg %p337
      %p344 = scmp.eq.s32.totalorder %s24, 1
      %p345 = por %p343, %p344
      %p346 = scmp.ne.s32.totalorder %s338, %s341
      %p347 = scmp.eq.s32.totalorder %s24, 0
      %p348 = por %p346, %p347
      %p349 = scmp.ne.s32.totalorder %s338, %s341
      %p350 = scmp.eq.s32.totalorder %s29, 1
      %p351 = por %p349, %p350
      %p352 = scmp.ne.s32.totalorder %s341, %s342
      %p353 = scmp.eq.s32.totalorder %s29, 0
      %p354 = por %p352, %p353
      %p355 = scmp.ne.s32.totalorder %s341, %s342
      %p356 = scmp.eq.s32.totalorder %s30, 1
      %p357 = por %p355, %p356
      %p359 = scmp.ne.s32.totalorder %s342, %s358
      %p360 = scmp.eq.s32.totalorder %s30, 0
      %p361 = por %p359, %p360
      %s362 = ssub.s32 %s24, %s31
      %p363 = scmp.eq.s32.totalorder %s362, 0
      %s365 = sadd.s32 %s364, 1
      %s366 = scalar_select %p363, %s364, %s365
      %p369 = pneg %p363
      %p370 = scmp.eq.s32.totalorder %s24, 1
      %p371 = por %p369, %p370
      %p372 = scmp.ne.s32.totalorder %s364, %s367
      %p373 = scmp.eq.s32.totalorder %s24, 0
      %p374 = por %p372, %p373
      %p375 = scmp.ne.s32.totalorder %s364, %s367
      %p376 = scmp.eq.s32.totalorder %s29, 1
      %p377 = por %p375, %p376
      %p378 = scmp.ne.s32.totalorder %s367, %s368
      %p379 = scmp.eq.s32.totalorder %s29, 0
      %p380 = por %p378, %p379
      %p381 = scmp.ne.s32.totalorder %s367, %s368
      %p382 = scmp.eq.s32.totalorder %s30, 1
      %p383 = por %p381, %p382
      %p385 = scmp.ne.s32.totalorder %s368, %s384
      %p386 = scmp.eq.s32.totalorder %s30, 0
      %p387 = por %p385, %p386
      %p388 = scmp.le.s32.totalorder 1, %s24
      %p389 = scmp.lt.s32.totalorder %s24, 3
      %p390 = pnand %p388, %p389
      %p391 = pneg %p390
      // Predicated region
      $region9: #{encoder_block_forward.1} parent=5 // pred_check
        _
      $region10: #{encoder_block_forward.1} parent=5 // pred_check_branch
        %393 = sbr.rel (%p390) target = $region12
      $region11: #{encoder_block_forward.1} parent=5 // pred_region
        %s394 = ssub.s32 %s24, 1
        // Predicated region
        $region13: #{encoder_block_forward.1} parent=11 // pred_check
          %p395 = pneg %p71
        $region14: #{encoder_block_forward.1} parent=11 // pred_check_branch
          %397 = sbr.rel (%p395) target = $region16
        $region15: #{encoder_block_forward.1} parent=11 // pred_region
          _
        $region16: #{encoder_block_forward.1} parent=11 // pred_fallthru
          _
        // Predicated region
        $region17: #{encoder_block_forward.1} parent=11 // pred_check
          %p398 = pneg %p92
        $region18: #{encoder_block_forward.1} parent=11 // pred_check_branch
          %400 = sbr.rel (%p398) target = $region20
        $region19: #{encoder_block_forward.1} parent=11 // pred_region
          _
        $region20: #{encoder_block_forward.1} parent=11 // pred_fallthru
          _
        // Predicated region
        $region21: #{encoder_block_forward.1} parent=11 // pred_check
          %p401 = pneg %p113
        $region22: #{encoder_block_forward.1} parent=11 // pred_check_branch
          %403 = sbr.rel (%p401) target = $region24
        $region23: #{encoder_block_forward.1} parent=11 // pred_region
          _
        $region24: #{encoder_block_forward.1} parent=11 // pred_fallthru
          _
        // Predicated region
        $region25: #{encoder_block_forward.1} parent=11 // pred_check
          %p404 = pneg %p134
        $region26: #{encoder_block_forward.1} parent=11 // pred_check_branch
          %406 = sbr.rel (%p404) target = $region28
        $region27: #{encoder_block_forward.1} parent=11 // pred_region
          _
        $region28: #{encoder_block_forward.1} parent=11 // pred_fallthru
          _
        // Predicated region
        $region29: #{encoder_block_forward.1} parent=11 // pred_check
          %p407 = pneg %p155
        $region30: #{encoder_block_forward.1} parent=11 // pred_check_branch
          %409 = sbr.rel (%p407) target = $region32
        $region31: #{encoder_block_forward.1} parent=11 // pred_region
          _
        $region32: #{encoder_block_forward.1} parent=11 // pred_fallthru
          _
        // Predicated region
        $region33: #{encoder_block_forward.1} parent=11 // pred_check
          %p410 = pneg %p176
        $region34: #{encoder_block_forward.1} parent=11 // pred_check_branch
          %412 = sbr.rel (%p410) target = $region36
        $region35: #{encoder_block_forward.1} parent=11 // pred_region
          _
        $region36: #{encoder_block_forward.1} parent=11 // pred_fallthru
          _
        // Predicated region
        $region37: #{encoder_block_forward.1} parent=11 // pred_check
          %p413 = pneg %p197
        $region38: #{encoder_block_forward.1} parent=11 // pred_check_branch
          %415 = sbr.rel (%p413) target = $region40
        $region39: #{encoder_block_forward.1} parent=11 // pred_region
          _
        $region40: #{encoder_block_forward.1} parent=11 // pred_fallthru
          _
        // Predicated region
        $region41: #{encoder_block_forward.1} parent=11 // pred_check
          %p416 = pneg %p218
        $region42: #{encoder_block_forward.1} parent=11 // pred_check_branch
          %418 = sbr.rel (%p416) target = $region44
        $region43: #{encoder_block_forward.1} parent=11 // pred_region
          _
        $region44: #{encoder_block_forward.1} parent=11 // pred_fallthru
          _
        // Predicated region
        $region45: #{encoder_block_forward.1} parent=11 // pred_check
          %p419 = pneg %p239
        $region46: #{encoder_block_forward.1} parent=11 // pred_check_branch
          %421 = sbr.rel (%p419) target = $region48
        $region47: #{encoder_block_forward.1} parent=11 // pred_region
          _
        $region48: #{encoder_block_forward.1} parent=11 // pred_fallthru
          _
        // Predicated region
        $region49: #{encoder_block_forward.1} parent=11 // pred_check
          %p422 = pneg %p260
        $region50: #{encoder_block_forward.1} parent=11 // pred_check_branch
          %424 = sbr.rel (%p422) target = $region52
        $region51: #{encoder_block_forward.1} parent=11 // pred_region
          _
        $region52: #{encoder_block_forward.1} parent=11 // pred_fallthru
          _
        // Predicated region
        $region53: #{encoder_block_forward.1} parent=11 // pred_check
          %p425 = pneg %p281
        $region54: #{encoder_block_forward.1} parent=11 // pred_check_branch
          %427 = sbr.rel (%p425) target = $region56
        $region55: #{encoder_block_forward.1} parent=11 // pred_region
          _
        $region56: #{encoder_block_forward.1} parent=11 // pred_fallthru
          _
        // Predicated region
        $region57: #{encoder_block_forward.1} parent=11 // pred_check
          %p428 = pneg %p302
        $region58: #{encoder_block_forward.1} parent=11 // pred_check_branch
          %430 = sbr.rel (%p428) target = $region60
        $region59: #{encoder_block_forward.1} parent=11 // pred_region
          _
        $region60: #{encoder_block_forward.1} parent=11 // pred_fallthru
          _
      $region12: #{encoder_block_forward.1} parent=5 // pred_fallthru
        _
      %p431 = scmp.lt.s32.totalorder %s24, 2
      // Predicated region
      $region61: #{encoder_block_forward.1} parent=5 // pred_check
        %p432 = pneg %p431
      $region62: #{encoder_block_forward.1} parent=5 // pred_check_branch
        %434 = sbr.rel (%p432) target = $region64
      $region63: #{encoder_block_forward.1} parent=5 // pred_region
        // Predicated region
        $region65: #{encoder_block_forward.1} parent=63 // pred_check
          %p435 = pneg %p44
        $region66: #{encoder_block_forward.1} parent=63 // pred_check_branch
          %437 = sbr.rel (%p435) target = $region68
        $region67: #{encoder_block_forward.1} parent=63 // pred_region
          %p438 = scmp.lt.s32.totalorder %s24, 1
          %s439 = scalar_select %p438, %s24, 1
          %s440 = smul.addr %s439, 2
          %s441 = smul.addr %s440, 8
          %s442 = scalar_lea.vmem %s0, %s441
        $region68: #{encoder_block_forward.1} parent=63 // pred_fallthru
          _
        // Predicated region
        $region69: #{encoder_block_forward.1} parent=63 // pred_check
          %p443 = pneg %p322
        $region70: #{encoder_block_forward.1} parent=63 // pred_check_branch
          %445 = sbr.rel (%p443) target = $region72
        $region71: #{encoder_block_forward.1} parent=63 // pred_region
          %p446 = scmp.lt.s32.totalorder %s24, 1
          %s447 = scalar_select %p446, %s24, 1
          %s448 = scalar_lea.vmem %s13, %s447
        $region72: #{encoder_block_forward.1} parent=63 // pred_fallthru
          _
        // Predicated region
        $region73: #{encoder_block_forward.1} parent=63 // pred_check
          %p449 = pneg %p348
        $region74: #{encoder_block_forward.1} parent=63 // pred_check_branch
          %451 = sbr.rel (%p449) target = $region76
        $region75: #{encoder_block_forward.1} parent=63 // pred_region
          %p452 = scmp.lt.s32.totalorder %s24, 1
          %s453 = scalar_select %p452, %s24, 1
          %s454 = smul.addr %s453, 2
          %s455 = smul.addr %s454, 8
          %s456 = scalar_lea.vmem %s14, %s455
        $region76: #{encoder_block_forward.1} parent=63 // pred_fallthru
          _
      $region64: #{encoder_block_forward.1} parent=5 // pred_fallthru
        _
      %p457 = scmp.le.s32.totalorder 1, %s24
      %p458 = scmp.lt.s32.totalorder %s24, 3
      %p459 = pnand %p457, %p458
      %p460 = pneg %p459
      // Predicated region
      $region77: #{encoder_block_forward.1} parent=5 // pred_check
        _
      $region78: #{encoder_block_forward.1} parent=5 // pred_check_branch
        %462 = sbr.rel (%p459) target = $region80
      $region79: #{encoder_block_forward.1} parent=5 // pred_region
        %s463 = ssub.s32 %s24, 1
        %p464 = scmp.lt.s32.totalorder %s29, 1
        %s465 = scalar_select %p464, %s29, 1
        %s466 = smul.addr %s465, 2
        %s467 = smul.addr %s466, 8
        %s468 = scalar_lea.vmem %s0, %s467
        %p469 = pneg %p50
        %p470 = pneg %p47
        %p471 = pneg %p71
        %p472 = pneg %p68
        %p473 = pneg %p92
        %p474 = pneg %p89
        %p475 = pneg %p113
        %p476 = pneg %p110
        %p477 = pneg %p134
        %p478 = pneg %p131
        %p479 = pneg %p155
        %p480 = pneg %p152
        %p481 = pneg %p176
        %p482 = pneg %p173
        %p483 = pneg %p197
        %p484 = pneg %p194
        %p485 = pneg %p218
        %p486 = pneg %p215
        %p487 = pneg %p239
        %p488 = pneg %p236
        %p489 = pneg %p260
        %p490 = pneg %p257
        %p491 = pneg %p281
        %p492 = pneg %p278
        %p493 = pneg %p302
        %p494 = pneg %p299
        %p495 = scmp.lt.s32.totalorder %s29, 1
        %s496 = scalar_select %p495, %s29, 1
        %s497 = scalar_lea.vmem %s13, %s496
        %p498 = pneg %p328
        %p499 = pneg %p325
        %p500 = scmp.lt.s32.totalorder %s29, 1
        %s501 = scalar_select %p500, %s29, 1
        %s502 = smul.addr %s501, 2
        %s503 = smul.addr %s502, 8
        %s504 = scalar_lea.vmem %s14, %s503
        %p505 = pneg %p354
        %p506 = pneg %p351
        %p507 = pneg %p380
        %p508 = pneg %p377
        %s509 = sand.u32 %s367, 1
        %s510 = scalar_lea.sflag [#allocation3], %s509
        %s511 = sand.u32 %s367, 1
        %s512 = smul.addr %s511, 16
        %s513 = scalar_lea.vmem [#allocation2], %s512
        %p514 = scmp.lt.s32.totalorder %s29, 1
        %s515 = scalar_select %p514, %s29, 1
        %s516 = smul.addr %s515, 2
        %s517 = smul.addr %s516, 8
        %s518 = scalar_lea.vmem %s0, %s517
        %p519 = scmp.lt.s32.totalorder %s29, 1
        %s520 = scalar_select %p519, %s29, 1
        %s521 = scalar_lea.vmem %s13, %s520
        %p522 = scmp.lt.s32.totalorder %s29, 1
        %s523 = scalar_select %p522, %s29, 1
        %s524 = smul.addr %s523, 2
        %s525 = smul.addr %s524, 8
        %s526 = scalar_lea.vmem %s14, %s525
        %v527 = vld [vmem:[%s518] sm:$0xff]
        %v528 = vld [vmem:[%s518 + $0x8] sm:$0xff]
        %v529 = vld [vmem:[%s1] sm:$0xff]
        %v530 = vld [vmem:[%s1 + $0x8] sm:$0xff]
        %v531 = vadd.f32 %v527, %v529
        %v532 = vadd.f32 %v528, %v530
        %vm533 = vcmask 261120
        %v534 = vsel %vm533, %v531, 0.0
        %535 = vadd.xlane.f32.xlu0 %v534
        %v536 = vpop.xlane.xlu0 %535
        %v537 = vsel %vm533, %v532, 0.0
        %538 = vadd.xlane.f32.xlu0 %v537
        %v539 = vpop.xlane.xlu0 %538
        %v540 = vadd.f32 %v536, %v539
        %v541 = vrot.slane %v540, 4
        %v542 = vadd.f32 %v540, %v541
        %v543 = vrot.slane %v542, 2
        %v544 = vadd.f32 %v542, %v543
        %v545 = vrot.slane %v544, 1
        %v546 = vadd.f32 %v544, %v545
        %v547 = vmul.f32 %v546, 0.001953125
        %v548 = vsub.f32 %v531, %v547
        %v549 = vsub.f32 %v532, %v547
        %v550 = vmul.f32 %v548, %v548
        %v551 = vmul.f32 %v549, %v549
        %v552 = vsel %vm533, %v550, 0.0
        %553 = vadd.xlane.f32.xlu0 %v552
        %v554 = vpop.xlane.xlu0 %553
        %v555 = vsel %vm533, %v551, 0.0
        %556 = vadd.xlane.f32.xlu0 %v555
        %v557 = vpop.xlane.xlu0 %556
        %v558 = vadd.f32 %v554, %v557
        %v559 = vrot.slane %v558, 4
        %v560 = vadd.f32 %v558, %v559
        %v561 = vrot.slane %v560, 2
        %v562 = vadd.f32 %v560, %v561
        %v563 = vrot.slane %v562, 1
        %v564 = vadd.f32 %v562, %v563
        %v565 = vmul.f32 %v564, 0.001953125
        %v566 = vadd.f32 %v565, 1e-05
        %v567 = vrsqrt.pop %v566
        %v568 = vmul.f32 %v548, %v567
        %v569 = vmul.f32 %v549, %v567
        %v570 = vld [vmem:[%s2] sm:$0xff]
        %v571 = vld [vmem:[%s2 + $0x8] sm:$0xff]
        %v572 = vmul.f32 %v568, %v570
        %v573 = vmul.f32 %v569, %v571
        %v574 = vld [vmem:[%s3] sm:$0xff]
        %v575 = vld [vmem:[%s3 + $0x8] sm:$0xff]
        %v576 = vadd.f32 %v572, %v574
        %v577 = vadd.f32 %v573, %v575
        %v578 = vld [vmem:[%s6] sm:$0x1]
        %v580 = vlaneseq
        %v581 = vshrl.u32 %v580, 7
        %v582 = vsub.s32 0, %v581
        %v583 = vrot.slane %v578, %v582
        %v585 = vadd.f32 %v583, 0.0
        %v586 = vld [vmem:[%s4] sm:$0xff]
        %v587 = vld [vmem:[%s4 + $0x8] sm:$0xff]
        %vm588 = vcmask 130048
        %v590 = vsel %vm588, %v586, 0
        %v593 = vsel %vm588, %v587, 0
        %595 = vmatprep.subr.mxu0 0.0
        %596 = vmatpush1.msra.mxu0 %v576
        %597 = vmatprep.subr.mxu0 0.0
        %598 = vmatpush1.msra.mxu0 %v577
        %599 = vmatprep.subr.mxu0 0.0
        %600 = vmatpush1.msra.mxu0 0.0
        %601 = vmatprep.subr.mxu0 0.0
        %602 = vmatpush1.msra.mxu0 0.0
        %603 = vmatprep.subr.mxu0 0.0
        %604 = vmatpush1.msra.mxu0 0.0
        %605 = vmatprep.subr.mxu0 0.0
        %606 = vmatpush1.msra.mxu0 0.0
        %607 = vmatprep.subr.mxu0 0.0
        %608 = vmatpush1.msra.mxu0 0.0
        %609 = vmatprep.subr.mxu0 0.0
        %610 = vmatpush1.msra.mxu0 0.0
        %611 = vmatprep.subr.mxu0 0.0
        %612 = vmatpush1.msra.mxu0 0.0
        %613 = vmatprep.subr.mxu0 0.0
        %614 = vmatpush1.msra.mxu0 0.0
        %615 = vmatprep.subr.mxu0 0.0
        %616 = vmatpush1.msra.mxu0 0.0
        %617 = vmatprep.subr.mxu0 0.0
        %618 = vmatpush1.msra.mxu0 0.0
        %619 = vmatprep.subr.mxu0 0.0
        %620 = vmatpush1.msra.mxu0 0.0
        %621 = vmatprep.subr.mxu0 0.0
        %622 = vmatpush1.msra.mxu0 0.0
        %623 = vmatprep.subr.mxu0 0.0
        %624 = vmatpush1.msra.mxu0 0.0
        %625 = vmatprep.subr.mxu0 0.0
        %626 = vmatpush1.msra.mxu0 0.0
        %627 = vmatprep.subr.mxu0 0.0
        %628 = vmatpush1.msra.mxu0 0.0
        %629 = vmatprep.subr.mxu0 0.0
        %630 = vmatpush1.msra.mxu0 0.0
        %631 = vmatprep.subr.mxu0 0.0
        %632 = vmatpush1.msra.mxu0 0.0
        %633 = vmatprep.subr.mxu0 0.0
        %634 = vmatpush1.msra.mxu0 0.0
        %635 = vmatprep.subr.mxu0 0.0
        %636 = vmatpush1.msra.mxu0 0.0
        %637 = vmatprep.subr.mxu0 0.0
        %638 = vmatpush1.msra.mxu0 0.0
        %639 = vmatprep.subr.mxu0 0.0
        %640 = vmatpush1.msra.mxu0 0.0
        %641 = vmatprep.subr.mxu0 0.0
        %642 = vmatpush1.msra.mxu0 0.0
        %643 = vmatprep.subr.mxu0 0.0
        %644 = vmatpush1.msra.mxu0 0.0
        %645 = vmatprep.subr.mxu0 0.0
        %646 = vmatpush1.msra.mxu0 0.0
        %647 = vmatprep.subr.mxu0 0.0
        %648 = vmatpush1.msra.mxu0 0.0
        %649 = vmatprep.subr.mxu0 0.0
        %650 = vmatpush1.msra.mxu0 0.0
        %651 = vmatprep.subr.mxu0 0.0
        %652 = vmatpush1.msra.mxu0 0.0
        %653 = vmatprep.subr.mxu0 0.0
        %654 = vmatpush1.msra.mxu0 0.0
        %655 = vmatprep.subr.mxu0 0.0
        %656 = vmatpush1.msra.mxu0 0.0
        %657 = vmatprep.subr.mxu0 0.0
        %658 = vmatpush1.msra.mxu0 0.0
        %659 = vmatprep.mubr.f32.mxu0 0.0
        %660 = vmatmul.mubr.f32.gmra.mrb[0].mxu0 %v590
        %v661 = vpop.f32.mrb[0].mxu0
        %v662 = vadd.f32 0.0, %v661
        %v663 = vpop.f32.mrb[0].mxu0
        %664 = vmatprep.mubr.f32.mxu0 0.0
        %665 = vmatmul.mubr.f32.gmra.mrb[0].mxu0 %v593
        %v666 = vpop.f32.mrb[0].mxu0
        %v667 = vadd.f32 0.0, %v666
        %v668 = vpop.f32.mrb[0].mxu0
        %669 = vdwg.mxu0
        %v670 = vld [vmem:[%s5] sm:$0xff]
        %v671 = vld [vmem:[%s5 + $0x8] sm:$0xff]
        %v672 = vld [vmem:[%s5 + $0x10] sm:$0xff]
        %v673 = vld [vmem:[%s5 + $0x18] sm:$0xff]
        %v675 = vsel %vm533, %v662, 0
        %v678 = vsel %vm533, %v667, 0
        %680 = vmatprep.subr.mxu0 0.0
        %681 = vmatpush1.msra.mxu0 %v670
        %682 = vmatprep.subr.mxu0 0.0
        %683 = vmatpush1.msra.mxu0 %v671
        %684 = vmatprep.subr.mxu0 0.0
        %685 = vmatpush1.msra.mxu0 %v672
        %686 = vmatprep.subr.mxu0 0.0
        %687 = vmatpush1.msra.mxu0 %v673
        %688 = vmatprep.subr.mxu0 0.0
        %689 = vmatpush1.msra.mxu0 0.0
        %690 = vmatprep.subr.mxu0 0.0
        %691 = vmatpush1.msra.mxu0 0.0
        %692 = vmatprep.subr.mxu0 0.0
        %693 = vmatpush1.msra.mxu0 0.0
        %694 = vmatprep.subr.mxu0 0.0
        %695 = vmatpush1.msra.mxu0 0.0
        %696 = vmatprep.subr.mxu0 0.0
        %697 = vmatpush1.msra.mxu0 0.0
        %698 = vmatprep.subr.mxu0 0.0
        %699 = vmatpush1.msra.mxu0 0.0
        %700 = vmatprep.subr.mxu0 0.0
        %701 = vmatpush1.msra.mxu0 0.0
        %702 = vmatprep.subr.mxu0 0.0
        %703 = vmatpush1.msra.mxu0 0.0
        %704 = vmatprep.subr.mxu0 0.0
        %705 = vmatpush1.msra.mxu0 0.0
        %706 = vmatprep.subr.mxu0 0.0
        %707 = vmatpush1.msra.mxu0 0.0
        %708 = vmatprep.subr.mxu0 0.0
        %709 = vmatpush1.msra.mxu0 0.0
        %710 = vmatprep.subr.mxu0 0.0
        %711 = vmatpush1.msra.mxu0 0.0
        %712 = vmatprep.subr.mxu0 0.0
        %713 = vmatpush1.msra.mxu0 0.0
        %714 = vmatprep.subr.mxu0 0.0
        %715 = vmatpush1.msra.mxu0 0.0
        %716 = vmatprep.subr.mxu0 0.0
        %717 = vmatpush1.msra.mxu0 0.0
        %718 = vmatprep.subr.mxu0 0.0
        %719 = vmatpush1.msra.mxu0 0.0
        %720 = vmatprep.subr.mxu0 0.0
        %721 = vmatpush1.msra.mxu0 0.0
        %722 = vmatprep.subr.mxu0 0.0
        %723 = vmatpush1.msra.mxu0 0.0
        %724 = vmatprep.subr.mxu0 0.0
        %725 = vmatpush1.msra.mxu0 0.0
        %726 = vmatprep.subr.mxu0 0.0
        %727 = vmatpush1.msra.mxu0 0.0
        %728 = vmatprep.subr.mxu0 0.0
        %729 = vmatpush1.msra.mxu0 0.0
        %730 = vmatprep.subr.mxu0 0.0
        %731 = vmatpush1.msra.mxu0 0.0
        %732 = vmatprep.subr.mxu0 0.0
        %733 = vmatpush1.msra.mxu0 0.0
        %734 = vmatprep.subr.mxu0 0.0
        %735 = vmatpush1.msra.mxu0 0.0
        %736 = vmatprep.subr.mxu0 0.0
        %737 = vmatpush1.msra.mxu0 0.0
        %738 = vmatprep.subr.mxu0 0.0
        %739 = vmatpush1.msra.mxu0 0.0
        %740 = vmatprep.subr.mxu0 0.0
        %741 = vmatpush1.msra.mxu0 0.0
        %742 = vmatprep.subr.mxu0 0.0
        %743 = vmatpush1.msra.mxu0 0.0
        %744 = vmatprep.mubr.f32.mxu0 0.0
        %745 = vmatmul.mubr.f32.gmra.mrb[0].mxu0 %v675
        %v746 = vpop.f32.mrb[0].mxu0
        %v747 = vadd.f32 0.0, %v746
        %v748 = vpop.f32.mrb[0].mxu0
        %749 = vmatprep.mubr.f32.mxu0 0.0
        %750 = vmatmul.mubr.f32.gmra.mrb[0].mxu0 %v678
        %v751 = vpop.f32.mrb[0].mxu0
        %v752 = vadd.f32 0.0, %v751
        %v753 = vpop.f32.mrb[0].mxu0
        %754 = vdwg.mxu0
        %v755 = vadd.f32 %v585, %v747
        %v756 = vadd.f32 %v585, %v752
        %s757 = scalar_lea.vmem %s4, 16
        %v758 = vld [vmem:[%s757] sm:$0xff]
        %v759 = vld [vmem:[%s757 + $0x8] sm:$0xff]
        %v761 = vsel %vm588, %v758, 0
        %v764 = vsel %vm588, %v759, 0
        %766 = vmatprep.subr.mxu0 0.0
        %767 = vmatpush1.msra.mxu0 %v576
        %768 = vmatprep.subr.mxu0 0.0
        %769 = vmatpush1.msra.mxu0 %v577
        %770 = vmatprep.subr.mxu0 0.0
        %771 = vmatpush1.msra.mxu0 0.0
        %772 = vmatprep.subr.mxu0 0.0
        %773 = vmatpush1.msra.mxu0 0.0
        %774 = vmatprep.subr.mxu0 0.0
        %775 = vmatpush1.msra.mxu0 0.0
        %776 = vmatprep.subr.mxu0 0.0
        %777 = vmatpush1.msra.mxu0 0.0
        %778 = vmatprep.subr.mxu0 0.0
        %779 = vmatpush1.msra.mxu0 0.0
        %780 = vmatprep.subr.mxu0 0.0
        %781 = vmatpush1.msra.mxu0 0.0
        %782 = vmatprep.subr.mxu0 0.0
        %783 = vmatpush1.msra.mxu0 0.0
        %784 = vmatprep.subr.mxu0 0.0
        %785 = vmatpush1.msra.mxu0 0.0
        %786 = vmatprep.subr.mxu0 0.0
        %787 = vmatpush1.msra.mxu0 0.0
        %788 = vmatprep.subr.mxu0 0.0
        %789 = vmatpush1.msra.mxu0 0.0
        %790 = vmatprep.subr.mxu0 0.0
        %791 = vmatpush1.msra.mxu0 0.0
        %792 = vmatprep.subr.mxu0 0.0
        %793 = vmatpush1.msra.mxu0 0.0
        %794 = vmatprep.subr.mxu0 0.0
        %795 = vmatpush1.msra.mxu0 0.0
        %796 = vmatprep.subr.mxu0 0.0
        %797 = vmatpush1.msra.mxu0 0.0
        %798 = vmatprep.subr.mxu0 0.0
        %799 = vmatpush1.msra.mxu0 0.0
        %800 = vmatprep.subr.mxu0 0.0
        %801 = vmatpush1.msra.mxu0 0.0
        %802 = vmatprep.subr.mxu0 0.0
        %803 = vmatpush1.msra.mxu0 0.0
        %804 = vmatprep.subr.mxu0 0.0
        %805 = vmatpush1.msra.mxu0 0.0
        %806 = vmatprep.subr.mxu0 0.0
        %807 = vmatpush1.msra.mxu0 0.0
        %808 = vmatprep.subr.mxu0 0.0
        %809 = vmatpush1.msra.mxu0 0.0
        %810 = vmatprep.subr.mxu0 0.0
        %811 = vmatpush1.msra.mxu0 0.0
        %812 = vmatprep.subr.mxu0 0.0
        %813 = vmatpush1.msra.mxu0 0.0
        %814 = vmatprep.subr.mxu0 0.0
        %815 = vmatpush1.msra.mxu0 0.0
        %816 = vmatprep.subr.mxu0 0.0
        %817 = vmatpush1.msra.mxu0 0.0
        %818 = vmatprep.subr.mxu0 0.0
        %819 = vmatpush1.msra.mxu0 0.0
        %820 = vmatprep.subr.mxu0 0.0
        %821 = vmatpush1.msra.mxu0 0.0
        %822 = vmatprep.subr.mxu0 0.0
        %823 = vmatpush1.msra.mxu0 0.0
        %824 = vmatprep.subr.mxu0 0.0
        %825 = vmatpush1.msra.mxu0 0.0
        %826 = vmatprep.subr.mxu0 0.0
        %827 = vmatpush1.msra.mxu0 0.0
        %828 = vmatprep.subr.mxu0 0.0
        %829 = vmatpush1.msra.mxu0 0.0
        %830 = vmatprep.mubr.f32.mxu0 0.0
        %831 = vmatmul.mubr.f32.gmra.mrb[0].mxu0 %v761
        %v832 = vpop.f32.mrb[0].mxu0
        %v833 = vadd.f32 0.0, %v832
        %v834 = vpop.f32.mrb[0].mxu0
        %835 = vmatprep.mubr.f32.mxu0 0.0
        %836 = vmatmul.mubr.f32.gmra.mrb[0].mxu0 %v764
        %v837 = vpop.f32.mrb[0].mxu0
        %v838 = vadd.f32 0.0, %v837
        %v839 = vpop.f32.mrb[0].mxu0
        %840 = vdwg.mxu0
        %s841 = scalar_lea.vmem %s5, 32
        %v842 = vld [vmem:[%s841] sm:$0xff]
        %v843 = vld [vmem:[%s841 + $0x8] sm:$0xff]
        %v844 = vld [vmem:[%s841 + $0x10] sm:$0xff]
        %v845 = vld [vmem:[%s841 + $0x18] sm:$0xff]
        %v847 = vsel %vm533, %v833, 0
        %v850 = vsel %vm533, %v838, 0
        %852 = vmatprep.subr.mxu0 0.0
        %853 = vmatpush1.msra.mxu0 %v842
        %854 = vmatprep.subr.mxu0 0.0
        %855 = vmatpush1.msra.mxu0 %v843
        %856 = vmatprep.subr.mxu0 0.0
        %857 = vmatpush1.msra.mxu0 %v844
        %858 = vmatprep.subr.mxu0 0.0
        %859 = vmatpush1.msra.mxu0 %v845
        %860 = vmatprep.subr.mxu0 0.0
        %861 = vmatpush1.msra.mxu0 0.0
        %862 = vmatprep.subr.mxu0 0.0
        %863 = vmatpush1.msra.mxu0 0.0
        %864 = vmatprep.subr.mxu0 0.0
        %865 = vmatpush1.msra.mxu0 0.0
        %866 = vmatprep.subr.mxu0 0.0
        %867 = vmatpush1.msra.mxu0 0.0
        %868 = vmatprep.subr.mxu0 0.0
        %869 = vmatpush1.msra.mxu0 0.0
        %870 = vmatprep.subr.mxu0 0.0
        %871 = vmatpush1.msra.mxu0 0.0
        %872 = vmatprep.subr.mxu0 0.0
        %873 = vmatpush1.msra.mxu0 0.0
        %874 = vmatprep.subr.mxu0 0.0
        %875 = vmatpush1.msra.mxu0 0.0
        %876 = vmatprep.subr.mxu0 0.0
        %877 = vmatpush1.msra.mxu0 0.0
        %878 = vmatprep.subr.mxu0 0.0
        %879 = vmatpush1.msra.mxu0 0.0
        %880 = vmatprep.subr.mxu0 0.0
        %881 = vmatpush1.msra.mxu0 0.0
        %882 = vmatprep.subr.mxu0 0.0
        %883 = vmatpush1.msra.mxu0 0.0
        %884 = vmatprep.subr.mxu0 0.0
        %885 = vmatpush1.msra.mxu0 0.0
        %886 = vmatprep.subr.mxu0 0.0
        %887 = vmatpush1.msra.mxu0 0.0
        %888 = vmatprep.subr.mxu0 0.0
        %889 = vmatpush1.msra.mxu0 0.0
        %890 = vmatprep.subr.mxu0 0.0
        %891 = vmatpush1.msra.mxu0 0.0
        %892 = vmatprep.subr.mxu0 0.0
        %893 = vmatpush1.msra.mxu0 0.0
        %894 = vmatprep.subr.mxu0 0.0
        %895 = vmatpush1.msra.mxu0 0.0
        %896 = vmatprep.subr.mxu0 0.0
        %897 = vmatpush1.msra.mxu0 0.0
        %898 = vmatprep.subr.mxu0 0.0
        %899 = vmatpush1.msra.mxu0 0.0
        %900 = vmatprep.subr.mxu0 0.0
        %901 = vmatpush1.msra.mxu0 0.0
        %902 = vmatprep.subr.mxu0 0.0
        %903 = vmatpush1.msra.mxu0 0.0
        %904 = vmatprep.subr.mxu0 0.0
        %905 = vmatpush1.msra.mxu0 0.0
        %906 = vmatprep.subr.mxu0 0.0
        %907 = vmatpush1.msra.mxu0 0.0
        %908 = vmatprep.subr.mxu0 0.0
        %909 = vmatpush1.msra.mxu0 0.0
        %910 = vmatprep.subr.mxu0 0.0
        %911 = vmatpush1.msra.mxu0 0.0
        %912 = vmatprep.subr.mxu0 0.0
        %913 = vmatpush1.msra.mxu0 0.0
        %914 = vmatprep.subr.mxu0 0.0
        %915 = vmatpush1.msra.mxu0 0.0
        %916 = vmatprep.mubr.f32.mxu0 0.0
        %917 = vmatmul.mubr.f32.gmra.mrb[0].mxu0 %v847
        %v918 = vpop.f32.mrb[0].mxu0
        %v919 = vadd.f32 0.0, %v918
        %v920 = vpop.f32.mrb[0].mxu0
        %921 = vmatprep.mubr.f32.mxu0 0.0
        %922 = vmatmul.mubr.f32.gmra.mrb[0].mxu0 %v850
        %v923 = vpop.f32.mrb[0].mxu0
        %v924 = vadd.f32 0.0, %v923
        %v925 = vpop.f32.mrb[0].mxu0
        %926 = vdwg.mxu0
        %v927 = vadd.f32 %v755, %v919
        %v928 = vadd.f32 %v756, %v924
        %s929 = scalar_lea.vmem %s4, 32
        %v930 = vld [vmem:[%s929] sm:$0xff]
        %v931 = vld [vmem:[%s929 + $0x8] sm:$0xff]
        %v933 = vsel %vm588, %v930, 0
        %v936 = vsel %vm588, %v931, 0
        %938 = vmatprep.subr.mxu0 0.0
        %939 = vmatpush1.msra.mxu0 %v576
        %940 = vmatprep.subr.mxu0 0.0
        %941 = vmatpush1.msra.mxu0 %v577
        %942 = vmatprep.subr.mxu0 0.0
        %943 = vmatpush1.msra.mxu0 0.0
        %944 = vmatprep.subr.mxu0 0.0
        %945 = vmatpush1.msra.mxu0 0.0
        %946 = vmatprep.subr.mxu0 0.0
        %947 = vmatpush1.msra.mxu0 0.0
        %948 = vmatprep.subr.mxu0 0.0
        %949 = vmatpush1.msra.mxu0 0.0
        %950 = vmatprep.subr.mxu0 0.0
        %951 = vmatpush1.msra.mxu0 0.0
        %952 = vmatprep.subr.mxu0 0.0
        %953 = vmatpush1.msra.mxu0 0.0
        %954 = vmatprep.subr.mxu0 0.0
        %955 = vmatpush1.msra.mxu0 0.0
        %956 = vmatprep.subr.mxu0 0.0
        %957 = vmatpush1.msra.mxu0 0.0
        %958 = vmatprep.subr.mxu0 0.0
        %959 = vmatpush1.msra.mxu0 0.0
        %960 = vmatprep.subr.mxu0 0.0
        %961 = vmatpush1.msra.mxu0 0.0
        %962 = vmatprep.subr.mxu0 0.0
        %963 = vmatpush1.msra.mxu0 0.0
        %964 = vmatprep.subr.mxu0 0.0
        %965 = vmatpush1.msra.mxu0 0.0
        %966 = vmatprep.subr.mxu0 0.0
        %967 = vmatpush1.msra.mxu0 0.0
        %968 = vmatprep.subr.mxu0 0.0
        %969 = vmatpush1.msra.mxu0 0.0
        %970 = vmatprep.subr.mxu0 0.0
        %971 = vmatpush1.msra.mxu0 0.0
        %972 = vmatprep.subr.mxu0 0.0
        %973 = vmatpush1.msra.mxu0 0.0
        %974 = vmatprep.subr.mxu0 0.0
        %975 = vmatpush1.msra.mxu0 0.0
        %976 = vmatprep.subr.mxu0 0.0
        %977 = vmatpush1.msra.mxu0 0.0
        %978 = vmatprep.subr.mxu0 0.0
        %979 = vmatpush1.msra.mxu0 0.0
        %980 = vmatprep.subr.mxu0 0.0
        %981 = vmatpush1.msra.mxu0 0.0
        %982 = vmatprep.subr.mxu0 0.0
        %983 = vmatpush1.msra.mxu0 0.0
        %984 = vmatprep.subr.mxu0 0.0
        %985 = vmatpush1.msra.mxu0 0.0
        %986 = vmatprep.subr.mxu0 0.0
        %987 = vmatpush1.msra.mxu0 0.0
        %988 = vmatprep.subr.mxu0 0.0
        %989 = vmatpush1.msra.mxu0 0.0
        %990 = vmatprep.subr.mxu0 0.0
        %991 = vmatpush1.msra.mxu0 0.0
        %992 = vmatprep.subr.mxu0 0.0
        %993 = vmatpush1.msra.mxu0 0.0
        %994 = vmatprep.subr.mxu0 0.0
        %995 = vmatpush1.msra.mxu0 0.0
        %996 = vmatprep.subr.mxu0 0.0
        %997 = vmatpush1.msra.mxu0 0.0
        %998 = vmatprep.subr.mxu0 0.0
        %999 = vmatpush1.msra.mxu0 0.0
        %1000 = vmatprep.subr.mxu0 0.0
        %1001 = vmatpush1.msra.mxu0 0.0
        %1002 = vmatprep.mubr.f32.mxu0 0.0
        %1003 = vmatmul.mubr.f32.gmra.mrb[0].mxu0 %v933
        %v1004 = vpop.f32.mrb[0].mxu0
        %v1005 = vadd.f32 0.0, %v1004
        %v1006 = vpop.f32.mrb[0].mxu0
        %1007 = vmatprep.mubr.f32.mxu0 0.0
        %1008 = vmatmul.mubr.f32.gmra.mrb[0].mxu0 %v936
        %v1009 = vpop.f32.mrb[0].mxu0
        %v1010 = vadd.f32 0.0, %v1009
        %v1011 = vpop.f32.mrb[0].mxu0
        %1012 = vdwg.mxu0
        %s1013 = scalar_lea.vmem %s5, 64
        %v1014 = vld [vmem:[%s1013] sm:$0xff]
        %v1015 = vld [vmem:[%s1013 + $0x8] sm:$0xff]
        %v1016 = vld [vmem:[%s1013 + $0x10] sm:$0xff]
        %v1017 = vld [vmem:[%s1013 + $0x18] sm:$0xff]
        %v1019 = vsel %vm533, %v1005, 0
        %v1022 = vsel %vm533, %v1010, 0
        %1024 = vmatprep.subr.mxu0 0.0
        %1025 = vmatpush1.msra.mxu0 %v1014
        %1026 = vmatprep.subr.mxu0 0.0
        %1027 = vmatpush1.msra.mxu0 %v1015
        %1028 = vmatprep.subr.mxu0 0.0
        %1029 = vmatpush1.msra.mxu0 %v1016
        %1030 = vmatprep.subr.mxu0 0.0
        %1031 = vmatpush1.msra.mxu0 %v1017
        %1032 = vmatprep.subr.mxu0 0.0
        %1033 = vmatpush1.msra.mxu0 0.0
        %1034 = vmatprep.subr.mxu0 0.0
        %1035 = vmatpush1.msra.mxu0 0.0
        %1036 = vmatprep.subr.mxu0 0.0
        %1037 = vmatpush1.msra.mxu0 0.0
        %1038 = vmatprep.subr.mxu0 0.0
        %1039 = vmatpush1.msra.mxu0 0.0
        %1040 = vmatprep.subr.mxu0 0.0
        %1041 = vmatpush1.msra.mxu0 0.0
        %1042 = vmatprep.subr.mxu0 0.0
        %1043 = vmatpush1.msra.mxu0 0.0
        %1044 = vmatprep.subr.mxu0 0.0
        %1045 = vmatpush1.msra.mxu0 0.0
        %1046 = vmatprep.subr.mxu0 0.0
        %1047 = vmatpush1.msra.mxu0 0.0
        %1048 = vmatprep.subr.mxu0 0.0
        %1049 = vmatpush1.msra.mxu0 0.0
        %1050 = vmatprep.subr.mxu0 0.0
        %1051 = vmatpush1.msra.mxu0 0.0
        %1052 = vmatprep.subr.mxu0 0.0
        %1053 = vmatpush1.msra.mxu0 0.0
        %1054 = vmatprep.subr.mxu0 0.0
        %1055 = vmatpush1.msra.mxu0 0.0
        %1056 = vmatprep.subr.mxu0 0.0
        %1057 = vmatpush1.msra.mxu0 0.0
        %1058 = vmatprep.subr.mxu0 0.0
        %1059 = vmatpush1.msra.mxu0 0.0
        %1060 = vmatprep.subr.mxu0 0.0
        %1061 = vmatpush1.msra.mxu0 0.0
        %1062 = vmatprep.subr.mxu0 0.0
        %1063 = vmatpush1.msra.mxu0 0.0
        %1064 = vmatprep.subr.mxu0 0.0
        %1065 = vmatpush1.msra.mxu0 0.0
        %1066 = vmatprep.subr.mxu0 0.0
        %1067 = vmatpush1.msra.mxu0 0.0
        %1068 = vmatprep.subr.mxu0 0.0
        %1069 = vmatpush1.msra.mxu0 0.0
        %1070 = vmatprep.subr.mxu0 0.0
        %1071 = vmatpush1.msra.mxu0 0.0
        %1072 = vmatprep.subr.mxu0 0.0
        %1073 = vmatpush1.msra.mxu0 0.0
        %1074 = vmatprep.subr.mxu0 0.0
        %1075 = vmatpush1.msra.mxu0 0.0
        %1076 = vmatprep.subr.mxu0 0.0
        %1077 = vmatpush1.msra.mxu0 0.0
        %1078 = vmatprep.subr.mxu0 0.0
        %1079 = vmatpush1.msra.mxu0 0.0
        %1080 = vmatprep.subr.mxu0 0.0
        %1081 = vmatpush1.msra.mxu0 0.0
        %1082 = vmatprep.subr.mxu0 0.0
        %1083 = vmatpush1.msra.mxu0 0.0
        %1084 = vmatprep.subr.mxu0 0.0
        %1085 = vmatpush1.msra.mxu0 0.0
        %1086 = vmatprep.subr.mxu0 0.0
        %1087 = vmatpush1.msra.mxu0 0.0
        %1088 = vmatprep.mubr.f32.mxu0 0.0
        %1089 = vmatmul.mubr.f32.gmra.mrb[0].mxu0 %v1019
        %v1090 = vpop.f32.mrb[0].mxu0
        %v1091 = vadd.f32 0.0, %v1090
        %v1092 = vpop.f32.mrb[0].mxu0
        %1093 = vmatprep.mubr.f32.mxu0 0.0
        %1094 = vmatmul.mubr.f32.gmra.mrb[0].mxu0 %v1022
        %v1095 = vpop.f32.mrb[0].mxu0
        %v1096 = vadd.f32 0.0, %v1095
        %v1097 = vpop.f32.mrb[0].mxu0
        %1098 = vdwg.mxu0
        %v1099 = vadd.f32 %v927, %v1091
        %v1100 = vadd.f32 %v928, %v1096
        %s1101 = scalar_lea.vmem %s4, 48
        %v1102 = vld [vmem:[%s1101] sm:$0xff]
        %v1103 = vld [vmem:[%s1101 + $0x8] sm:$0xff]
        %v1105 = vsel %vm588, %v1102, 0
        %v1108 = vsel %vm588, %v1103, 0
        %1110 = vmatprep.subr.mxu0 0.0
        %1111 = vmatpush1.msra.mxu0 %v576
        %1112 = vmatprep.subr.mxu0 0.0
        %1113 = vmatpush1.msra.mxu0 %v577
        %1114 = vmatprep.subr.mxu0 0.0
        %1115 = vmatpush1.msra.mxu0 0.0
        %1116 = vmatprep.subr.mxu0 0.0
        %1117 = vmatpush1.msra.mxu0 0.0
        %1118 = vmatprep.subr.mxu0 0.0
        %1119 = vmatpush1.msra.mxu0 0.0
        %1120 = vmatprep.subr.mxu0 0.0
        %1121 = vmatpush1.msra.mxu0 0.0
        %1122 = vmatprep.subr.mxu0 0.0
        %1123 = vmatpush1.msra.mxu0 0.0
        %1124 = vmatprep.subr.mxu0 0.0
        %1125 = vmatpush1.msra.mxu0 0.0
        %1126 = vmatprep.subr.mxu0 0.0
        %1127 = vmatpush1.msra.mxu0 0.0
        %1128 = vmatprep.subr.mxu0 0.0
        %1129 = vmatpush1.msra.mxu0 0.0
        %1130 = vmatprep.subr.mxu0 0.0
        %1131 = vmatpush1.msra.mxu0 0.0
        %1132 = vmatprep.subr.mxu0 0.0
        %1133 = vmatpush1.msra.mxu0 0.0
        %1134 = vmatprep.subr.mxu0 0.0
        %1135 = vmatpush1.msra.mxu0 0.0
        %1136 = vmatprep.subr.mxu0 0.0
        %1137 = vmatpush1.msra.mxu0 0.0
        %1138 = vmatprep.subr.mxu0 0.0
        %1139 = vmatpush1.msra.mxu0 0.0
        %1140 = vmatprep.subr.mxu0 0.0
        %1141 = vmatpush1.msra.mxu0 0.0
        %1142 = vmatprep.subr.mxu0 0.0
        %1143 = vmatpush1.msra.mxu0 0.0
        %1144 = vmatprep.subr.mxu0 0.0
        %1145 = vmatpush1.msra.mxu0 0.0
        %1146 = vmatprep.subr.mxu0 0.0
        %1147 = vmatpush1.msra.mxu0 0.0
        %1148 = vmatprep.subr.mxu0 0.0
        %1149 = vmatpush1.msra.mxu0 0.0
        %1150 = vmatprep.subr.mxu0 0.0
        %1151 = vmatpush1.msra.mxu0 0.0
        %1152 = vmatprep.subr.mxu0 0.0
        %1153 = vmatpush1.msra.mxu0 0.0
        %1154 = vmatprep.subr.mxu0 0.0
        %1155 = vmatpush1.msra.mxu0 0.0
        %1156 = vmatprep.subr.mxu0 0.0
        %1157 = vmatpush1.msra.mxu0 0.0
        %1158 = vmatprep.subr.mxu0 0.0
        %1159 = vmatpush1.msra.mxu0 0.0
        %1160 = vmatprep.subr.mxu0 0.0
        %1161 = vmatpush1.msra.mxu0 0.0
        %1162 = vmatprep.subr.mxu0 0.0
        %1163 = vmatpush1.msra.mxu0 0.0
        %1164 = vmatprep.subr.mxu0 0.0
        %1165 = vmatpush1.msra.mxu0 0.0
        %1166 = vmatprep.subr.mxu0 0.0
        %1167 = vmatpush1.msra.mxu0 0.0
        %1168 = vmatprep.subr.mxu0 0.0
        %1169 = vmatpush1.msra.mxu0 0.0
        %1170 = vmatprep.subr.mxu0 0.0
        %1171 = vmatpush1.msra.mxu0 0.0
        %1172 = vmatprep.subr.mxu0 0.0
        %1173 = vmatpush1.msra.mxu0 0.0
        %1174 = vmatprep.mubr.f32.mxu0 0.0
        %1175 = vmatmul.mubr.f32.gmra.mrb[0].mxu0 %v1105
        %v1176 = vpop.f32.mrb[0].mxu0
        %v1177 = vadd.f32 0.0, %v1176
        %v1178 = vpop.f32.mrb[0].mxu0
        %1179 = vmatprep.mubr.f32.mxu0 0.0
        %1180 = vmatmul.mubr.f32.gmra.mrb[0].mxu0 %v1108
        %v1181 = vpop.f32.mrb[0].mxu0
        %v1182 = vadd.f32 0.0, %v1181
        %v1183 = vpop.f32.mrb[0].mxu0
        %1184 = vdwg.mxu0
        %s1185 = scalar_lea.vmem %s5, 96
        %v1186 = vld [vmem:[%s1185] sm:$0xff]
        %v1187 = vld [vmem:[%s1185 + $0x8] sm:$0xff]
        %v1188 = vld [vmem:[%s1185 + $0x10] sm:$0xff]
        %v1189 = vld [vmem:[%s1185 + $0x18] sm:$0xff]
        %v1191 = vsel %vm533, %v1177, 0
        %v1194 = vsel %vm533, %v1182, 0
        %1196 = vmatprep.subr.mxu0 0.0
        %1197 = vmatpush1.msra.mxu0 %v1186
        %1198 = vmatprep.subr.mxu0 0.0
        %1199 = vmatpush1.msra.mxu0 %v1187
        %1200 = vmatprep.subr.mxu0 0.0
        %1201 = vmatpush1.msra.mxu0 %v1188
        %1202 = vmatprep.subr.mxu0 0.0
        %1203 = vmatpush1.msra.mxu0 %v1189
        %1204 = vmatprep.subr.mxu0 0.0
        %1205 = vmatpush1.msra.mxu0 0.0
        %1206 = vmatprep.subr.mxu0 0.0
        %1207 = vmatpush1.msra.mxu0 0.0
        %1208 = vmatprep.subr.mxu0 0.0
        %1209 = vmatpush1.msra.mxu0 0.0
        %1210 = vmatprep.subr.mxu0 0.0
        %1211 = vmatpush1.msra.mxu0 0.0
        %1212 = vmatprep.subr.mxu0 0.0
        %1213 = vmatpush1.msra.mxu0 0.0
        %1214 = vmatprep.subr.mxu0 0.0
        %1215 = vmatpush1.msra.mxu0 0.0
        %1216 = vmatprep.subr.mxu0 0.0
        %1217 = vmatpush1.msra.mxu0 0.0
        %1218 = vmatprep.subr.mxu0 0.0
        %1219 = vmatpush1.msra.mxu0 0.0
        %1220 = vmatprep.subr.mxu0 0.0
        %1221 = vmatpush1.msra.mxu0 0.0
        %1222 = vmatprep.subr.mxu0 0.0
        %1223 = vmatpush1.msra.mxu0 0.0
        %1224 = vmatprep.subr.mxu0 0.0
        %1225 = vmatpush1.msra.mxu0 0.0
        %1226 = vmatprep.subr.mxu0 0.0
        %1227 = vmatpush1.msra.mxu0 0.0
        %1228 = vmatprep.subr.mxu0 0.0
        %1229 = vmatpush1.msra.mxu0 0.0
        %1230 = vmatprep.subr.mxu0 0.0
        %1231 = vmatpush1.msra.mxu0 0.0
        %1232 = vmatprep.subr.mxu0 0.0
        %1233 = vmatpush1.msra.mxu0 0.0
        %1234 = vmatprep.subr.mxu0 0.0
        %1235 = vmatpush1.msra.mxu0 0.0
        %1236 = vmatprep.subr.mxu0 0.0
        %1237 = vmatpush1.msra.mxu0 0.0
        %1238 = vmatprep.subr.mxu0 0.0
        %1239 = vmatpush1.msra.mxu0 0.0
        %1240 = vmatprep.subr.mxu0 0.0
        %1241 = vmatpush1.msra.mxu0 0.0
        %1242 = vmatprep.subr.mxu0 0.0
        %1243 = vmatpush1.msra.mxu0 0.0
        %1244 = vmatprep.subr.mxu0 0.0
        %1245 = vmatpush1.msra.mxu0 0.0
        %1246 = vmatprep.subr.mxu0 0.0
        %1247 = vmatpush1.msra.mxu0 0.0
        %1248 = vmatprep.subr.mxu0 0.0
        %1249 = vmatpush1.msra.mxu0 0.0
        %1250 = vmatprep.subr.mxu0 0.0
        %1251 = vmatpush1.msra.mxu0 0.0
        %1252 = vmatprep.subr.mxu0 0.0
        %1253 = vmatpush1.msra.mxu0 0.0
        %1254 = vmatprep.subr.mxu0 0.0
        %1255 = vmatpush1.msra.mxu0 0.0
        %1256 = vmatprep.subr.mxu0 0.0
        %1257 = vmatpush1.msra.mxu0 0.0
        %1258 = vmatprep.subr.mxu0 0.0
        %1259 = vmatpush1.msra.mxu0 0.0
        %1260 = vmatprep.mubr.f32.mxu0 0.0
        %1261 = vmatmul.mubr.f32.gmra.mrb[0].mxu0 %v1191
        %v1262 = vpop.f32.mrb[0].mxu0
        %v1263 = vadd.f32 0.0, %v1262
        %v1264 = vpop.f32.mrb[0].mxu0
        %1265 = vmatprep.mubr.f32.mxu0 0.0
        %1266 = vmatmul.mubr.f32.gmra.mrb[0].mxu0 %v1194
        %v1267 = vpop.f32.mrb[0].mxu0
        %v1268 = vadd.f32 0.0, %v1267
        %v1269 = vpop.f32.mrb[0].mxu0
        %1270 = vdwg.mxu0
        %v1271 = vadd.f32 %v1099, %v1263
        %v1272 = vadd.f32 %v1100, %v1268
        %s1273 = scalar_lea.vmem %s4, 64
        %v1274 = vld [vmem:[%s1273] sm:$0xff]
        %v1275 = vld [vmem:[%s1273 + $0x8] sm:$0xff]
        %v1277 = vsel %vm588, %v1274, 0
        %v1280 = vsel %vm588, %v1275, 0
        %1282 = vmatprep.subr.mxu0 0.0
        %1283 = vmatpush1.msra.mxu0 %v576
        %1284 = vmatprep.subr.mxu0 0.0
        %1285 = vmatpush1.msra.mxu0 %v577
        %1286 = vmatprep.subr.mxu0 0.0
        %1287 = vmatpush1.msra.mxu0 0.0
        %1288 = vmatprep.subr.mxu0 0.0
        %1289 = vmatpush1.msra.mxu0 0.0
        %1290 = vmatprep.subr.mxu0 0.0
        %1291 = vmatpush1.msra.mxu0 0.0
        %1292 = vmatprep.subr.mxu0 0.0
        %1293 = vmatpush1.msra.mxu0 0.0
        %1294 = vmatprep.subr.mxu0 0.0
        %1295 = vmatpush1.msra.mxu0 0.0
        %1296 = vmatprep.subr.mxu0 0.0
        %1297 = vmatpush1.msra.mxu0 0.0
        %1298 = vmatprep.subr.mxu0 0.0
        %1299 = vmatpush1.msra.mxu0 0.0
        %1300 = vmatprep.subr.mxu0 0.0
        %1301 = vmatpush1.msra.mxu0 0.0
        %1302 = vmatprep.subr.mxu0 0.0
        %1303 = vmatpush1.msra.mxu0 0.0
        %1304 = vmatprep.subr.mxu0 0.0
        %1305 = vmatpush1.msra.mxu0 0.0
        %1306 = vmatprep.subr.mxu0 0.0
        %1307 = vmatpush1.msra.mxu0 0.0
        %1308 = vmatprep.subr.mxu0 0.0
        %1309 = vmatpush1.msra.mxu0 0.0
        %1310 = vmatprep.subr.mxu0 0.0
        %1311 = vmatpush1.msra.mxu0 0.0
        %1312 = vmatprep.subr.mxu0 0.0
        %1313 = vmatpush1.msra.mxu0 0.0
        %1314 = vmatprep.subr.mxu0 0.0
        %1315 = vmatpush1.msra.mxu0 0.0
        %1316 = vmatprep.subr.mxu0 0.0
        %1317 = vmatpush1.msra.mxu0 0.0
        %1318 = vmatprep.subr.mxu0 0.0
        %1319 = vmatpush1.msra.mxu0 0.0
        %1320 = vmatprep.subr.mxu0 0.0
        %1321 = vmatpush1.msra.mxu0 0.0
        %1322 = vmatprep.subr.mxu0 0.0
        %1323 = vmatpush1.msra.mxu0 0.0
        %1324 = vmatprep.subr.mxu0 0.0
        %1325 = vmatpush1.msra.mxu0 0.0
        %1326 = vmatprep.subr.mxu0 0.0
        %1327 = vmatpush1.msra.mxu0 0.0
        %1328 = vmatprep.subr.mxu0 0.0
        %1329 = vmatpush1.msra.mxu0 0.0
        %1330 = vmatprep.subr.mxu0 0.0
        %1331 = vmatpush1.msra.mxu0 0.0
        %1332 = vmatprep.subr.mxu0 0.0
        %1333 = vmatpush1.msra.mxu0 0.0
        %1334 = vmatprep.subr.mxu0 0.0
        %1335 = vmatpush1.msra.mxu0 0.0
        %1336 = vmatprep.subr.mxu0 0.0
        %1337 = vmatpush1.msra.mxu0 0.0
        %1338 = vmatprep.subr.mxu0 0.0
        %1339 = vmatpush1.msra.mxu0 0.0
        %1340 = vmatprep.subr.mxu0 0.0
        %1341 = vmatpush1.msra.mxu0 0.0
        %1342 = vmatprep.subr.mxu0 0.0
        %1343 = vmatpush1.msra.mxu0 0.0
        %1344 = vmatprep.subr.mxu0 0.0
        %1345 = vmatpush1.msra.mxu0 0.0
        %1346 = vmatprep.mubr.f32.mxu0 0.0
        %1347 = vmatmul.mubr.f32.gmra.mrb[0].mxu0 %v1277
        %v1348 = vpop.f32.mrb[0].mxu0
        %v1349 = vadd.f32 0.0, %v1348
        %v1350 = vpop.f32.mrb[0].mxu0
        %1351 = vmatprep.mubr.f32.mxu0 0.0
        %1352 = vmatmul.mubr.f32.gmra.mrb[0].mxu0 %v1280
        %v1353 = vpop.f32.mrb[0].mxu0
        %v1354 = vadd.f32 0.0, %v1353
        %v1355 = vpop.f32.mrb[0].mxu0
        %1356 = vdwg.mxu0
        %s1357 = scalar_lea.vmem %s5, 128
        %v1358 = vld [vmem:[%s1357] sm:$0xff]
        %v1359 = vld [vmem:[%s1357 + $0x8] sm:$0xff]
        %v1360 = vld [vmem:[%s1357 + $0x10] sm:$0xff]
        %v1361 = vld [vmem:[%s1357 + $0x18] sm:$0xff]
        %v1363 = vsel %vm533, %v1349, 0
        %v1366 = vsel %vm533, %v1354, 0
        %1368 = vmatprep.subr.mxu0 0.0
        %1369 = vmatpush1.msra.mxu0 %v1358
        %1370 = vmatprep.subr.mxu0 0.0
        %1371 = vmatpush1.msra.mxu0 %v1359
        %1372 = vmatprep.subr.mxu0 0.0
        %1373 = vmatpush1.msra.mxu0 %v1360
        %1374 = vmatprep.subr.mxu0 0.0
        %1375 = vmatpush1.msra.mxu0 %v1361
        %1376 = vmatprep.subr.mxu0 0.0
        %1377 = vmatpush1.msra.mxu0 0.0
        %1378 = vmatprep.subr.mxu0 0.0
        %1379 = vmatpush1.msra.mxu0 0.0
        %1380 = vmatprep.subr.mxu0 0.0
        %1381 = vmatpush1.msra.mxu0 0.0
        %1382 = vmatprep.subr.mxu0 0.0
        %1383 = vmatpush1.msra.mxu0 0.0
        %1384 = vmatprep.subr.mxu0 0.0
        %1385 = vmatpush1.msra.mxu0 0.0
        %1386 = vmatprep.subr.mxu0 0.0
        %1387 = vmatpush1.msra.mxu0 0.0
        %1388 = vmatprep.subr.mxu0 0.0
        %1389 = vmatpush1.msra.mxu0 0.0
        %1390 = vmatprep.subr.mxu0 0.0
        %1391 = vmatpush1.msra.mxu0 0.0
        %1392 = vmatprep.subr.mxu0 0.0
        %1393 = vmatpush1.msra.mxu0 0.0
        %1394 = vmatprep.subr.mxu0 0.0
        %1395 = vmatpush1.msra.mxu0 0.0
        %1396 = vmatprep.subr.mxu0 0.0
        %1397 = vmatpush1.msra.mxu0 0.0
        %1398 = vmatprep.subr.mxu0 0.0
        %1399 = vmatpush1.msra.mxu0 0.0
        %1400 = vmatprep.subr.mxu0 0.0
        %1401 = vmatpush1.msra.mxu0 0.0
        %1402 = vmatprep.subr.mxu0 0.0
        %1403 = vmatpush1.msra.mxu0 0.0
        %1404 = vmatprep.subr.mxu0 0.0
        %1405 = vmatpush1.msra.mxu0 0.0
        %1406 = vmatprep.subr.mxu0 0.0
        %1407 = vmatpush1.msra.mxu0 0.0
        %1408 = vmatprep.subr.mxu0 0.0
        %1409 = vmatpush1.msra.mxu0 0.0
        %1410 = vmatprep.subr.mxu0 0.0
        %1411 = vmatpush1.msra.mxu0 0.0
        %1412 = vmatprep.subr.mxu0 0.0
        %1413 = vmatpush1.msra.mxu0 0.0
        %1414 = vmatprep.subr.mxu0 0.0
        %1415 = vmatpush1.msra.mxu0 0.0
        %1416 = vmatprep.subr.mxu0 0.0
        %1417 = vmatpush1.msra.mxu0 0.0
        %1418 = vmatprep.subr.mxu0 0.0
        %1419 = vmatpush1.msra.mxu0 0.0
        %1420 = vmatprep.subr.mxu0 0.0
        %1421 = vmatpush1.msra.mxu0 0.0
        %1422 = vmatprep.subr.mxu0 0.0
        %1423 = vmatpush1.msra.mxu0 0.0
        %1424 = vmatprep.subr.mxu0 0.0
        %1425 = vmatpush1.msra.mxu0 0.0
        %1426 = vmatprep.subr.mxu0 0.0
        %1427 = vmatpush1.msra.mxu0 0.0
        %1428 = vmatprep.subr.mxu0 0.0
        %1429 = vmatpush1.msra.mxu0 0.0
        %1430 = vmatprep.subr.mxu0 0.0
        %1431 = vmatpush1.msra.mxu0 0.0
        %1432 = vmatprep.mubr.f32.mxu0 0.0
        %1433 = vmatmul.mubr.f32.gmra.mrb[0].mxu0 %v1363
        %v1434 = vpop.f32.mrb[0].mxu0
        %v1435 = vadd.f32 0.0, %v1434
        %v1436 = vpop.f32.mrb[0].mxu0
        %1437 = vmatprep.mubr.f32.mxu0 0.0
        %1438 = vmatmul.mubr.f32.gmra.mrb[0].mxu0 %v1366
        %v1439 = vpop.f32.mrb[0].mxu0
        %v1440 = vadd.f32 0.0, %v1439
        %v1441 = vpop.f32.mrb[0].mxu0
        %1442 = vdwg.mxu0
        %v1443 = vadd.f32 %v1271, %v1435
        %v1444 = vadd.f32 %v1272, %v1440
        %v1445 = vmax.f32 %v1443, 0.0
        %v1446 = vmax.f32 %v1444, 0.0
        %v1447 = vadd.f32 %v1445, %v531
        %v1448 = vadd.f32 %v1446, %v532
        %v1449 = vsel %vm533, %v1447, 0.0
        %1450 = vadd.xlane.f32.xlu0 %v1449
        %v1451 = vpop.xlane.xlu0 %1450
        %v1452 = vsel %vm533, %v1448, 0.0
        %1453 = vadd.xlane.f32.xlu0 %v1452
        %v1454 = vpop.xlane.xlu0 %1453
        %v1455 = vadd.f32 %v1451, %v1454
        %v1456 = vrot.slane %v1455, 4
        %v1457 = vadd.f32 %v1455, %v1456
        %v1458 = vrot.slane %v1457, 2
        %v1459 = vadd.f32 %v1457, %v1458
        %v1460 = vrot.slane %v1459, 1
        %v1461 = vadd.f32 %v1459, %v1460
        %v1462 = vmul.f32 %v1461, 0.001953125
        %v1463 = vsub.f32 %v1447, %v1462
        %v1464 = vsub.f32 %v1448, %v1462
        %v1465 = vmul.f32 %v1463, %v1463
        %v1466 = vmul.f32 %v1464, %v1464
        %v1467 = vsel %vm533, %v1465, 0.0
        %1468 = vadd.xlane.f32.xlu0 %v1467
        %v1469 = vpop.xlane.xlu0 %1468
        %v1470 = vsel %vm533, %v1466, 0.0
        %1471 = vadd.xlane.f32.xlu0 %v1470
        %v1472 = vpop.xlane.xlu0 %1471
        %v1473 = vadd.f32 %v1469, %v1472
        %v1474 = vrot.slane %v1473, 4
        %v1475 = vadd.f32 %v1473, %v1474
        %v1476 = vrot.slane %v1475, 2
        %v1477 = vadd.f32 %v1475, %v1476
        %v1478 = vrot.slane %v1477, 1
        %v1479 = vadd.f32 %v1477, %v1478
        %v1480 = vmul.f32 %v1479, 0.001953125
        %v1481 = vadd.f32 %v1480, 1e-05
        %v1482 = vrsqrt.pop %v1481
        %v1483 = vmul.f32 %v1463, %v1482
        %v1484 = vmul.f32 %v1464, %v1482
        %s1485 = scalar_lea.vmem %s2, 16
        %v1486 = vld [vmem:[%s1485] sm:$0xff]
        %v1487 = vld [vmem:[%s1485 + $0x8] sm:$0xff]
        %v1488 = vmul.f32 %v1483, %v1486
        %v1489 = vmul.f32 %v1484, %v1487
        %s1490 = scalar_lea.vmem %s3, 16
        %v1491 = vld [vmem:[%s1490] sm:$0xff]
        %v1492 = vld [vmem:[%s1490 + $0x8] sm:$0xff]
        %v1493 = vadd.f32 %v1488, %v1491
        %v1494 = vadd.f32 %v1489, %v1492
        %s1495 = scalar_lea.vmem %s6, 1
        %v1496 = vld [vmem:[%s1495] sm:$0x1]
        %v1498 = vlaneseq
        %v1499 = vshrl.u32 %v1498, 7
        %v1500 = vsub.s32 0, %v1499
        %v1501 = vrot.slane %v1496, %v1500
        %v1503 = vadd.f32 %v1501, 0.0
        %1504 = vmatprep.subr.mxu0 0.0
        %1505 = vmatpush1.msra.mxu0 %v1493
        %1506 = vmatprep.subr.mxu0 0.0
        %1507 = vmatpush1.msra.mxu0 %v1494
        %1508 = vmatprep.subr.mxu0 0.0
        %1509 = vmatpush1.msra.mxu0 0.0
        %1510 = vmatprep.subr.mxu0 0.0
        %1511 = vmatpush1.msra.mxu0 0.0
        %1512 = vmatprep.subr.mxu0 0.0
        %1513 = vmatpush1.msra.mxu0 0.0
        %1514 = vmatprep.subr.mxu0 0.0
        %1515 = vmatpush1.msra.mxu0 0.0
        %1516 = vmatprep.subr.mxu0 0.0
        %1517 = vmatpush1.msra.mxu0 0.0
        %1518 = vmatprep.subr.mxu0 0.0
        %1519 = vmatpush1.msra.mxu0 0.0
        %1520 = vmatprep.subr.mxu0 0.0
        %1521 = vmatpush1.msra.mxu0 0.0
        %1522 = vmatprep.subr.mxu0 0.0
        %1523 = vmatpush1.msra.mxu0 0.0
        %1524 = vmatprep.subr.mxu0 0.0
        %1525 = vmatpush1.msra.mxu0 0.0
        %1526 = vmatprep.subr.mxu0 0.0
        %1527 = vmatpush1.msra.mxu0 0.0
        %1528 = vmatprep.subr.mxu0 0.0
        %1529 = vmatpush1.msra.mxu0 0.0
        %1530 = vmatprep.subr.mxu0 0.0
        %1531 = vmatpush1.msra.mxu0 0.0
        %1532 = vmatprep.subr.mxu0 0.0
        %1533 = vmatpush1.msra.mxu0 0.0
        %1534 = vmatprep.subr.mxu0 0.0
        %1535 = vmatpush1.msra.mxu0 0.0
        %1536 = vmatprep.subr.mxu0 0.0
        %1537 = vmatpush1.msra.mxu0 0.0
        %1538 = vmatprep.subr.mxu0 0.0
        %1539 = vmatpush1.msra.mxu0 0.0
        %1540 = vmatprep.subr.mxu0 0.0
        %1541 = vmatpush1.msra.mxu0 0.0
        %1542 = vmatprep.subr.mxu0 0.0
        %1543 = vmatpush1.msra.mxu0 0.0
        %1544 = vmatprep.subr.mxu0 0.0
        %1545 = vmatpush1.msra.mxu0 0.0
        %1546 = vmatprep.subr.mxu0 0.0
        %1547 = vmatpush1.msra.mxu0 0.0
        %1548 = vmatprep.subr.mxu0 0.0
        %1549 = vmatpush1.msra.mxu0 0.0
        %1550 = vmatprep.subr.mxu0 0.0
        %1551 = vmatpush1.msra.mxu0 0.0
        %1552 = vmatprep.subr.mxu0 0.0
        %1553 = vmatpush1.msra.mxu0 0.0
        %1554 = vmatprep.subr.mxu0 0.0
        %1555 = vmatpush1.msra.mxu0 0.0
        %1556 = vmatprep.subr.mxu0 0.0
        %1557 = vmatpush1.msra.mxu0 0.0
        %1558 = vmatprep.subr.mxu0 0.0
        %1559 = vmatpush1.msra.mxu0 0.0
        %1560 = vmatprep.subr.mxu0 0.0
        %1561 = vmatpush1.msra.mxu0 0.0
        %1562 = vmatprep.subr.mxu0 0.0
        %1563 = vmatpush1.msra.mxu0 0.0
        %1564 = vmatprep.subr.mxu0 0.0
        %1565 = vmatpush1.msra.mxu0 0.0
        %1566 = vmatprep.subr.mxu0 0.0
        %1567 = vmatpush1.msra.mxu0 0.0
        %1568 = vmatprep.mubr.f32.mxu0 0.0
        %1569 = vmatmul.mubr.f32.gmra.mrb[0].mxu0 %v590
        %v1570 = vpop.f32.mrb[0].mxu0
        %v1571 = vadd.f32 0.0, %v1570
        %v1572 = vpop.f32.mrb[0].mxu0
        %1573 = vmatprep.mubr.f32.mxu0 0.0
        %1574 = vmatmul.mubr.f32.gmra.mrb[0].mxu0 %v593
        %v1575 = vpop.f32.mrb[0].mxu0
        %v1576 = vadd.f32 0.0, %v1575
        %v1577 = vpop.f32.mrb[0].mxu0
        %1578 = vdwg.mxu0
        %s1579 = scalar_lea.vmem %s5, 160
        %v1580 = vld [vmem:[%s1579] sm:$0xff]
        %v1581 = vld [vmem:[%s1579 + $0x8] sm:$0xff]
        %v1582 = vld [vmem:[%s1579 + $0x10] sm:$0xff]
        %v1583 = vld [vmem:[%s1579 + $0x18] sm:$0xff]
        %v1585 = vsel %vm533, %v1571, 0
        %v1588 = vsel %vm533, %v1576, 0
        %1590 = vmatprep.subr.mxu0 0.0
        %1591 = vmatpush1.msra.mxu0 %v1580
        %1592 = vmatprep.subr.mxu0 0.0
        %1593 = vmatpush1.msra.mxu0 %v1581
        %1594 = vmatprep.subr.mxu0 0.0
        %1595 = vmatpush1.msra.mxu0 %v1582
        %1596 = vmatprep.subr.mxu0 0.0
        %1597 = vmatpush1.msra.mxu0 %v1583
        %1598 = vmatprep.subr.mxu0 0.0
        %1599 = vmatpush1.msra.mxu0 0.0
        %1600 = vmatprep.subr.mxu0 0.0
        %1601 = vmatpush1.msra.mxu0 0.0
        %1602 = vmatprep.subr.mxu0 0.0
        %1603 = vmatpush1.msra.mxu0 0.0
        %1604 = vmatprep.subr.mxu0 0.0
        %1605 = vmatpush1.msra.mxu0 0.0
        %1606 = vmatprep.subr.mxu0 0.0
        %1607 = vmatpush1.msra.mxu0 0.0
        %1608 = vmatprep.subr.mxu0 0.0
        %1609 = vmatpush1.msra.mxu0 0.0
        %1610 = vmatprep.subr.mxu0 0.0
        %1611 = vmatpush1.msra.mxu0 0.0
        %1612 = vmatprep.subr.mxu0 0.0
        %1613 = vmatpush1.msra.mxu0 0.0
        %1614 = vmatprep.subr.mxu0 0.0
        %1615 = vmatpush1.msra.mxu0 0.0
        %1616 = vmatprep.subr.mxu0 0.0
        %1617 = vmatpush1.msra.mxu0 0.0
        %1618 = vmatprep.subr.mxu0 0.0
        %1619 = vmatpush1.msra.mxu0 0.0
        %1620 = vmatprep.subr.mxu0 0.0
        %1621 = vmatpush1.msra.mxu0 0.0
        %1622 = vmatprep.subr.mxu0 0.0
        %1623 = vmatpush1.msra.mxu0 0.0
        %1624 = vmatprep.subr.mxu0 0.0
        %1625 = vmatpush1.msra.mxu0 0.0
        %1626 = vmatprep.subr.mxu0 0.0
        %1627 = vmatpush1.msra.mxu0 0.0
        %1628 = vmatprep.subr.mxu0 0.0
        %1629 = vmatpush1.msra.mxu0 0.0
        %1630 = vmatprep.subr.mxu0 0.0
        %1631 = vmatpush1.msra.mxu0 0.0
        %1632 = vmatprep.subr.mxu0 0.0
        %1633 = vmatpush1.msra.mxu0 0.0
        %1634 = vmatprep.subr.mxu0 0.0
        %1635 = vmatpush1.msra.mxu0 0.0
        %1636 = vmatprep.subr.mxu0 0.0
        %1637 = vmatpush1.msra.mxu0 0.0
        %1638 = vmatprep.subr.mxu0 0.0
        %1639 = vmatpush1.msra.mxu0 0.0
        %1640 = vmatprep.subr.mxu0 0.0
        %1641 = vmatpush1.msra.mxu0 0.0
        %1642 = vmatprep.subr.mxu0 0.0
        %1643 = vmatpush1.msra.mxu0 0.0
        %1644 = vmatprep.subr.mxu0 0.0
        %1645 = vmatpush1.msra.mxu0 0.0
        %1646 = vmatprep.subr.mxu0 0.0
        %1647 = vmatpush1.msra.mxu0 0.0
        %1648 = vmatprep.subr.mxu0 0.0
        %1649 = vmatpush1.msra.mxu0 0.0
        %1650 = vmatprep.subr.mxu0 0.0
        %1651 = vmatpush1.msra.mxu0 0.0
        %1652 = vmatprep.subr.mxu0 0.0
        %1653 = vmatpush1.msra.mxu0 0.0
        %1654 = vmatprep.mubr.f32.mxu0 0.0
        %1655 = vmatmul.mubr.f32.gmra.mrb[0].mxu0 %v1585
        %v1656 = vpop.f32.mrb[0].mxu0
        %v1657 = vadd.f32 0.0, %v1656
        %v1658 = vpop.f32.mrb[0].mxu0
        %1659 = vmatprep.mubr.f32.mxu0 0.0
        %1660 = vmatmul.mubr.f32.gmra.mrb[0].mxu0 %v1588
        %v1661 = vpop.f32.mrb[0].mxu0
        %v1662 = vadd.f32 0.0, %v1661
        %v1663 = vpop.f32.mrb[0].mxu0
        %1664 = vdwg.mxu0
        %v1665 = vadd.f32 %v1503, %v1657
        %v1666 = vadd.f32 %v1503, %v1662
        %1667 = vmatprep.subr.mxu0 0.0
        %1668 = vmatpush1.msra.mxu0 %v1493
        %1669 = vmatprep.subr.mxu0 0.0
        %1670 = vmatpush1.msra.mxu0 %v1494
        %1671 = vmatprep.subr.mxu0 0.0
        %1672 = vmatpush1.msra.mxu0 0.0
        %1673 = vmatprep.subr.mxu0 0.0
        %1674 = vmatpush1.msra.mxu0 0.0
        %1675 = vmatprep.subr.mxu0 0.0
        %1676 = vmatpush1.msra.mxu0 0.0
        %1677 = vmatprep.subr.mxu0 0.0
        %1678 = vmatpush1.msra.mxu0 0.0
        %1679 = vmatprep.subr.mxu0 0.0
        %1680 = vmatpush1.msra.mxu0 0.0
        %1681 = vmatprep.subr.mxu0 0.0
        %1682 = vmatpush1.msra.mxu0 0.0
        %1683 = vmatprep.subr.mxu0 0.0
        %1684 = vmatpush1.msra.mxu0 0.0
        %1685 = vmatprep.subr.mxu0 0.0
        %1686 = vmatpush1.msra.mxu0 0.0
        %1687 = vmatprep.subr.mxu0 0.0
        %1688 = vmatpush1.msra.mxu0 0.0
        %1689 = vmatprep.subr.mxu0 0.0
        %1690 = vmatpush1.msra.mxu0 0.0
        %1691 = vmatprep.subr.mxu0 0.0
        %1692 = vmatpush1.msra.mxu0 0.0
        %1693 = vmatprep.subr.mxu0 0.0
        %1694 = vmatpush1.msra.mxu0 0.0
        %1695 = vmatprep.subr.mxu0 0.0
        %1696 = vmatpush1.msra.mxu0 0.0
        %1697 = vmatprep.subr.mxu0 0.0
        %1698 = vmatpush1.msra.mxu0 0.0
        %1699 = vmatprep.subr.mxu0 0.0
        %1700 = vmatpush1.msra.mxu0 0.0
        %1701 = vmatprep.subr.mxu0 0.0
        %1702 = vmatpush1.msra.mxu0 0.0
        %1703 = vmatprep.subr.mxu0 0.0
        %1704 = vmatpush1.msra.mxu0 0.0
        %1705 = vmatprep.subr.mxu0 0.0
        %1706 = vmatpush1.msra.mxu0 0.0
        %1707 = vmatprep.subr.mxu0 0.0
        %1708 = vmatpush1.msra.mxu0 0.0
        %1709 = vmatprep.subr.mxu0 0.0
        %1710 = vmatpush1.msra.mxu0 0.0
        %1711 = vmatprep.subr.mxu0 0.0
        %1712 = vmatpush1.msra.mxu0 0.0
        %1713 = vmatprep.subr.mxu0 0.0
        %1714 = vmatpush1.msra.mxu0 0.0
        %1715 = vmatprep.subr.mxu0 0.0
        %1716 = vmatpush1.msra.mxu0 0.0
        %1717 = vmatprep.subr.mxu0 0.0
        %1718 = vmatpush1.msra.mxu0 0.0
        %1719 = vmatprep.subr.mxu0 0.0
        %1720 = vmatpush1.msra.mxu0 0.0
        %1721 = vmatprep.subr.mxu0 0.0
        %1722 = vmatpush1.msra.mxu0 0.0
        %1723 = vmatprep.subr.mxu0 0.0
        %1724 = vmatpush1.msra.mxu0 0.0
        %1725 = vmatprep.subr.mxu0 0.0
        %1726 = vmatpush1.msra.mxu0 0.0
        %1727 = vmatprep.subr.mxu0 0.0
        %1728 = vmatpush1.msra.mxu0 0.0
        %1729 = vmatprep.subr.mxu0 0.0
        %1730 = vmatpush1.msra.mxu0 0.0
        %1731 = vmatprep.mubr.f32.mxu0 0.0
        %1732 = vmatmul.mubr.f32.gmra.mrb[0].mxu0 %v761
        %v1733 = vpop.f32.mrb[0].mxu0
        %v1734 = vadd.f32 0.0, %v1733
        %v1735 = vpop.f32.mrb[0].mxu0
        %1736 = vmatprep.mubr.f32.mxu0 0.0
        %1737 = vmatmul.mubr.f32.gmra.mrb[0].mxu0 %v764
        %v1738 = vpop.f32.mrb[0].mxu0
        %v1739 = vadd.f32 0.0, %v1738
        %v1740 = vpop.f32.mrb[0].mxu0
        %1741 = vdwg.mxu0
        %s1742 = scalar_lea.vmem %s5, 192
        %v1743 = vld [vmem:[%s1742] sm:$0xff]
        %v1744 = vld [vmem:[%s1742 + $0x8] sm:$0xff]
        %v1745 = vld [vmem:[%s1742 + $0x10] sm:$0xff]
        %v1746 = vld [vmem:[%s1742 + $0x18] sm:$0xff]
        %v1748 = vsel %vm533, %v1734, 0
        %v1751 = vsel %vm533, %v1739, 0
        %1753 = vmatprep.subr.mxu0 0.0
        %1754 = vmatpush1.msra.mxu0 %v1743
        %1755 = vmatprep.subr.mxu0 0.0
        %1756 = vmatpush1.msra.mxu0 %v1744
        %1757 = vmatprep.subr.mxu0 0.0
        %1758 = vmatpush1.msra.mxu0 %v1745
        %1759 = vmatprep.subr.mxu0 0.0
        %1760 = vmatpush1.msra.mxu0 %v1746
        %1761 = vmatprep.subr.mxu0 0.0
        %1762 = vmatpush1.msra.mxu0 0.0
        %1763 = vmatprep.subr.mxu0 0.0
        %1764 = vmatpush1.msra.mxu0 0.0
        %1765 = vmatprep.subr.mxu0 0.0
        %1766 = vmatpush1.msra.mxu0 0.0
        %1767 = vmatprep.subr.mxu0 0.0
        %1768 = vmatpush1.msra.mxu0 0.0
        %1769 = vmatprep.subr.mxu0 0.0
        %1770 = vmatpush1.msra.mxu0 0.0
        %1771 = vmatprep.subr.mxu0 0.0
        %1772 = vmatpush1.msra.mxu0 0.0
        %1773 = vmatprep.subr.mxu0 0.0
        %1774 = vmatpush1.msra.mxu0 0.0
        %1775 = vmatprep.subr.mxu0 0.0
        %1776 = vmatpush1.msra.mxu0 0.0
        %1777 = vmatprep.subr.mxu0 0.0
        %1778 = vmatpush1.msra.mxu0 0.0
        %1779 = vmatprep.subr.mxu0 0.0
        %1780 = vmatpush1.msra.mxu0 0.0
        %1781 = vmatprep.subr.mxu0 0.0
        %1782 = vmatpush1.msra.mxu0 0.0
        %1783 = vmatprep.subr.mxu0 0.0
        %1784 = vmatpush1.msra.mxu0 0.0
        %1785 = vmatprep.subr.mxu0 0.0
        %1786 = vmatpush1.msra.mxu0 0.0
        %1787 = vmatprep.subr.mxu0 0.0
        %1788 = vmatpush1.msra.mxu0 0.0
        %1789 = vmatprep.subr.mxu0 0.0
        %1790 = vmatpush1.msra.mxu0 0.0
        %1791 = vmatprep.subr.mxu0 0.0
        %1792 = vmatpush1.msra.mxu0 0.0
        %1793 = vmatprep.subr.mxu0 0.0
        %1794 = vmatpush1.msra.mxu0 0.0
        %1795 = vmatprep.subr.mxu0 0.0
        %1796 = vmatpush1.msra.mxu0 0.0
        %1797 = vmatprep.subr.mxu0 0.0
        %1798 = vmatpush1.msra.mxu0 0.0
        %1799 = vmatprep.subr.mxu0 0.0
        %1800 = vmatpush1.msra.mxu0 0.0
        %1801 = vmatprep.subr.mxu0 0.0
        %1802 = vmatpush1.msra.mxu0 0.0
        %1803 = vmatprep.subr.mxu0 0.0
        %1804 = vmatpush1.msra.mxu0 0.0
        %1805 = vmatprep.subr.mxu0 0.0
        %1806 = vmatpush1.msra.mxu0 0.0
        %1807 = vmatprep.subr.mxu0 0.0
        %1808 = vmatpush1.msra.mxu0 0.0
        %1809 = vmatprep.subr.mxu0 0.0
        %1810 = vmatpush1.msra.mxu0 0.0
        %1811 = vmatprep.subr.mxu0 0.0
        %1812 = vmatpush1.msra.mxu0 0.0
        %1813 = vmatprep.subr.mxu0 0.0
        %1814 = vmatpush1.msra.mxu0 0.0
        %1815 = vmatprep.subr.mxu0 0.0
        %1816 = vmatpush1.msra.mxu0 0.0
        %1817 = vmatprep.mubr.f32.mxu0 0.0
        %1818 = vmatmul.mubr.f32.gmra.mrb[0].mxu0 %v1748
        %v1819 = vpop.f32.mrb[0].mxu0
        %v1820 = vadd.f32 0.0, %v1819
        %v1821 = vpop.f32.mrb[0].mxu0
        %1822 = vmatprep.mubr.f32.mxu0 0.0
        %1823 = vmatmul.mubr.f32.gmra.mrb[0].mxu0 %v1751
        %v1824 = vpop.f32.mrb[0].mxu0
        %v1825 = vadd.f32 0.0, %v1824
        %v1826 = vpop.f32.mrb[0].mxu0
        %1827 = vdwg.mxu0
        %v1828 = vadd.f32 %v1665, %v1820
        %v1829 = vadd.f32 %v1666, %v1825
        %1830 = vmatprep.subr.mxu0 0.0
        %1831 = vmatpush1.msra.mxu0 %v1493
        %1832 = vmatprep.subr.mxu0 0.0
        %1833 = vmatpush1.msra.mxu0 %v1494
        %1834 = vmatprep.subr.mxu0 0.0
        %1835 = vmatpush1.msra.mxu0 0.0
        %1836 = vmatprep.subr.mxu0 0.0
        %1837 = vmatpush1.msra.mxu0 0.0
        %1838 = vmatprep.subr.mxu0 0.0
        %1839 = vmatpush1.msra.mxu0 0.0
        %1840 = vmatprep.subr.mxu0 0.0
        %1841 = vmatpush1.msra.mxu0 0.0
        %1842 = vmatprep.subr.mxu0 0.0
        %1843 = vmatpush1.msra.mxu0 0.0
        %1844 = vmatprep.subr.mxu0 0.0
        %1845 = vmatpush1.msra.mxu0 0.0
        %1846 = vmatprep.subr.mxu0 0.0
        %1847 = vmatpush1.msra.mxu0 0.0
        %1848 = vmatprep.subr.mxu0 0.0
        %1849 = vmatpush1.msra.mxu0 0.0
        %1850 = vmatprep.subr.mxu0 0.0
        %1851 = vmatpush1.msra.mxu0 0.0
        %1852 = vmatprep.subr.mxu0 0.0
        %1853 = vmatpush1.msra.mxu0 0.0
        %1854 = vmatprep.subr.mxu0 0.0
        %1855 = vmatpush1.msra.mxu0 0.0
        %1856 = vmatprep.subr.mxu0 0.0
        %1857 = vmatpush1.msra.mxu0 0.0
        %1858 = vmatprep.subr.mxu0 0.0
        %1859 = vmatpush1.msra.mxu0 0.0
        %1860 = vmatprep.subr.mxu0 0.0
        %1861 = vmatpush1.msra.mxu0 0.0
        %1862 = vmatprep.subr.mxu0 0.0
        %1863 = vmatpush1.msra.mxu0 0.0
        %1864 = vmatprep.subr.mxu0 0.0
        %1865 = vmatpush1.msra.mxu0 0.0
        %1866 = vmatprep.subr.mxu0 0.0
        %1867 = vmatpush1.msra.mxu0 0.0
        %1868 = vmatprep.subr.mxu0 0.0
        %1869 = vmatpush1.msra.mxu0 0.0
        %1870 = vmatprep.subr.mxu0 0.0
        %1871 = vmatpush1.msra.mxu0 0.0
        %1872 = vmatprep.subr.mxu0 0.0
        %1873 = vmatpush1.msra.mxu0 0.0
        %1874 = vmatprep.subr.mxu0 0.0
        %1875 = vmatpush1.msra.mxu0 0.0
        %1876 = vmatprep.subr.mxu0 0.0
        %1877 = vmatpush1.msra.mxu0 0.0
        %1878 = vmatprep.subr.mxu0 0.0
        %1879 = vmatpush1.msra.mxu0 0.0
        %1880 = vmatprep.subr.mxu0 0.0
        %1881 = vmatpush1.msra.mxu0 0.0
        %1882 = vmatprep.subr.mxu0 0.0
        %1883 = vmatpush1.msra.mxu0 0.0
        %1884 = vmatprep.subr.mxu0 0.0
        %1885 = vmatpush1.msra.mxu0 0.0
        %1886 = vmatprep.subr.mxu0 0.0
        %1887 = vmatpush1.msra.mxu0 0.0
        %1888 = vmatprep.subr.mxu0 0.0
        %1889 = vmatpush1.msra.mxu0 0.0
        %1890 = vmatprep.subr.mxu0 0.0
        %1891 = vmatpush1.msra.mxu0 0.0
        %1892 = vmatprep.subr.mxu0 0.0
        %1893 = vmatpush1.msra.mxu0 0.0
        %1894 = vmatprep.mubr.f32.mxu0 0.0
        %1895 = vmatmul.mubr.f32.gmra.mrb[0].mxu0 %v933
        %v1896 = vpop.f32.mrb[0].mxu0
        %v1897 = vadd.f32 0.0, %v1896
        %v1898 = vpop.f32.mrb[0].mxu0
        %1899 = vmatprep.mubr.f32.mxu0 0.0
        %1900 = vmatmul.mubr.f32.gmra.mrb[0].mxu0 %v936
        %v1901 = vpop.f32.mrb[0].mxu0
        %v1902 = vadd.f32 0.0, %v1901
        %v1903 = vpop.f32.mrb[0].mxu0
        %1904 = vdwg.mxu0
        %s1905 = scalar_lea.vmem %s5, 224
        %v1906 = vld [vmem:[%s1905] sm:$0xff]
        %v1907 = vld [vmem:[%s1905 + $0x8] sm:$0xff]
        %v1908 = vld [vmem:[%s1905 + $0x10] sm:$0xff]
        %v1909 = vld [vmem:[%s1905 + $0x18] sm:$0xff]
        %v1911 = vsel %vm533, %v1897, 0
        %v1914 = vsel %vm533, %v1902, 0
        %1916 = vmatprep.subr.mxu0 0.0
        %1917 = vmatpush1.msra.mxu0 %v1906
        %1918 = vmatprep.subr.mxu0 0.0
        %1919 = vmatpush1.msra.mxu0 %v1907
        %1920 = vmatprep.subr.mxu0 0.0
        %1921 = vmatpush1.msra.mxu0 %v1908
        %1922 = vmatprep.subr.mxu0 0.0
        %1923 = vmatpush1.msra.mxu0 %v1909
        %1924 = vmatprep.subr.mxu0 0.0
        %1925 = vmatpush1.msra.mxu0 0.0
        %1926 = vmatprep.subr.mxu0 0.0
        %1927 = vmatpush1.msra.mxu0 0.0
        %1928 = vmatprep.subr.mxu0 0.0
        %1929 = vmatpush1.msra.mxu0 0.0
        %1930 = vmatprep.subr.mxu0 0.0
        %1931 = vmatpush1.msra.mxu0 0.0
        %1932 = vmatprep.subr.mxu0 0.0
        %1933 = vmatpush1.msra.mxu0 0.0
        %1934 = vmatprep.subr.mxu0 0.0
        %1935 = vmatpush1.msra.mxu0 0.0
        %1936 = vmatprep.subr.mxu0 0.0
        %1937 = vmatpush1.msra.mxu0 0.0
        %1938 = vmatprep.subr.mxu0 0.0
        %1939 = vmatpush1.msra.mxu0 0.0
        %1940 = vmatprep.subr.mxu0 0.0
        %1941 = vmatpush1.msra.mxu0 0.0
        %1942 = vmatprep.subr.mxu0 0.0
        %1943 = vmatpush1.msra.mxu0 0.0
        %1944 = vmatprep.subr.mxu0 0.0
        %1945 = vmatpush1.msra.mxu0 0.0
        %1946 = vmatprep.subr.mxu0 0.0
        %1947 = vmatpush1.msra.mxu0 0.0
        %1948 = vmatprep.subr.mxu0 0.0
        %1949 = vmatpush1.msra.mxu0 0.0
        %1950 = vmatprep.subr.mxu0 0.0
        %1951 = vmatpush1.msra.mxu0 0.0
        %1952 = vmatprep.subr.mxu0 0.0
        %1953 = vmatpush1.msra.mxu0 0.0
        %1954 = vmatprep.subr.mxu0 0.0
        %1955 = vmatpush1.msra.mxu0 0.0
        %1956 = vmatprep.subr.mxu0 0.0
        %1957 = vmatpush1.msra.mxu0 0.0
        %1958 = vmatprep.subr.mxu0 0.0
        %1959 = vmatpush1.msra.mxu0 0.0
        %1960 = vmatprep.subr.mxu0 0.0
        %1961 = vmatpush1.msra.mxu0 0.0
        %1962 = vmatprep.subr.mxu0 0.0
        %1963 = vmatpush1.msra.mxu0 0.0
        %1964 = vmatprep.subr.mxu0 0.0
        %1965 = vmatpush1.msra.mxu0 0.0
        %1966 = vmatprep.subr.mxu0 0.0
        %1967 = vmatpush1.msra.mxu0 0.0
        %1968 = vmatprep.subr.mxu0 0.0
        %1969 = vmatpush1.msra.mxu0 0.0
        %1970 = vmatprep.subr.mxu0 0.0
        %1971 = vmatpush1.msra.mxu0 0.0
        %1972 = vmatprep.subr.mxu0 0.0
        %1973 = vmatpush1.msra.mxu0 0.0
        %1974 = vmatprep.subr.mxu0 0.0
        %1975 = vmatpush1.msra.mxu0 0.0
        %1976 = vmatprep.subr.mxu0 0.0
        %1977 = vmatpush1.msra.mxu0 0.0
        %1978 = vmatprep.subr.mxu0 0.0
        %1979 = vmatpush1.msra.mxu0 0.0
        %1980 = vmatprep.mubr.f32.mxu0 0.0
        %1981 = vmatmul.mubr.f32.gmra.mrb[0].mxu0 %v1911
        %v1982 = vpop.f32.mrb[0].mxu0
        %v1983 = vadd.f32 0.0, %v1982
        %v1984 = vpop.f32.mrb[0].mxu0
        %1985 = vmatprep.mubr.f32.mxu0 0.0
        %1986 = vmatmul.mubr.f32.gmra.mrb[0].mxu0 %v1914
        %v1987 = vpop.f32.mrb[0].mxu0
        %v1988 = vadd.f32 0.0, %v1987
        %v1989 = vpop.f32.mrb[0].mxu0
        %1990 = vdwg.mxu0
        %v1991 = vadd.f32 %v1828, %v1983
        %v1992 = vadd.f32 %v1829, %v1988
        %1993 = vmatprep.subr.mxu0 0.0
        %1994 = vmatpush1.msra.mxu0 %v1493
        %1995 = vmatprep.subr.mxu0 0.0
        %1996 = vmatpush1.msra.mxu0 %v1494
        %1997 = vmatprep.subr.mxu0 0.0
        %1998 = vmatpush1.msra.mxu0 0.0
        %1999 = vmatprep.subr.mxu0 0.0
        %2000 = vmatpush1.msra.mxu0 0.0
        %2001 = vmatprep.subr.mxu0 0.0
        %2002 = vmatpush1.msra.mxu0 0.0
        %2003 = vmatprep.subr.mxu0 0.0
        %2004 = vmatpush1.msra.mxu0 0.0
        %2005 = vmatprep.subr.mxu0 0.0
        %2006 = vmatpush1.msra.mxu0 0.0
        %2007 = vmatprep.subr.mxu0 0.0
        %2008 = vmatpush1.msra.mxu0 0.0
        %2009 = vmatprep.subr.mxu0 0.0
        %2010 = vmatpush1.msra.mxu0 0.0
        %2011 = vmatprep.subr.mxu0 0.0
        %2012 = vmatpush1.msra.mxu0 0.0
        %2013 = vmatprep.subr.mxu0 0.0
        %2014 = vmatpush1.msra.mxu0 0.0
        %2015 = vmatprep.subr.mxu0 0.0
        %2016 = vmatpush1.msra.mxu0 0.0
        %2017 = vmatprep.subr.mxu0 0.0
        %2018 = vmatpush1.msra.mxu0 0.0
        %2019 = vmatprep.subr.mxu0 0.0
        %2020 = vmatpush1.msra.mxu0 0.0
        %2021 = vmatprep.subr.mxu0 0.0
        %2022 = vmatpush1.msra.mxu0 0.0
        %2023 = vmatprep.subr.mxu0 0.0
        %2024 = vmatpush1.msra.mxu0 0.0
        %2025 = vmatprep.subr.mxu0 0.0
        %2026 = vmatpush1.msra.mxu0 0.0
        %2027 = vmatprep.subr.mxu0 0.0
        %2028 = vmatpush1.msra.mxu0 0.0
        %2029 = vmatprep.subr.mxu0 0.0
        %2030 = vmatpush1.msra.mxu0 0.0
        %2031 = vmatprep.subr.mxu0 0.0
        %2032 = vmatpush1.msra.mxu0 0.0
        %2033 = vmatprep.subr.mxu0 0.0
        %2034 = vmatpush1.msra.mxu0 0.0
        %2035 = vmatprep.subr.mxu0 0.0
        %2036 = vmatpush1.msra.mxu0 0.0
        %2037 = vmatprep.subr.mxu0 0.0
        %2038 = vmatpush1.msra.mxu0 0.0
        %2039 = vmatprep.subr.mxu0 0.0
        %2040 = vmatpush1.msra.mxu0 0.0
        %2041 = vmatprep.subr.mxu0 0.0
        %2042 = vmatpush1.msra.mxu0 0.0
        %2043 = vmatprep.subr.mxu0 0.0
        %2044 = vmatpush1.msra.mxu0 0.0
        %2045 = vmatprep.subr.mxu0 0.0
        %2046 = vmatpush1.msra.mxu0 0.0
        %2047 = vmatprep.subr.mxu0 0.0
        %2048 = vmatpush1.msra.mxu0 0.0
        %2049 = vmatprep.subr.mxu0 0.0
        %2050 = vmatpush1.msra.mxu0 0.0
        %2051 = vmatprep.subr.mxu0 0.0
        %2052 = vmatpush1.msra.mxu0 0.0
        %2053 = vmatprep.subr.mxu0 0.0
        %2054 = vmatpush1.msra.mxu0 0.0
        %2055 = vmatprep.subr.mxu0 0.0
        %2056 = vmatpush1.msra.mxu0 0.0
        %2057 = vmatprep.mubr.f32.mxu0 0.0
        %2058 = vmatmul.mubr.f32.gmra.mrb[0].mxu0 %v1105
        %v2059 = vpop.f32.mrb[0].mxu0
        %v2060 = vadd.f32 0.0, %v2059
        %v2061 = vpop.f32.mrb[0].mxu0
        %2062 = vmatprep.mubr.f32.mxu0 0.0
        %2063 = vmatmul.mubr.f32.gmra.mrb[0].mxu0 %v1108
        %v2064 = vpop.f32.mrb[0].mxu0
        %v2065 = vadd.f32 0.0, %v2064
        %v2066 = vpop.f32.mrb[0].mxu0
        %2067 = vdwg.mxu0
        %s2068 = scalar_lea.vmem %s5, 256
        %v2069 = vld [vmem:[%s2068] sm:$0xff]
        %v2070 = vld [vmem:[%s2068 + $0x8] sm:$0xff]
        %v2071 = vld [vmem:[%s2068 + $0x10] sm:$0xff]
        %v2072 = vld [vmem:[%s2068 + $0x18] sm:$0xff]
        %v2074 = vsel %vm533, %v2060, 0
        %v2077 = vsel %vm533, %v2065, 0
        %2079 = vmatprep.subr.mxu0 0.0
        %2080 = vmatpush1.msra.mxu0 %v2069
        %2081 = vmatprep.subr.mxu0 0.0
        %2082 = vmatpush1.msra.mxu0 %v2070
        %2083 = vmatprep.subr.mxu0 0.0
        %2084 = vmatpush1.msra.mxu0 %v2071
        %2085 = vmatprep.subr.mxu0 0.0
        %2086 = vmatpush1.msra.mxu0 %v2072
        %2087 = vmatprep.subr.mxu0 0.0
        %2088 = vmatpush1.msra.mxu0 0.0
        %2089 = vmatprep.subr.mxu0 0.0
        %2090 = vmatpush1.msra.mxu0 0.0
        %2091 = vmatprep.subr.mxu0 0.0
        %2092 = vmatpush1.msra.mxu0 0.0
        %2093 = vmatprep.subr.mxu0 0.0
        %2094 = vmatpush1.msra.mxu0 0.0
        %2095 = vmatprep.subr.mxu0 0.0
        %2096 = vmatpush1.msra.mxu0 0.0
        %2097 = vmatprep.subr.mxu0 0.0
        %2098 = vmatpush1.msra.mxu0 0.0
        %2099 = vmatprep.subr.mxu0 0.0
        %2100 = vmatpush1.msra.mxu0 0.0
        %2101 = vmatprep.subr.mxu0 0.0
        %2102 = vmatpush1.msra.mxu0 0.0
        %2103 = vmatprep.subr.mxu0 0.0
        %2104 = vmatpush1.msra.mxu0 0.0
        %2105 = vmatprep.subr.mxu0 0.0
        %2106 = vmatpush1.msra.mxu0 0.0
        %2107 = vmatprep.subr.mxu0 0.0
        %2108 = vmatpush1.msra.mxu0 0.0
        %2109 = vmatprep.subr.mxu0 0.0
        %2110 = vmatpush1.msra.mxu0 0.0
        %2111 = vmatprep.subr.mxu0 0.0
        %2112 = vmatpush1.msra.mxu0 0.0
        %2113 = vmatprep.subr.mxu0 0.0
        %2114 = vmatpush1.msra.mxu0 0.0
        %2115 = vmatprep.subr.mxu0 0.0
        %2116 = vmatpush1.msra.mxu0 0.0
        %2117 = vmatprep.subr.mxu0 0.0
        %2118 = vmatpush1.msra.mxu0 0.0
        %2119 = vmatprep.subr.mxu0 0.0
        %2120 = vmatpush1.msra.mxu0 0.0
        %2121 = vmatprep.subr.mxu0 0.0
        %2122 = vmatpush1.msra.mxu0 0.0
        %2123 = vmatprep.subr.mxu0 0.0
        %2124 = vmatpush1.msra.mxu0 0.0
        %2125 = vmatprep.subr.mxu0 0.0
        %2126 = vmatpush1.msra.mxu0 0.0
        %2127 = vmatprep.subr.mxu0 0.0
        %2128 = vmatpush1.msra.mxu0 0.0
        %2129 = vmatprep.subr.mxu0 0.0
        %2130 = vmatpush1.msra.mxu0 0.0
        %2131 = vmatprep.subr.mxu0 0.0
        %2132 = vmatpush1.msra.mxu0 0.0
        %2133 = vmatprep.subr.mxu0 0.0
        %2134 = vmatpush1.msra.mxu0 0.0
        %2135 = vmatprep.subr.mxu0 0.0
        %2136 = vmatpush1.msra.mxu0 0.0
        %2137 = vmatprep.subr.mxu0 0.0
        %2138 = vmatpush1.msra.mxu0 0.0
        %2139 = vmatprep.subr.mxu0 0.0
        %2140 = vmatpush1.msra.mxu0 0.0
        %2141 = vmatprep.subr.mxu0 0.0
        %2142 = vmatpush1.msra.mxu0 0.0
        %2143 = vmatprep.mubr.f32.mxu0 0.0
        %2144 = vmatmul.mubr.f32.gmra.mrb[0].mxu0 %v2074
        %v2145 = vpop.f32.mrb[0].mxu0
        %v2146 = vadd.f32 0.0, %v2145
        %v2147 = vpop.f32.mrb[0].mxu0
        %2148 = vmatprep.mubr.f32.mxu0 0.0
        %2149 = vmatmul.mubr.f32.gmra.mrb[0].mxu0 %v2077
        %v2150 = vpop.f32.mrb[0].mxu0
        %v2151 = vadd.f32 0.0, %v2150
        %v2152 = vpop.f32.mrb[0].mxu0
        %2153 = vdwg.mxu0
        %v2154 = vadd.f32 %v1991, %v2146
        %v2155 = vadd.f32 %v1992, %v2151
        %2156 = vmatprep.subr.mxu0 0.0
        %2157 = vmatpush1.msra.mxu0 %v1493
        %2158 = vmatprep.subr.mxu0 0.0
        %2159 = vmatpush1.msra.mxu0 %v1494
        %2160 = vmatprep.subr.mxu0 0.0
        %2161 = vmatpush1.msra.mxu0 0.0
        %2162 = vmatprep.subr.mxu0 0.0
        %2163 = vmatpush1.msra.mxu0 0.0
        %2164 = vmatprep.subr.mxu0 0.0
        %2165 = vmatpush1.msra.mxu0 0.0
        %2166 = vmatprep.subr.mxu0 0.0
        %2167 = vmatpush1.msra.mxu0 0.0
        %2168 = vmatprep.subr.mxu0 0.0
        %2169 = vmatpush1.msra.mxu0 0.0
        %2170 = vmatprep.subr.mxu0 0.0
        %2171 = vmatpush1.msra.mxu0 0.0
        %2172 = vmatprep.subr.mxu0 0.0
        %2173 = vmatpush1.msra.mxu0 0.0
        %2174 = vmatprep.subr.mxu0 0.0
        %2175 = vmatpush1.msra.mxu0 0.0
        %2176 = vmatprep.subr.mxu0 0.0
        %2177 = vmatpush1.msra.mxu0 0.0
        %2178 = vmatprep.subr.mxu0 0.0
        %2179 = vmatpush1.msra.mxu0 0.0
        %2180 = vmatprep.subr.mxu0 0.0
        %2181 = vmatpush1.msra.mxu0 0.0
        %2182 = vmatprep.subr.mxu0 0.0
        %2183 = vmatpush1.msra.mxu0 0.0
        %2184 = vmatprep.subr.mxu0 0.0
        %2185 = vmatpush1.msra.mxu0 0.0
        %2186 = vmatprep.subr.mxu0 0.0
        %2187 = vmatpush1.msra.mxu0 0.0
        %2188 = vmatprep.subr.mxu0 0.0
        %2189 = vmatpush1.msra.mxu0 0.0
        %2190 = vmatprep.subr.mxu0 0.0
        %2191 = vmatpush1.msra.mxu0 0.0
        %2192 = vmatprep.subr.mxu0 0.0
        %2193 = vmatpush1.msra.mxu0 0.0
        %2194 = vmatprep.subr.mxu0 0.0
        %2195 = vmatpush1.msra.mxu0 0.0
        %2196 = vmatprep.subr.mxu0 0.0
        %2197 = vmatpush1.msra.mxu0 0.0
        %2198 = vmatprep.subr.mxu0 0.0
        %2199 = vmatpush1.msra.mxu0 0.0
        %2200 = vmatprep.subr.mxu0 0.0
        %2201 = vmatpush1.msra.mxu0 0.0
        %2202 = vmatprep.subr.mxu0 0.0
        %2203 = vmatpush1.msra.mxu0 0.0
        %2204 = vmatprep.subr.mxu0 0.0
        %2205 = vmatpush1.msra.mxu0 0.0
        %2206 = vmatprep.subr.mxu0 0.0
        %2207 = vmatpush1.msra.mxu0 0.0
        %2208 = vmatprep.subr.mxu0 0.0
        %2209 = vmatpush1.msra.mxu0 0.0
        %2210 = vmatprep.subr.mxu0 0.0
        %2211 = vmatpush1.msra.mxu0 0.0
        %2212 = vmatprep.subr.mxu0 0.0
        %2213 = vmatpush1.msra.mxu0 0.0
        %2214 = vmatprep.subr.mxu0 0.0
        %2215 = vmatpush1.msra.mxu0 0.0
        %2216 = vmatprep.subr.mxu0 0.0
        %2217 = vmatpush1.msra.mxu0 0.0
        %2218 = vmatprep.subr.mxu0 0.0
        %2219 = vmatpush1.msra.mxu0 0.0
        %2220 = vmatprep.mubr.f32.mxu0 0.0
        %2221 = vmatmul.mubr.f32.gmra.mrb[0].mxu0 %v1277
        %v2222 = vpop.f32.mrb[0].mxu0
        %v2223 = vadd.f32 0.0, %v2222
        %v2224 = vpop.f32.mrb[0].mxu0
        %2225 = vmatprep.mubr.f32.mxu0 0.0
        %2226 = vmatmul.mubr.f32.gmra.mrb[0].mxu0 %v1280
        %v2227 = vpop.f32.mrb[0].mxu0
        %v2228 = vadd.f32 0.0, %v2227
        %v2229 = vpop.f32.mrb[0].mxu0
        %2230 = vdwg.mxu0
        %s2231 = scalar_lea.vmem %s5, 288
        %v2232 = vld [vmem:[%s2231] sm:$0xff]
        %v2233 = vld [vmem:[%s2231 + $0x8] sm:$0xff]
        %v2234 = vld [vmem:[%s2231 + $0x10] sm:$0xff]
        %v2235 = vld [vmem:[%s2231 + $0x18] sm:$0xff]
        %v2237 = vsel %vm533, %v2223, 0
        %v2240 = vsel %vm533, %v2228, 0
        %2242 = vmatprep.subr.mxu0 0.0
        %2243 = vmatpush1.msra.mxu0 %v2232
        %2244 = vmatprep.subr.mxu0 0.0
        %2245 = vmatpush1.msra.mxu0 %v2233
        %2246 = vmatprep.subr.mxu0 0.0
        %2247 = vmatpush1.msra.mxu0 %v2234
        %2248 = vmatprep.subr.mxu0 0.0
        %2249 = vmatpush1.msra.mxu0 %v2235
        %2250 = vmatprep.subr.mxu0 0.0
        %2251 = vmatpush1.msra.mxu0 0.0
        %2252 = vmatprep.subr.mxu0 0.0
        %2253 = vmatpush1.msra.mxu0 0.0
        %2254 = vmatprep.subr.mxu0 0.0
        %2255 = vmatpush1.msra.mxu0 0.0
        %2256 = vmatprep.subr.mxu0 0.0
        %2257 = vmatpush1.msra.mxu0 0.0
        %2258 = vmatprep.subr.mxu0 0.0
        %2259 = vmatpush1.msra.mxu0 0.0
        %2260 = vmatprep.subr.mxu0 0.0
        %2261 = vmatpush1.msra.mxu0 0.0
        %2262 = vmatprep.subr.mxu0 0.0
        %2263 = vmatpush1.msra.mxu0 0.0
        %2264 = vmatprep.subr.mxu0 0.0
        %2265 = vmatpush1.msra.mxu0 0.0
        %2266 = vmatprep.subr.mxu0 0.0
        %2267 = vmatpush1.msra.mxu0 0.0
        %2268 = vmatprep.subr.mxu0 0.0
        %2269 = vmatpush1.msra.mxu0 0.0
        %2270 = vmatprep.subr.mxu0 0.0
        %2271 = vmatpush1.msra.mxu0 0.0
        %2272 = vmatprep.subr.mxu0 0.0
        %2273 = vmatpush1.msra.mxu0 0.0
        %2274 = vmatprep.subr.mxu0 0.0
        %2275 = vmatpush1.msra.mxu0 0.0
        %2276 = vmatprep.subr.mxu0 0.0
        %2277 = vmatpush1.msra.mxu0 0.0
        %2278 = vmatprep.subr.mxu0 0.0
        %2279 = vmatpush1.msra.mxu0 0.0
        %2280 = vmatprep.subr.mxu0 0.0
        %2281 = vmatpush1.msra.mxu0 0.0
        %2282 = vmatprep.subr.mxu0 0.0
        %2283 = vmatpush1.msra.mxu0 0.0
        %2284 = vmatprep.subr.mxu0 0.0
        %2285 = vmatpush1.msra.mxu0 0.0
        %2286 = vmatprep.subr.mxu0 0.0
        %2287 = vmatpush1.msra.mxu0 0.0
        %2288 = vmatprep.subr.mxu0 0.0
        %2289 = vmatpush1.msra.mxu0 0.0
        %2290 = vmatprep.subr.mxu0 0.0
        %2291 = vmatpush1.msra.mxu0 0.0
        %2292 = vmatprep.subr.mxu0 0.0
        %2293 = vmatpush1.msra.mxu0 0.0
        %2294 = vmatprep.subr.mxu0 0.0
        %2295 = vmatpush1.msra.mxu0 0.0
        %2296 = vmatprep.subr.mxu0 0.0
        %2297 = vmatpush1.msra.mxu0 0.0
        %2298 = vmatprep.subr.mxu0 0.0
        %2299 = vmatpush1.msra.mxu0 0.0
        %2300 = vmatprep.subr.mxu0 0.0
        %2301 = vmatpush1.msra.mxu0 0.0
        %2302 = vmatprep.subr.mxu0 0.0
        %2303 = vmatpush1.msra.mxu0 0.0
        %2304 = vmatprep.subr.mxu0 0.0
        %2305 = vmatpush1.msra.mxu0 0.0
        %2306 = vmatprep.mubr.f32.mxu0 0.0
        %2307 = vmatmul.mubr.f32.gmra.mrb[0].mxu0 %v2237
        %v2308 = vpop.f32.mrb[0].mxu0
        %v2309 = vadd.f32 0.0, %v2308
        %v2310 = vpop.f32.mrb[0].mxu0
        %2311 = vmatprep.mubr.f32.mxu0 0.0
        %2312 = vmatmul.mubr.f32.gmra.mrb[0].mxu0 %v2240
        %v2313 = vpop.f32.mrb[0].mxu0
        %v2314 = vadd.f32 0.0, %v2313
        %v2315 = vpop.f32.mrb[0].mxu0
        %2316 = vdwg.mxu0
        %v2317 = vadd.f32 %v2154, %v2309
        %v2318 = vadd.f32 %v2155, %v2314
        %v2319 = vmax.f32 %v2317, 0.0
        %v2320 = vmax.f32 %v2318, 0.0
        %v2321 = vadd.f32 %v2319, %v1447
        %v2322 = vadd.f32 %v2320, %v1448
        %v2323 = vsel %vm533, %v2321, 0.0
        %2324 = vadd.xlane.f32.xlu0 %v2323
        %v2325 = vpop.xlane.xlu0 %2324
        %v2326 = vsel %vm533, %v2322, 0.0
        %2327 = vadd.xlane.f32.xlu0 %v2326
        %v2328 = vpop.xlane.xlu0 %2327
        %v2329 = vadd.f32 %v2325, %v2328
        %v2330 = vrot.slane %v2329, 4
        %v2331 = vadd.f32 %v2329, %v2330
        %v2332 = vrot.slane %v2331, 2
        %v2333 = vadd.f32 %v2331, %v2332
        %v2334 = vrot.slane %v2333, 1
        %v2335 = vadd.f32 %v2333, %v2334
        %v2336 = vmul.f32 %v2335, 0.001953125
        %v2337 = vsub.f32 %v2321, %v2336
        %v2338 = vsub.f32 %v2322, %v2336
        %v2339 = vmul.f32 %v2337, %v2337
        %v2340 = vmul.f32 %v2338, %v2338
        %v2341 = vsel %vm533, %v2339, 0.0
        %2342 = vadd.xlane.f32.xlu0 %v2341
        %v2343 = vpop.xlane.xlu0 %2342
        %v2344 = vsel %vm533, %v2340, 0.0
        %2345 = vadd.xlane.f32.xlu0 %v2344
        %v2346 = vpop.xlane.xlu0 %2345
        %v2347 = vadd.f32 %v2343, %v2346
        %v2348 = vrot.slane %v2347, 4
        %v2349 = vadd.f32 %v2347, %v2348
        %v2350 = vrot.slane %v2349, 2
        %v2351 = vadd.f32 %v2349, %v2350
        %v2352 = vrot.slane %v2351, 1
        %v2353 = vadd.f32 %v2351, %v2352
        %v2354 = vmul.f32 %v2353, 0.001953125
        %v2355 = vadd.f32 %v2354, 1e-05
        %v2356 = vrsqrt.pop %v2355
        %v2357 = vmul.f32 %v2337, %v2356
        %v2358 = vmul.f32 %v2338, %v2356
        %s2359 = scalar_lea.vmem %s2, 32
        %v2360 = vld [vmem:[%s2359] sm:$0xff]
        %v2361 = vld [vmem:[%s2359 + $0x8] sm:$0xff]
        %v2362 = vmul.f32 %v2357, %v2360
        %v2363 = vmul.f32 %v2358, %v2361
        %s2364 = scalar_lea.vmem %s3, 32
        %v2365 = vld [vmem:[%s2364] sm:$0xff]
        %v2366 = vld [vmem:[%s2364 + $0x8] sm:$0xff]
        %v2367 = vadd.f32 %v2362, %v2365
        %v2368 = vadd.f32 %v2363, %v2366
        %v2369 = vld [vmem:[%s521] sm:$0x1]
        %v2370 = vld [vmem:[%s526] sm:$0xff]
        %v2371 = vld [vmem:[%s526 + $0x8] sm:$0xff]
        %v2372 = vld [vmem:[%s7] sm:$0xff]
        %v2373 = vld [vmem:[%s7 + $0x8] sm:$0xff]
        %v2374 = vld [vmem:[%s7 + $0x10] sm:$0xff]
        %v2375 = vld [vmem:[%s7 + $0x18] sm:$0xff]
        %v2377 = vsel %vm533, %v2367, 0
        %v2380 = vsel %vm533, %v2368, 0
        %2382 = vmatprep.subr.mxu0 0.0
        %2383 = vmatpush1.msra.mxu0 %v2372
        %2384 = vmatprep.subr.mxu0 0.0
        %2385 = vmatpush1.msra.mxu0 %v2373
        %2386 = vmatprep.subr.mxu0 0.0
        %2387 = vmatpush1.msra.mxu0 %v2374
        %2388 = vmatprep.subr.mxu0 0.0
        %2389 = vmatpush1.msra.mxu0 %v2375
        %2390 = vmatprep.subr.mxu0 0.0
        %2391 = vmatpush1.msra.mxu0 0.0
        %2392 = vmatprep.subr.mxu0 0.0
        %2393 = vmatpush1.msra.mxu0 0.0
        %2394 = vmatprep.subr.mxu0 0.0
        %2395 = vmatpush1.msra.mxu0 0.0
        %2396 = vmatprep.subr.mxu0 0.0
        %2397 = vmatpush1.msra.mxu0 0.0
        %2398 = vmatprep.subr.mxu0 0.0
        %2399 = vmatpush1.msra.mxu0 0.0
        %2400 = vmatprep.subr.mxu0 0.0
        %2401 = vmatpush1.msra.mxu0 0.0
        %2402 = vmatprep.subr.mxu0 0.0
        %2403 = vmatpush1.msra.mxu0 0.0
        %2404 = vmatprep.subr.mxu0 0.0
        %2405 = vmatpush1.msra.mxu0 0.0
        %2406 = vmatprep.subr.mxu0 0.0
        %2407 = vmatpush1.msra.mxu0 0.0
        %2408 = vmatprep.subr.mxu0 0.0
        %2409 = vmatpush1.msra.mxu0 0.0
        %2410 = vmatprep.subr.mxu0 0.0
        %2411 = vmatpush1.msra.mxu0 0.0
        %2412 = vmatprep.subr.mxu0 0.0
        %2413 = vmatpush1.msra.mxu0 0.0
        %2414 = vmatprep.subr.mxu0 0.0
        %2415 = vmatpush1.msra.mxu0 0.0
        %2416 = vmatprep.subr.mxu0 0.0
        %2417 = vmatpush1.msra.mxu0 0.0
        %2418 = vmatprep.subr.mxu0 0.0
        %2419 = vmatpush1.msra.mxu0 0.0
        %2420 = vmatprep.subr.mxu0 0.0
        %2421 = vmatpush1.msra.mxu0 0.0
        %2422 = vmatprep.subr.mxu0 0.0
        %2423 = vmatpush1.msra.mxu0 0.0
        %2424 = vmatprep.subr.mxu0 0.0
        %2425 = vmatpush1.msra.mxu0 0.0
        %2426 = vmatprep.subr.mxu0 0.0
        %2427 = vmatpush1.msra.mxu0 0.0
        %2428 = vmatprep.subr.mxu0 0.0
        %2429 = vmatpush1.msra.mxu0 0.0
        %2430 = vmatprep.subr.mxu0 0.0
        %2431 = vmatpush1.msra.mxu0 0.0
        %2432 = vmatprep.subr.mxu0 0.0
        %2433 = vmatpush1.msra.mxu0 0.0
        %2434 = vmatprep.subr.mxu0 0.0
        %2435 = vmatpush1.msra.mxu0 0.0
        %2436 = vmatprep.subr.mxu0 0.0
        %2437 = vmatpush1.msra.mxu0 0.0
        %2438 = vmatprep.subr.mxu0 0.0
        %2439 = vmatpush1.msra.mxu0 0.0
        %2440 = vmatprep.subr.mxu0 0.0
        %2441 = vmatpush1.msra.mxu0 0.0
        %2442 = vmatprep.subr.mxu0 0.0
        %2443 = vmatpush1.msra.mxu0 0.0
        %2444 = vmatprep.subr.mxu0 0.0
        %2445 = vmatpush1.msra.mxu0 0.0
        %2446 = vmatprep.mubr.f32.mxu0 0.0
        %2447 = vmatmul.mubr.f32.gmra.mrb[0].mxu0 %v2377
        %v2448 = vpop.f32.mrb[0].mxu0
        %v2449 = vadd.f32 0.0, %v2448
        %v2450 = vpop.f32.mrb[0].mxu0
        %2451 = vmatprep.mubr.f32.mxu0 0.0
        %2452 = vmatmul.mubr.f32.gmra.mrb[0].mxu0 %v2380
        %v2453 = vpop.f32.mrb[0].mxu0
        %v2454 = vadd.f32 0.0, %v2453
        %v2455 = vpop.f32.mrb[0].mxu0
        %2456 = vdwg.mxu0
        %v2457 = vld [vmem:[%s8] sm:$0xff]
        %v2458 = vld [vmem:[%s8 + $0x8] sm:$0xff]
        %v2459 = vld [vmem:[%s8 + $0x10] sm:$0xff]
        %v2460 = vld [vmem:[%s8 + $0x18] sm:$0xff]
        %2461 = vmatprep.subr.mxu0 0.0
        %2462 = vmatpush1.msra.mxu0 %v2457
        %2463 = vmatprep.subr.mxu0 0.0
        %2464 = vmatpush1.msra.mxu0 %v2458
        %2465 = vmatprep.subr.mxu0 0.0
        %2466 = vmatpush1.msra.mxu0 %v2459
        %2467 = vmatprep.subr.mxu0 0.0
        %2468 = vmatpush1.msra.mxu0 %v2460
        %2469 = vmatprep.subr.mxu0 0.0
        %2470 = vmatpush1.msra.mxu0 0.0
        %2471 = vmatprep.subr.mxu0 0.0
        %2472 = vmatpush1.msra.mxu0 0.0
        %2473 = vmatprep.subr.mxu0 0.0
        %2474 = vmatpush1.msra.mxu0 0.0
        %2475 = vmatprep.subr.mxu0 0.0
        %2476 = vmatpush1.msra.mxu0 0.0
        %2477 = vmatprep.subr.mxu0 0.0
        %2478 = vmatpush1.msra.mxu0 0.0
        %2479 = vmatprep.subr.mxu0 0.0
        %2480 = vmatpush1.msra.mxu0 0.0
        %2481 = vmatprep.subr.mxu0 0.0
        %2482 = vmatpush1.msra.mxu0 0.0
        %2483 = vmatprep.subr.mxu0 0.0
        %2484 = vmatpush1.msra.mxu0 0.0
        %2485 = vmatprep.subr.mxu0 0.0
        %2486 = vmatpush1.msra.mxu0 0.0
        %2487 = vmatprep.subr.mxu0 0.0
        %2488 = vmatpush1.msra.mxu0 0.0
        %2489 = vmatprep.subr.mxu0 0.0
        %2490 = vmatpush1.msra.mxu0 0.0
        %2491 = vmatprep.subr.mxu0 0.0
        %2492 = vmatpush1.msra.mxu0 0.0
        %2493 = vmatprep.subr.mxu0 0.0
        %2494 = vmatpush1.msra.mxu0 0.0
        %2495 = vmatprep.subr.mxu0 0.0
        %2496 = vmatpush1.msra.mxu0 0.0
        %2497 = vmatprep.subr.mxu0 0.0
        %2498 = vmatpush1.msra.mxu0 0.0
        %2499 = vmatprep.subr.mxu0 0.0
        %2500 = vmatpush1.msra.mxu0 0.0
        %2501 = vmatprep.subr.mxu0 0.0
        %2502 = vmatpush1.msra.mxu0 0.0
        %2503 = vmatprep.subr.mxu0 0.0
        %2504 = vmatpush1.msra.mxu0 0.0
        %2505 = vmatprep.subr.mxu0 0.0
        %2506 = vmatpush1.msra.mxu0 0.0
        %2507 = vmatprep.subr.mxu0 0.0
        %2508 = vmatpush1.msra.mxu0 0.0
        %2509 = vmatprep.subr.mxu0 0.0
        %2510 = vmatpush1.msra.mxu0 0.0
        %2511 = vmatprep.subr.mxu0 0.0
        %2512 = vmatpush1.msra.mxu0 0.0
        %2513 = vmatprep.subr.mxu0 0.0
        %2514 = vmatpush1.msra.mxu0 0.0
        %2515 = vmatprep.subr.mxu0 0.0
        %2516 = vmatpush1.msra.mxu0 0.0
        %2517 = vmatprep.subr.mxu0 0.0
        %2518 = vmatpush1.msra.mxu0 0.0
        %2519 = vmatprep.subr.mxu0 0.0
        %2520 = vmatpush1.msra.mxu0 0.0
        %2521 = vmatprep.subr.mxu0 0.0
        %2522 = vmatpush1.msra.mxu0 0.0
        %2523 = vmatprep.subr.mxu0 0.0
        %2524 = vmatpush1.msra.mxu0 0.0
        %2525 = vmatprep.mubr.f32.mxu0 0.0
        %2526 = vmatmul.mubr.f32.gmra.mrb[0].mxu0 %v2377
        %v2527 = vpop.f32.mrb[0].mxu0
        %v2528 = vadd.f32 0.0, %v2527
        %v2529 = vpop.f32.mrb[0].mxu0
        %2530 = vmatprep.mubr.f32.mxu0 0.0
        %2531 = vmatmul.mubr.f32.gmra.mrb[0].mxu0 %v2380
        %v2532 = vpop.f32.mrb[0].mxu0
        %v2533 = vadd.f32 0.0, %v2532
        %v2534 = vpop.f32.mrb[0].mxu0
        %2535 = vdwg.mxu0
        %v2536 = vld [vmem:[%s9] sm:$0xff]
        %v2537 = vld [vmem:[%s9 + $0x8] sm:$0xff]
        %v2538 = vld [vmem:[%s9 + $0x10] sm:$0xff]
        %v2539 = vld [vmem:[%s9 + $0x18] sm:$0xff]
        %2540 = vmatprep.subr.mxu0 0.0
        %2541 = vmatpush1.msra.mxu0 %v2536
        %2542 = vmatprep.subr.mxu0 0.0
        %2543 = vmatpush1.msra.mxu0 %v2537
        %2544 = vmatprep.subr.mxu0 0.0
        %2545 = vmatpush1.msra.mxu0 %v2538
        %2546 = vmatprep.subr.mxu0 0.0
        %2547 = vmatpush1.msra.mxu0 %v2539
        %2548 = vmatprep.subr.mxu0 0.0
        %2549 = vmatpush1.msra.mxu0 0.0
        %2550 = vmatprep.subr.mxu0 0.0
        %2551 = vmatpush1.msra.mxu0 0.0
        %2552 = vmatprep.subr.mxu0 0.0
        %2553 = vmatpush1.msra.mxu0 0.0
        %2554 = vmatprep.subr.mxu0 0.0
        %2555 = vmatpush1.msra.mxu0 0.0
        %2556 = vmatprep.subr.mxu0 0.0
        %2557 = vmatpush1.msra.mxu0 0.0
        %2558 = vmatprep.subr.mxu0 0.0
        %2559 = vmatpush1.msra.mxu0 0.0
        %2560 = vmatprep.subr.mxu0 0.0
        %2561 = vmatpush1.msra.mxu0 0.0
        %2562 = vmatprep.subr.mxu0 0.0
        %2563 = vmatpush1.msra.mxu0 0.0
        %2564 = vmatprep.subr.mxu0 0.0
        %2565 = vmatpush1.msra.mxu0 0.0
        %2566 = vmatprep.subr.mxu0 0.0
        %2567 = vmatpush1.msra.mxu0 0.0
        %2568 = vmatprep.subr.mxu0 0.0
        %2569 = vmatpush1.msra.mxu0 0.0
        %2570 = vmatprep.subr.mxu0 0.0
        %2571 = vmatpush1.msra.mxu0 0.0
        %2572 = vmatprep.subr.mxu0 0.0
        %2573 = vmatpush1.msra.mxu0 0.0
        %2574 = vmatprep.subr.mxu0 0.0
        %2575 = vmatpush1.msra.mxu0 0.0
        %2576 = vmatprep.subr.mxu0 0.0
        %2577 = vmatpush1.msra.mxu0 0.0
        %2578 = vmatprep.subr.mxu0 0.0
        %2579 = vmatpush1.msra.mxu0 0.0
        %2580 = vmatprep.subr.mxu0 0.0
        %2581 = vmatpush1.msra.mxu0 0.0
        %2582 = vmatprep.subr.mxu0 0.0
        %2583 = vmatpush1.msra.mxu0 0.0
        %2584 = vmatprep.subr.mxu0 0.0
        %2585 = vmatpush1.msra.mxu0 0.0
        %2586 = vmatprep.subr.mxu0 0.0
        %2587 = vmatpush1.msra.mxu0 0.0
        %2588 = vmatprep.subr.mxu0 0.0
        %2589 = vmatpush1.msra.mxu0 0.0
        %2590 = vmatprep.subr.mxu0 0.0
        %2591 = vmatpush1.msra.mxu0 0.0
        %2592 = vmatprep.subr.mxu0 0.0
        %2593 = vmatpush1.msra.mxu0 0.0
        %2594 = vmatprep.subr.mxu0 0.0
        %2595 = vmatpush1.msra.mxu0 0.0
        %2596 = vmatprep.subr.mxu0 0.0
        %2597 = vmatpush1.msra.mxu0 0.0
        %2598 = vmatprep.subr.mxu0 0.0
        %2599 = vmatpush1.msra.mxu0 0.0
        %2600 = vmatprep.subr.mxu0 0.0
        %2601 = vmatpush1.msra.mxu0 0.0
        %2602 = vmatprep.subr.mxu0 0.0
        %2603 = vmatpush1.msra.mxu0 0.0
        %2604 = vmatprep.mubr.f32.mxu0 0.0
        %2605 = vmatmul.mubr.f32.gmra.mrb[0].mxu0 %v2377
        %v2606 = vpop.f32.mrb[0].mxu0
        %v2607 = vadd.f32 0.0, %v2606
        %v2608 = vpop.f32.mrb[0].mxu0
        %2609 = vmatprep.mubr.f32.mxu0 0.0
        %2610 = vmatmul.mubr.f32.gmra.mrb[0].mxu0 %v2380
        %v2611 = vpop.f32.mrb[0].mxu0
        %v2612 = vadd.f32 0.0, %v2611
        %v2613 = vpop.f32.mrb[0].mxu0
        %2614 = vdwg.mxu0
        %vm2615 = vcmask 64512
        %v2617 = vsel %vm2615, %v2449, 0
        %v2620 = vsel %vm2615, %v2454, 0
        %v2623 = vsel %vm2615, %v2528, 0
        %v2626 = vsel %vm2615, %v2533, 0
        %2628 = vmatprep.subr.mxu0 0.0
        %2629 = vmatpush1.xpose.msra.mxu0 %v2623
        %2630 = vmatprep.subr.mxu0 0.0
        %2631 = vmatpush1.xpose.msra.mxu0 %v2626
        %2632 = vmatprep.subr.mxu0 0.0
        %2633 = vmatpush1.xpose.msra.mxu0 0.0
        %2634 = vmatprep.subr.mxu0 0.0
        %2635 = vmatpush1.xpose.msra.mxu0 0.0
        %2636 = vmatprep.subr.mxu0 0.0
        %2637 = vmatpush1.xpose.msra.mxu0 0.0
        %2638 = vmatprep.subr.mxu0 0.0
        %2639 = vmatpush1.xpose.msra.mxu0 0.0
        %2640 = vmatprep.subr.mxu0 0.0
        %2641 = vmatpush1.xpose.msra.mxu0 0.0
        %2642 = vmatprep.subr.mxu0 0.0
        %2643 = vmatpush1.xpose.msra.mxu0 0.0
        %2644 = vmatprep.subr.mxu0 0.0
        %2645 = vmatpush1.xpose.msra.mxu0 0.0
        %2646 = vmatprep.subr.mxu0 0.0
        %2647 = vmatpush1.xpose.msra.mxu0 0.0
        %2648 = vmatprep.subr.mxu0 0.0
        %2649 = vmatpush1.xpose.msra.mxu0 0.0
        %2650 = vmatprep.subr.mxu0 0.0
        %2651 = vmatpush1.xpose.msra.mxu0 0.0
        %2652 = vmatprep.subr.mxu0 0.0
        %2653 = vmatpush1.xpose.msra.mxu0 0.0
        %2654 = vmatprep.subr.mxu0 0.0
        %2655 = vmatpush1.xpose.msra.mxu0 0.0
        %2656 = vmatprep.subr.mxu0 0.0
        %2657 = vmatpush1.xpose.msra.mxu0 0.0
        %2658 = vmatprep.subr.mxu0 0.0
        %2659 = vmatpush1.xpose.msra.mxu0 0.0
        %2660 = vmatprep.subr.mxu0 0.0
        %2661 = vmatpush1.xpose.msra.mxu0 0.0
        %2662 = vmatprep.subr.mxu0 0.0
        %2663 = vmatpush1.xpose.msra.mxu0 0.0
        %2664 = vmatprep.subr.mxu0 0.0
        %2665 = vmatpush1.xpose.msra.mxu0 0.0
        %2666 = vmatprep.subr.mxu0 0.0
        %2667 = vmatpush1.xpose.msra.mxu0 0.0
        %2668 = vmatprep.subr.mxu0 0.0
        %2669 = vmatpush1.xpose.msra.mxu0 0.0
        %2670 = vmatprep.subr.mxu0 0.0
        %2671 = vmatpush1.xpose.msra.mxu0 0.0
        %2672 = vmatprep.subr.mxu0 0.0
        %2673 = vmatpush1.xpose.msra.mxu0 0.0
        %2674 = vmatprep.subr.mxu0 0.0
        %2675 = vmatpush1.xpose.msra.mxu0 0.0
        %2676 = vmatprep.subr.mxu0 0.0
        %2677 = vmatpush1.xpose.msra.mxu0 0.0
        %2678 = vmatprep.subr.mxu0 0.0
        %2679 = vmatpush1.xpose.msra.mxu0 0.0
        %2680 = vmatprep.subr.mxu0 0.0
        %2681 = vmatpush1.xpose.msra.mxu0 0.0
        %2682 = vmatprep.subr.mxu0 0.0
        %2683 = vmatpush1.xpose.msra.mxu0 0.0
        %2684 = vmatprep.subr.mxu0 0.0
        %2685 = vmatpush1.xpose.msra.mxu0 0.0
        %2686 = vmatprep.subr.mxu0 0.0
        %2687 = vmatpush1.xpose.msra.mxu0 0.0
        %2688 = vmatprep.subr.mxu0 0.0
        %2689 = vmatpush1.xpose.msra.mxu0 0.0
        %2690 = vmatprep.subr.mxu0 0.0
        %2691 = vmatpush1.xpose.msra.mxu0 0.0
        %2692 = vmatprep.mubr.f32.mxu0 0.0
        %2693 = vmatmul.mubr.f32.gmra.mrb[0].mxu0 %v2617
        %v2694 = vpop.f32.mrb[0].mxu0
        %v2695 = vadd.f32 0.0, %v2694
        %v2696 = vpop.f32.mrb[0].mxu0
        %2697 = vmatprep.mubr.f32.mxu0 0.0
        %2698 = vmatmul.mubr.f32.gmra.mrb[0].mxu0 %v2620
        %v2699 = vpop.f32.mrb[0].mxu0
        %v2700 = vadd.f32 0.0, %v2699
        %v2701 = vpop.f32.mrb[0].mxu0
        %2702 = vdwg.mxu0
        %v2703 = vmul.f32 %v2695, 0.35355338
        %v2704 = vmul.f32 %v2700, 0.35355338
        %v2706 = vlaneseq
        %v2707 = vshrl.u32 %v2706, 7
        %v2708 = vsub.s32 0, %v2707
        %v2709 = vrot.slane %v2369, %v2708
        %v2711 = vmul.f32 %v2703, %v2709
        %v2712 = vmul.f32 %v2704, %v2709
        %v2713 = vsub.f32 1.0, %v2369
        %v2714 = vmul.f32 %v2713, -1e+30
        %v2716 = vlaneseq
        %v2717 = vshrl.u32 %v2716, 7
        %v2718 = vsub.s32 0, %v2717
        %v2719 = vrot.slane %v2714, %v2718
        %v2721 = vadd.f32 %v2711, %v2719
        %v2722 = vadd.f32 %v2712, %v2719
        %v2723 = vsel %vm588, %v2721, -inf
        %2724 = vmax.xlane.f32.xlu0 %v2723
        %v2725 = vpop.xlane.xlu0 %2724
        %v2726 = vsel %vm588, %v2722, -inf
        %2727 = vmax.xlane.f32.xlu0 %v2726
        %v2728 = vpop.xlane.xlu0 %2727
        %v2729 = vsub.f32 %v2721, %v2725
        %v2730 = vsub.f32 %v2722, %v2728
        %v2731 = vmul.f32 %v2729, 1.442695
        %v2732 = vpow.pop %v2731
        %v2733 = vmul.f32 %v2730, 1.442695
        %v2734 = vpow.pop %v2733
        %v2735 = vsel %vm588, %v2732, 0.0
        %2736 = vadd.xlane.f32.xlu0 %v2735
        %v2737 = vpop.xlane.xlu0 %2736
        %v2738 = vsel %vm588, %v2734, 0.0
        %2739 = vadd.xlane.f32.xlu0 %v2738
        %v2740 = vpop.xlane.xlu0 %2739
        %v2741 = vrcp.pop %v2737
        %v2742 = vmul.f32 %v2732, %v2741
        %v2743 = vrcp.pop %v2740
        %v2744 = vmul.f32 %v2734, %v2743
        %2746 = vset.pattern.permute.xlu0 0
        %2747 = vperm.xlu0 %2746, %v2370
        %v2748 = vpop.permute.xlu0 %2747
        %2751 = vset.pattern.permute.xlu0 0
        %2752 = vperm.xlu0 %2751, %v2371
        %v2753 = vpop.permute.xlu0 %2752
        %v2755 = vmul.f32 %v2742, %v2748
        %v2756 = vmul.f32 %v2744, %v2753
        %v2758 = vsel %vm588, %v2755, 0
        %v2761 = vsel %vm588, %v2756, 0
        %2763 = vmatprep.subr.mxu0 0.0
        %2764 = vmatpush1.msra.mxu0 %v2607
        %2765 = vmatprep.subr.mxu0 0.0
        %2766 = vmatpush1.msra.mxu0 %v2612
        %2767 = vmatprep.subr.mxu0 0.0
        %2768 = vmatpush1.msra.mxu0 0.0
        %2769 = vmatprep.subr.mxu0 0.0
        %2770 = vmatpush1.msra.mxu0 0.0
        %2771 = vmatprep.subr.mxu0 0.0
        %2772 = vmatpush1.msra.mxu0 0.0
        %2773 = vmatprep.subr.mxu0 0.0
        %2774 = vmatpush1.msra.mxu0 0.0
        %2775 = vmatprep.subr.mxu0 0.0
        %2776 = vmatpush1.msra.mxu0 0.0
        %2777 = vmatprep.subr.mxu0 0.0
        %2778 = vmatpush1.msra.mxu0 0.0
        %2779 = vmatprep.subr.mxu0 0.0
        %2780 = vmatpush1.msra.mxu0 0.0
        %2781 = vmatprep.subr.mxu0 0.0
        %2782 = vmatpush1.msra.mxu0 0.0
        %2783 = vmatprep.subr.mxu0 0.0
        %2784 = vmatpush1.msra.mxu0 0.0
        %2785 = vmatprep.subr.mxu0 0.0
        %2786 = vmatpush1.msra.mxu0 0.0
        %2787 = vmatprep.subr.mxu0 0.0
        %2788 = vmatpush1.msra.mxu0 0.0
        %2789 = vmatprep.subr.mxu0 0.0
        %2790 = vmatpush1.msra.mxu0 0.0
        %2791 = vmatprep.subr.mxu0 0.0
        %2792 = vmatpush1.msra.mxu0 0.0
        %2793 = vmatprep.subr.mxu0 0.0
        %2794 = vmatpush1.msra.mxu0 0.0
        %2795 = vmatprep.subr.mxu0 0.0
        %2796 = vmatpush1.msra.mxu0 0.0
        %2797 = vmatprep.subr.mxu0 0.0
        %2798 = vmatpush1.msra.mxu0 0.0
        %2799 = vmatprep.subr.mxu0 0.0
        %2800 = vmatpush1.msra.mxu0 0.0
        %2801 = vmatprep.subr.mxu0 0.0
        %2802 = vmatpush1.msra.mxu0 0.0
        %2803 = vmatprep.subr.mxu0 0.0
        %2804 = vmatpush1.msra.mxu0 0.0
        %2805 = vmatprep.subr.mxu0 0.0
        %2806 = vmatpush1.msra.mxu0 0.0
        %2807 = vmatprep.subr.mxu0 0.0
        %2808 = vmatpush1.msra.mxu0 0.0
        %2809 = vmatprep.subr.mxu0 0.0
        %2810 = vmatpush1.msra.mxu0 0.0
        %2811 = vmatprep.subr.mxu0 0.0
        %2812 = vmatpush1.msra.mxu0 0.0
        %2813 = vmatprep.subr.mxu0 0.0
        %2814 = vmatpush1.msra.mxu0 0.0
        %2815 = vmatprep.subr.mxu0 0.0
        %2816 = vmatpush1.msra.mxu0 0.0
        %2817 = vmatprep.subr.mxu0 0.0
        %2818 = vmatpush1.msra.mxu0 0.0
        %2819 = vmatprep.subr.mxu0 0.0
        %2820 = vmatpush1.msra.mxu0 0.0
        %2821 = vmatprep.subr.mxu0 0.0
        %2822 = vmatpush1.msra.mxu0 0.0
        %2823 = vmatprep.subr.mxu0 0.0
        %2824 = vmatpush1.msra.mxu0 0.0
        %2825 = vmatprep.subr.mxu0 0.0
        %2826 = vmatpush1.msra.mxu0 0.0
        %2827 = vmatprep.mubr.f32.mxu0 0.0
        %2828 = vmatmul.mubr.f32.gmra.mrb[0].mxu0 %v2758
        %v2829 = vpop.f32.mrb[0].mxu0
        %v2830 = vadd.f32 0.0, %v2829
        %v2831 = vpop.f32.mrb[0].mxu0
        %2832 = vmatprep.mubr.f32.mxu0 0.0
        %2833 = vmatmul.mubr.f32.gmra.mrb[0].mxu0 %v2761
        %v2834 = vpop.f32.mrb[0].mxu0
        %v2835 = vadd.f32 0.0, %v2834
        %v2836 = vpop.f32.mrb[0].mxu0
        %2837 = vdwg.mxu0
        %v2838 = vld [vmem:[%s10] sm:$0xff]
        %s2839 = scalar_lea.vmem %s7, 32
        %v2840 = vld [vmem:[%s2839] sm:$0xff]
        %v2841 = vld [vmem:[%s2839 + $0x8] sm:$0xff]
        %v2842 = vld [vmem:[%s2839 + $0x10] sm:$0xff]
        %v2843 = vld [vmem:[%s2839 + $0x18] sm:$0xff]
        %2844 = vmatprep.subr.mxu0 0.0
        %2845 = vmatpush1.msra.mxu0 %v2840
        %2846 = vmatprep.subr.mxu0 0.0
        %2847 = vmatpush1.msra.mxu0 %v2841
        %2848 = vmatprep.subr.mxu0 0.0
        %2849 = vmatpush1.msra.mxu0 %v2842
        %2850 = vmatprep.subr.mxu0 0.0
        %2851 = vmatpush1.msra.mxu0 %v2843
        %2852 = vmatprep.subr.mxu0 0.0
        %2853 = vmatpush1.msra.mxu0 0.0
        %2854 = vmatprep.subr.mxu0 0.0
        %2855 = vmatpush1.msra.mxu0 0.0
        %2856 = vmatprep.subr.mxu0 0.0
        %2857 = vmatpush1.msra.mxu0 0.0
        %2858 = vmatprep.subr.mxu0 0.0
        %2859 = vmatpush1.msra.mxu0 0.0
        %2860 = vmatprep.subr.mxu0 0.0
        %2861 = vmatpush1.msra.mxu0 0.0
        %2862 = vmatprep.subr.mxu0 0.0
        %2863 = vmatpush1.msra.mxu0 0.0
        %2864 = vmatprep.subr.mxu0 0.0
        %2865 = vmatpush1.msra.mxu0 0.0
        %2866 = vmatprep.subr.mxu0 0.0
        %2867 = vmatpush1.msra.mxu0 0.0
        %2868 = vmatprep.subr.mxu0 0.0
        %2869 = vmatpush1.msra.mxu0 0.0
        %2870 = vmatprep.subr.mxu0 0.0
        %2871 = vmatpush1.msra.mxu0 0.0
        %2872 = vmatprep.subr.mxu0 0.0
        %2873 = vmatpush1.msra.mxu0 0.0
        %2874 = vmatprep.subr.mxu0 0.0
        %2875 = vmatpush1.msra.mxu0 0.0
        %2876 = vmatprep.subr.mxu0 0.0
        %2877 = vmatpush1.msra.mxu0 0.0
        %2878 = vmatprep.subr.mxu0 0.0
        %2879 = vmatpush1.msra.mxu0 0.0
        %2880 = vmatprep.subr.mxu0 0.0
        %2881 = vmatpush1.msra.mxu0 0.0
        %2882 = vmatprep.subr.mxu0 0.0
        %2883 = vmatpush1.msra.mxu0 0.0
        %2884 = vmatprep.subr.mxu0 0.0
        %2885 = vmatpush1.msra.mxu0 0.0
        %2886 = vmatprep.subr.mxu0 0.0
        %2887 = vmatpush1.msra.mxu0 0.0
        %2888 = vmatprep.subr.mxu0 0.0
        %2889 = vmatpush1.msra.mxu0 0.0
        %2890 = vmatprep.subr.mxu0 0.0
        %2891 = vmatpush1.msra.mxu0 0.0
        %2892 = vmatprep.subr.mxu0 0.0
        %2893 = vmatpush1.msra.mxu0 0.0
        %2894 = vmatprep.subr.mxu0 0.0
        %2895 = vmatpush1.msra.mxu0 0.0
        %2896 = vmatprep.subr.mxu0 0.0
        %2897 = vmatpush1.msra.mxu0 0.0
        %2898 = vmatprep.subr.mxu0 0.0
        %2899 = vmatpush1.msra.mxu0 0.0
        %2900 = vmatprep.subr.mxu0 0.0
        %2901 = vmatpush1.msra.mxu0 0.0
        %2902 = vmatprep.subr.mxu0 0.0
        %2903 = vmatpush1.msra.mxu0 0.0
        %2904 = vmatprep.subr.mxu0 0.0
        %2905 = vmatpush1.msra.mxu0 0.0
        %2906 = vmatprep.subr.mxu0 0.0
        %2907 = vmatpush1.msra.mxu0 0.0
        %2908 = vmatprep.mubr.f32.mxu0 0.0
        %2909 = vmatmul.mubr.f32.gmra.mrb[0].mxu0 %v2377
        %v2910 = vpop.f32.mrb[0].mxu0
        %v2911 = vadd.f32 0.0, %v2910
        %v2912 = vpop.f32.mrb[0].mxu0
        %2913 = vmatprep.mubr.f32.mxu0 0.0
        %2914 = vmatmul.mubr.f32.gmra.mrb[0].mxu0 %v2380
        %v2915 = vpop.f32.mrb[0].mxu0
        %v2916 = vadd.f32 0.0, %v2915
        %v2917 = vpop.f32.mrb[0].mxu0
        %2918 = vdwg.mxu0
        %s2919 = scalar_lea.vmem %s8, 32
        %v2920 = vld [vmem:[%s2919] sm:$0xff]
        %v2921 = vld [vmem:[%s2919 + $0x8] sm:$0xff]
        %v2922 = vld [vmem:[%s2919 + $0x10] sm:$0xff]
        %v2923 = vld [vmem:[%s2919 + $0x18] sm:$0xff]
        %2924 = vmatprep.subr.mxu0 0.0
        %2925 = vmatpush1.msra.mxu0 %v2920
        %2926 = vmatprep.subr.mxu0 0.0
        %2927 = vmatpush1.msra.mxu0 %v2921
        %2928 = vmatprep.subr.mxu0 0.0
        %2929 = vmatpush1.msra.mxu0 %v2922
        %2930 = vmatprep.subr.mxu0 0.0
        %2931 = vmatpush1.msra.mxu0 %v2923
        %2932 = vmatprep.subr.mxu0 0.0
        %2933 = vmatpush1.msra.mxu0 0.0
        %2934 = vmatprep.subr.mxu0 0.0
        %2935 = vmatpush1.msra.mxu0 0.0
        %2936 = vmatprep.subr.mxu0 0.0
        %2937 = vmatpush1.msra.mxu0 0.0
        %2938 = vmatprep.subr.mxu0 0.0
        %2939 = vmatpush1.msra.mxu0 0.0
        %2940 = vmatprep.subr.mxu0 0.0
        %2941 = vmatpush1.msra.mxu0 0.0
        %2942 = vmatprep.subr.mxu0 0.0
        %2943 = vmatpush1.msra.mxu0 0.0
        %2944 = vmatprep.subr.mxu0 0.0
        %2945 = vmatpush1.msra.mxu0 0.0
        %2946 = vmatprep.subr.mxu0 0.0
        %2947 = vmatpush1.msra.mxu0 0.0
        %2948 = vmatprep.subr.mxu0 0.0
        %2949 = vmatpush1.msra.mxu0 0.0
        %2950 = vmatprep.subr.mxu0 0.0
        %2951 = vmatpush1.msra.mxu0 0.0
        %2952 = vmatprep.subr.mxu0 0.0
        %2953 = vmatpush1.msra.mxu0 0.0
        %2954 = vmatprep.subr.mxu0 0.0
        %2955 = vmatpush1.msra.mxu0 0.0
        %2956 = vmatprep.subr.mxu0 0.0
        %2957 = vmatpush1.msra.mxu0 0.0
        %2958 = vmatprep.subr.mxu0 0.0
        %2959 = vmatpush1.msra.mxu0 0.0
        %2960 = vmatprep.subr.mxu0 0.0
        %2961 = vmatpush1.msra.mxu0 0.0
        %2962 = vmatprep.subr.mxu0 0.0
        %2963 = vmatpush1.msra.mxu0 0.0
        %2964 = vmatprep.subr.mxu0 0.0
        %2965 = vmatpush1.msra.mxu0 0.0
        %2966 = vmatprep.subr.mxu0 0.0
        %2967 = vmatpush1.msra.mxu0 0.0
        %2968 = vmatprep.subr.mxu0 0.0
        %2969 = vmatpush1.msra.mxu0 0.0
        %2970 = vmatprep.subr.mxu0 0.0
        %2971 = vmatpush1.msra.mxu0 0.0
        %2972 = vmatprep.subr.mxu0 0.0
        %2973 = vmatpush1.msra.mxu0 0.0
        %2974 = vmatprep.subr.mxu0 0.0
        %2975 = vmatpush1.msra.mxu0 0.0
        %2976 = vmatprep.subr.mxu0 0.0
        %2977 = vmatpush1.msra.mxu0 0.0
        %2978 = vmatprep.subr.mxu0 0.0
        %2979 = vmatpush1.msra.mxu0 0.0
        %2980 = vmatprep.subr.mxu0 0.0
        %2981 = vmatpush1.msra.mxu0 0.0
        %2982 = vmatprep.subr.mxu0 0.0
        %2983 = vmatpush1.msra.mxu0 0.0
        %2984 = vmatprep.subr.mxu0 0.0
        %2985 = vmatpush1.msra.mxu0 0.0
        %2986 = vmatprep.subr.mxu0 0.0
        %2987 = vmatpush1.msra.mxu0 0.0
        %2988 = vmatprep.mubr.f32.mxu0 0.0
        %2989 = vmatmul.mubr.f32.gmra.mrb[0].mxu0 %v2377
        %v2990 = vpop.f32.mrb[0].mxu0
        %v2991 = vadd.f32 0.0, %v2990
        %v2992 = vpop.f32.mrb[0].mxu0
        %2993 = vmatprep.mubr.f32.mxu0 0.0
        %2994 = vmatmul.mubr.f32.gmra.mrb[0].mxu0 %v2380
        %v2995 = vpop.f32.mrb[0].mxu0
        %v2996 = vadd.f32 0.0, %v2995
        %v2997 = vpop.f32.mrb[0].mxu0
        %2998 = vdwg.mxu0
        %s2999 = scalar_lea.vmem %s9, 32
        %v3000 = vld [vmem:[%s2999] sm:$0xff]
        %v3001 = vld [vmem:[%s2999 + $0x8] sm:$0xff]
        %v3002 = vld [vmem:[%s2999 + $0x10] sm:$0xff]
        %v3003 = vld [vmem:[%s2999 + $0x18] sm:$0xff]
        %3004 = vmatprep.subr.mxu0 0.0
        %3005 = vmatpush1.msra.mxu0 %v3000
        %3006 = vmatprep.subr.mxu0 0.0
        %3007 = vmatpush1.msra.mxu0 %v3001
        %3008 = vmatprep.subr.mxu0 0.0
        %3009 = vmatpush1.msra.mxu0 %v3002
        %3010 = vmatprep.subr.mxu0 0.0
        %3011 = vmatpush1.msra.mxu0 %v3003
        %3012 = vmatprep.subr.mxu0 0.0
        %3013 = vmatpush1.msra.mxu0 0.0
        %3014 = vmatprep.subr.mxu0 0.0
        %3015 = vmatpush1.msra.mxu0 0.0
        %3016 = vmatprep.subr.mxu0 0.0
        %3017 = vmatpush1.msra.mxu0 0.0
        %3018 = vmatprep.subr.mxu0 0.0
        %3019 = vmatpush1.msra.mxu0 0.0
        %3020 = vmatprep.subr.mxu0 0.0
        %3021 = vmatpush1.msra.mxu0 0.0
        %3022 = vmatprep.subr.mxu0 0.0
        %3023 = vmatpush1.msra.mxu0 0.0
        %3024 = vmatprep.subr.mxu0 0.0
        %3025 = vmatpush1.msra.mxu0 0.0
        %3026 = vmatprep.subr.mxu0 0.0
        %3027 = vmatpush1.msra.mxu0 0.0
        %3028 = vmatprep.subr.mxu0 0.0
        %3029 = vmatpush1.msra.mxu0 0.0
        %3030 = vmatprep.subr.mxu0 0.0
        %3031 = vmatpush1.msra.mxu0 0.0
        %3032 = vmatprep.subr.mxu0 0.0
        %3033 = vmatpush1.msra.mxu0 0.0
        %3034 = vmatprep.subr.mxu0 0.0
        %3035 = vmatpush1.msra.mxu0 0.0
        %3036 = vmatprep.subr.mxu0 0.0
        %3037 = vmatpush1.msra.mxu0 0.0
        %3038 = vmatprep.subr.mxu0 0.0
        %3039 = vmatpush1.msra.mxu0 0.0
        %3040 = vmatprep.subr.mxu0 0.0
        %3041 = vmatpush1.msra.mxu0 0.0
        %3042 = vmatprep.subr.mxu0 0.0
        %3043 = vmatpush1.msra.mxu0 0.0
        %3044 = vmatprep.subr.mxu0 0.0
        %3045 = vmatpush1.msra.mxu0 0.0
        %3046 = vmatprep.subr.mxu0 0.0
        %3047 = vmatpush1.msra.mxu0 0.0
        %3048 = vmatprep.subr.mxu0 0.0
        %3049 = vmatpush1.msra.mxu0 0.0
        %3050 = vmatprep.subr.mxu0 0.0
        %3051 = vmatpush1.msra.mxu0 0.0
        %3052 = vmatprep.subr.mxu0 0.0
        %3053 = vmatpush1.msra.mxu0 0.0
        %3054 = vmatprep.subr.mxu0 0.0
        %3055 = vmatpush1.msra.mxu0 0.0
        %3056 = vmatprep.subr.mxu0 0.0
        %3057 = vmatpush1.msra.mxu0 0.0
        %3058 = vmatprep.subr.mxu0 0.0
        %3059 = vmatpush1.msra.mxu0 0.0
        %3060 = vmatprep.subr.mxu0 0.0
        %3061 = vmatpush1.msra.mxu0 0.0
        %3062 = vmatprep.subr.mxu0 0.0
        %3063 = vmatpush1.msra.mxu0 0.0
        %3064 = vmatprep.subr.mxu0 0.0
        %3065 = vmatpush1.msra.mxu0 0.0
        %3066 = vmatprep.subr.mxu0 0.0
        %3067 = vmatpush1.msra.mxu0 0.0
        %3068 = vmatprep.mubr.f32.mxu0 0.0
        %3069 = vmatmul.mubr.f32.gmra.mrb[0].mxu0 %v2377
        %v3070 = vpop.f32.mrb[0].mxu0
        %v3071 = vadd.f32 0.0, %v3070
        %v3072 = vpop.f32.mrb[0].mxu0
        %3073 = vmatprep.mubr.f32.mxu0 0.0
        %3074 = vmatmul.mubr.f32.gmra.mrb[0].mxu0 %v2380
        %v3075 = vpop.f32.mrb[0].mxu0
        %v3076 = vadd.f32 0.0, %v3075
        %v3077 = vpop.f32.mrb[0].mxu0
        %3078 = vdwg.mxu0
        %v3080 = vsel %vm2615, %v2911, 0
        %v3083 = vsel %vm2615, %v2916, 0
        %v3086 = vsel %vm2615, %v2991, 0
        %v3089 = vsel %vm2615, %v2996, 0
        %3091 = vmatprep.subr.mxu0 0.0
        %3092 = vmatpush1.xpose.msra.mxu0 %v3086
        %3093 = vmatprep.subr.mxu0 0.0
        %3094 = vmatpush1.xpose.msra.mxu0 %v3089
        %3095 = vmatprep.subr.mxu0 0.0
        %3096 = vmatpush1.xpose.msra.mxu0 0.0
        %3097 = vmatprep.subr.mxu0 0.0
        %3098 = vmatpush1.xpose.msra.mxu0 0.0
        %3099 = vmatprep.subr.mxu0 0.0
        %3100 = vmatpush1.xpose.msra.mxu0 0.0
        %3101 = vmatprep.subr.mxu0 0.0
        %3102 = vmatpush1.xpose.msra.mxu0 0.0
        %3103 = vmatprep.subr.mxu0 0.0
        %3104 = vmatpush1.xpose.msra.mxu0 0.0
        %3105 = vmatprep.subr.mxu0 0.0
        %3106 = vmatpush1.xpose.msra.mxu0 0.0
        %3107 = vmatprep.subr.mxu0 0.0
        %3108 = vmatpush1.xpose.msra.mxu0 0.0
        %3109 = vmatprep.subr.mxu0 0.0
        %3110 = vmatpush1.xpose.msra.mxu0 0.0
        %3111 = vmatprep.subr.mxu0 0.0
        %3112 = vmatpush1.xpose.msra.mxu0 0.0
        %3113 = vmatprep.subr.mxu0 0.0
        %3114 = vmatpush1.xpose.msra.mxu0 0.0
        %3115 = vmatprep.subr.mxu0 0.0
        %3116 = vmatpush1.xpose.msra.mxu0 0.0
        %3117 = vmatprep.subr.mxu0 0.0
        %3118 = vmatpush1.xpose.msra.mxu0 0.0
        %3119 = vmatprep.subr.mxu0 0.0
        %3120 = vmatpush1.xpose.msra.mxu0 0.0
        %3121 = vmatprep.subr.mxu0 0.0
        %3122 = vmatpush1.xpose.msra.mxu0 0.0
        %3123 = vmatprep.subr.mxu0 0.0
        %3124 = vmatpush1.xpose.msra.mxu0 0.0
        %3125 = vmatprep.subr.mxu0 0.0
        %3126 = vmatpush1.xpose.msra.mxu0 0.0
        %3127 = vmatprep.subr.mxu0 0.0
        %3128 = vmatpush1.xpose.msra.mxu0 0.0
        %3129 = vmatprep.subr.mxu0 0.0
        %3130 = vmatpush1.xpose.msra.mxu0 0.0
        %3131 = vmatprep.subr.mxu0 0.0
        %3132 = vmatpush1.xpose.msra.mxu0 0.0
        %3133 = vmatprep.subr.mxu0 0.0
        %3134 = vmatpush1.xpose.msra.mxu0 0.0
        %3135 = vmatprep.subr.mxu0 0.0
        %3136 = vmatpush1.xpose.msra.mxu0 0.0
        %3137 = vmatprep.subr.mxu0 0.0
        %3138 = vmatpush1.xpose.msra.mxu0 0.0
        %3139 = vmatprep.subr.mxu0 0.0
        %3140 = vmatpush1.xpose.msra.mxu0 0.0
        %3141 = vmatprep.subr.mxu0 0.0
        %3142 = vmatpush1.xpose.msra.mxu0 0.0
        %3143 = vmatprep.subr.mxu0 0.0
        %3144 = vmatpush1.xpose.msra.mxu0 0.0
        %3145 = vmatprep.subr.mxu0 0.0
        %3146 = vmatpush1.xpose.msra.mxu0 0.0
        %3147 = vmatprep.subr.mxu0 0.0
        %3148 = vmatpush1.xpose.msra.mxu0 0.0
        %3149 = vmatprep.subr.mxu0 0.0
        %3150 = vmatpush1.xpose.msra.mxu0 0.0
        %3151 = vmatprep.subr.mxu0 0.0
        %3152 = vmatpush1.xpose.msra.mxu0 0.0
        %3153 = vmatprep.subr.mxu0 0.0
        %3154 = vmatpush1.xpose.msra.mxu0 0.0
        %3155 = vmatprep.mubr.f32.mxu0 0.0
        %3156 = vmatmul.mubr.f32.gmra.mrb[0].mxu0 %v3080
        %v3157 = vpop.f32.mrb[0].mxu0
        %v3158 = vadd.f32 0.0, %v3157
        %v3159 = vpop.f32.mrb[0].mxu0
        %3160 = vmatprep.mubr.f32.mxu0 0.0
        %3161 = vmatmul.mubr.f32.gmra.mrb[0].mxu0 %v3083
        %v3162 = vpop.f32.mrb[0].mxu0
        %v3163 = vadd.f32 0.0, %v3162
        %v3164 = vpop.f32.mrb[0].mxu0
        %3165 = vdwg.mxu0
        %v3166 = vmul.f32 %v3158, 0.35355338
        %v3167 = vmul.f32 %v3163, 0.35355338
        %v3168 = vmul.f32 %v3166, %v2709
        %v3169 = vmul.f32 %v3167, %v2709
        %v3170 = vadd.f32 %v3168, %v2719
        %v3171 = vadd.f32 %v3169, %v2719
        %v3172 = vsel %vm588, %v3170, -inf
        %3173 = vmax.xlane.f32.xlu0 %v3172
        %v3174 = vpop.xlane.xlu0 %3173
        %v3175 = vsel %vm588, %v3171, -inf
        %3176 = vmax.xlane.f32.xlu0 %v3175
        %v3177 = vpop.xlane.xlu0 %3176
        %v3178 = vsub.f32 %v3170, %v3174
        %v3179 = vsub.f32 %v3171, %v3177
        %v3180 = vmul.f32 %v3178, 1.442695
        %v3181 = vpow.pop %v3180
        %v3182 = vmul.f32 %v3179, 1.442695
        %v3183 = vpow.pop %v3182
        %v3184 = vsel %vm588, %v3181, 0.0
        %3185 = vadd.xlane.f32.xlu0 %v3184
        %v3186 = vpop.xlane.xlu0 %3185
        %v3187 = vsel %vm588, %v3183, 0.0
        %3188 = vadd.xlane.f32.xlu0 %v3187
        %v3189 = vpop.xlane.xlu0 %3188
        %v3190 = vrcp.pop %v3186
        %v3191 = vmul.f32 %v3181, %v3190
        %v3192 = vrcp.pop %v3189
        %v3193 = vmul.f32 %v3183, %v3192
        %v3194 = vmul.f32 %v3191, %v2748
        %v3195 = vmul.f32 %v3193, %v2753
        %v3197 = vsel %vm588, %v3194, 0
        %v3200 = vsel %vm588, %v3195, 0
        %3202 = vmatprep.subr.mxu0 0.0
        %3203 = vmatpush1.msra.mxu0 %v3071
        %3204 = vmatprep.subr.mxu0 0.0
        %3205 = vmatpush1.msra.mxu0 %v3076
        %3206 = vmatprep.subr.mxu0 0.0
        %3207 = vmatpush1.msra.mxu0 0.0
        %3208 = vmatprep.subr.mxu0 0.0
        %3209 = vmatpush1.msra.mxu0 0.0
        %3210 = vmatprep.subr.mxu0 0.0
        %3211 = vmatpush1.msra.mxu0 0.0
        %3212 = vmatprep.subr.mxu0 0.0
        %3213 = vmatpush1.msra.mxu0 0.0
        %3214 = vmatprep.subr.mxu0 0.0
        %3215 = vmatpush1.msra.mxu0 0.0
        %3216 = vmatprep.subr.mxu0 0.0
        %3217 = vmatpush1.msra.mxu0 0.0
        %3218 = vmatprep.subr.mxu0 0.0
        %3219 = vmatpush1.msra.mxu0 0.0
        %3220 = vmatprep.subr.mxu0 0.0
        %3221 = vmatpush1.msra.mxu0 0.0
        %3222 = vmatprep.subr.mxu0 0.0
        %3223 = vmatpush1.msra.mxu0 0.0
        %3224 = vmatprep.subr.mxu0 0.0
        %3225 = vmatpush1.msra.mxu0 0.0
        %3226 = vmatprep.subr.mxu0 0.0
        %3227 = vmatpush1.msra.mxu0 0.0
        %3228 = vmatprep.subr.mxu0 0.0
        %3229 = vmatpush1.msra.mxu0 0.0
        %3230 = vmatprep.subr.mxu0 0.0
        %3231 = vmatpush1.msra.mxu0 0.0
        %3232 = vmatprep.subr.mxu0 0.0
        %3233 = vmatpush1.msra.mxu0 0.0
        %3234 = vmatprep.subr.mxu0 0.0
        %3235 = vmatpush1.msra.mxu0 0.0
        %3236 = vmatprep.subr.mxu0 0.0
        %3237 = vmatpush1.msra.mxu0 0.0
        %3238 = vmatprep.subr.mxu0 0.0
        %3239 = vmatpush1.msra.mxu0 0.0
        %3240 = vmatprep.subr.mxu0 0.0
        %3241 = vmatpush1.msra.mxu0 0.0
        %3242 = vmatprep.subr.mxu0 0.0
        %3243 = vmatpush1.msra.mxu0 0.0
        %3244 = vmatprep.subr.mxu0 0.0
        %3245 = vmatpush1.msra.mxu0 0.0
        %3246 = vmatprep.subr.mxu0 0.0
        %3247 = vmatpush1.msra.mxu0 0.0
        %3248 = vmatprep.subr.mxu0 0.0
        %3249 = vmatpush1.msra.mxu0 0.0
        %3250 = vmatprep.subr.mxu0 0.0
        %3251 = vmatpush1.msra.mxu0 0.0
        %3252 = vmatprep.subr.mxu0 0.0
        %3253 = vmatpush1.msra.mxu0 0.0
        %3254 = vmatprep.subr.mxu0 0.0
        %3255 = vmatpush1.msra.mxu0 0.0
        %3256 = vmatprep.subr.mxu0 0.0
        %3257 = vmatpush1.msra.mxu0 0.0
        %3258 = vmatprep.subr.mxu0 0.0
        %3259 = vmatpush1.msra.mxu0 0.0
        %3260 = vmatprep.subr.mxu0 0.0
        %3261 = vmatpush1.msra.mxu0 0.0
        %3262 = vmatprep.subr.mxu0 0.0
        %3263 = vmatpush1.msra.mxu0 0.0
        %3264 = vmatprep.subr.mxu0 0.0
        %3265 = vmatpush1.msra.mxu0 0.0
        %3266 = vmatprep.mubr.f32.mxu0 0.0
        %3267 = vmatmul.mubr.f32.gmra.mrb[0].mxu0 %v3197
        %v3268 = vpop.f32.mrb[0].mxu0
        %v3269 = vadd.f32 0.0, %v3268
        %v3270 = vpop.f32.mrb[0].mxu0
        %3271 = vmatprep.mubr.f32.mxu0 0.0
        %3272 = vmatmul.mubr.f32.gmra.mrb[0].mxu0 %v3200
        %v3273 = vpop.f32.mrb[0].mxu0
        %v3274 = vadd.f32 0.0, %v3273
        %v3275 = vpop.f32.mrb[0].mxu0
        %3276 = vdwg.mxu0
        %s3277 = scalar_lea.vmem %s10, 8
        %v3278 = vld [vmem:[%s3277] sm:$0xff]
        %v3280 = vsel %vm2615, %v3269, 0
        %v3283 = vsel %vm2615, %v3274, 0
        %3285 = vmatprep.subr.mxu0 0.0
        %3286 = vmatpush1.msra.mxu0 %v3278
        %3287 = vmatprep.subr.mxu0 0.0
        %3288 = vmatpush1.msra.mxu0 0.0
        %3289 = vmatprep.subr.mxu0 0.0
        %3290 = vmatpush1.msra.mxu0 0.0
        %3291 = vmatprep.subr.mxu0 0.0
        %3292 = vmatpush1.msra.mxu0 0.0
        %3293 = vmatprep.subr.mxu0 0.0
        %3294 = vmatpush1.msra.mxu0 0.0
        %3295 = vmatprep.subr.mxu0 0.0
        %3296 = vmatpush1.msra.mxu0 0.0
        %3297 = vmatprep.subr.mxu0 0.0
        %3298 = vmatpush1.msra.mxu0 0.0
        %3299 = vmatprep.subr.mxu0 0.0
        %3300 = vmatpush1.msra.mxu0 0.0
        %3301 = vmatprep.subr.mxu0 0.0
        %3302 = vmatpush1.msra.mxu0 0.0
        %3303 = vmatprep.subr.mxu0 0.0
        %3304 = vmatpush1.msra.mxu0 0.0
        %3305 = vmatprep.subr.mxu0 0.0
        %3306 = vmatpush1.msra.mxu0 0.0
        %3307 = vmatprep.subr.mxu0 0.0
        %3308 = vmatpush1.msra.mxu0 0.0
        %3309 = vmatprep.subr.mxu0 0.0
        %3310 = vmatpush1.msra.mxu0 0.0
        %3311 = vmatprep.subr.mxu0 0.0
        %3312 = vmatpush1.msra.mxu0 0.0
        %3313 = vmatprep.subr.mxu0 0.0
        %3314 = vmatpush1.msra.mxu0 0.0
        %3315 = vmatprep.subr.mxu0 0.0
        %3316 = vmatpush1.msra.mxu0 0.0
        %3317 = vmatprep.subr.mxu0 0.0
        %3318 = vmatpush1.msra.mxu0 0.0
        %3319 = vmatprep.subr.mxu0 0.0
        %3320 = vmatpush1.msra.mxu0 0.0
        %3321 = vmatprep.subr.mxu0 0.0
        %3322 = vmatpush1.msra.mxu0 0.0
        %3323 = vmatprep.subr.mxu0 0.0
        %3324 = vmatpush1.msra.mxu0 0.0
        %3325 = vmatprep.subr.mxu0 0.0
        %3326 = vmatpush1.msra.mxu0 0.0
        %3327 = vmatprep.subr.mxu0 0.0
        %3328 = vmatpush1.msra.mxu0 0.0
        %3329 = vmatprep.subr.mxu0 0.0
        %3330 = vmatpush1.msra.mxu0 0.0
        %3331 = vmatprep.subr.mxu0 0.0
        %3332 = vmatpush1.msra.mxu0 0.0
        %3333 = vmatprep.subr.mxu0 0.0
        %3334 = vmatpush1.msra.mxu0 0.0
        %3335 = vmatprep.subr.mxu0 0.0
        %3336 = vmatpush1.msra.mxu0 0.0
        %3337 = vmatprep.subr.mxu0 0.0
        %3338 = vmatpush1.msra.mxu0 0.0
        %3339 = vmatprep.subr.mxu0 0.0
        %3340 = vmatpush1.msra.mxu0 0.0
        %3341 = vmatprep.subr.mxu0 0.0
        %3342 = vmatpush1.msra.mxu0 0.0
        %3343 = vmatprep.subr.mxu0 0.0
        %3344 = vmatpush1.msra.mxu0 0.0
        %3345 = vmatprep.subr.mxu0 0.0
        %3346 = vmatpush1.msra.mxu0 0.0
        %3347 = vmatprep.subr.mxu0 0.0
        %3348 = vmatpush1.msra.mxu0 0.0
        %3349 = vmatprep.mubr.f32.mxu0 0.0
        %3350 = vmatmul.mubr.f32.gmra.mrb[0].mxu0 %v3280
        %v3351 = vpop.f32.mrb[0].mxu0
        %v3352 = vadd.f32 0.0, %v3351
        %v3353 = vpop.f32.mrb[0].mxu0
        %3354 = vmatprep.mubr.f32.mxu0 0.0
        %3355 = vmatmul.mubr.f32.gmra.mrb[0].mxu0 %v3283
        %v3356 = vpop.f32.mrb[0].mxu0
        %v3357 = vadd.f32 0.0, %v3356
        %v3358 = vpop.f32.mrb[0].mxu0
        %3359 = vdwg.mxu0
        %v3361 = vsel %vm2615, %v2830, 0
        %v3364 = vsel %vm2615, %v2835, 0
        %3366 = vmatprep.subr.mxu0 0.0
        %3367 = vmatpush1.msra.mxu0 %v2838
        %3368 = vmatprep.subr.mxu0 0.0
        %3369 = vmatpush1.msra.mxu0 0.0
        %3370 = vmatprep.subr.mxu0 0.0
        %3371 = vmatpush1.msra.mxu0 0.0
        %3372 = vmatprep.subr.mxu0 0.0
        %3373 = vmatpush1.msra.mxu0 0.0
        %3374 = vmatprep.subr.mxu0 0.0
        %3375 = vmatpush1.msra.mxu0 0.0
        %3376 = vmatprep.subr.mxu0 0.0
        %3377 = vmatpush1.msra.mxu0 0.0
        %3378 = vmatprep.subr.mxu0 0.0
        %3379 = vmatpush1.msra.mxu0 0.0
        %3380 = vmatprep.subr.mxu0 0.0
        %3381 = vmatpush1.msra.mxu0 0.0
        %3382 = vmatprep.subr.mxu0 0.0
        %3383 = vmatpush1.msra.mxu0 0.0
        %3384 = vmatprep.subr.mxu0 0.0
        %3385 = vmatpush1.msra.mxu0 0.0
        %3386 = vmatprep.subr.mxu0 0.0
        %3387 = vmatpush1.msra.mxu0 0.0
        %3388 = vmatprep.subr.mxu0 0.0
        %3389 = vmatpush1.msra.mxu0 0.0
        %3390 = vmatprep.subr.mxu0 0.0
        %3391 = vmatpush1.msra.mxu0 0.0
        %3392 = vmatprep.subr.mxu0 0.0
        %3393 = vmatpush1.msra.mxu0 0.0
        %3394 = vmatprep.subr.mxu0 0.0
        %3395 = vmatpush1.msra.mxu0 0.0
        %3396 = vmatprep.subr.mxu0 0.0
        %3397 = vmatpush1.msra.mxu0 0.0
        %3398 = vmatprep.subr.mxu0 0.0
        %3399 = vmatpush1.msra.mxu0 0.0
        %3400 = vmatprep.subr.mxu0 0.0
        %3401 = vmatpush1.msra.mxu0 0.0
        %3402 = vmatprep.subr.mxu0 0.0
        %3403 = vmatpush1.msra.mxu0 0.0
        %3404 = vmatprep.subr.mxu0 0.0
        %3405 = vmatpush1.msra.mxu0 0.0
        %3406 = vmatprep.subr.mxu0 0.0
        %3407 = vmatpush1.msra.mxu0 0.0
        %3408 = vmatprep.subr.mxu0 0.0
        %3409 = vmatpush1.msra.mxu0 0.0
        %3410 = vmatprep.subr.mxu0 0.0
        %3411 = vmatpush1.msra.mxu0 0.0
        %3412 = vmatprep.subr.mxu0 0.0
        %3413 = vmatpush1.msra.mxu0 0.0
        %3414 = vmatprep.subr.mxu0 0.0
        %3415 = vmatpush1.msra.mxu0 0.0
        %3416 = vmatprep.subr.mxu0 0.0
        %3417 = vmatpush1.msra.mxu0 0.0
        %3418 = vmatprep.subr.mxu0 0.0
        %3419 = vmatpush1.msra.mxu0 0.0
        %3420 = vmatprep.subr.mxu0 0.0
        %3421 = vmatpush1.msra.mxu0 0.0
        %3422 = vmatprep.subr.mxu0 0.0
        %3423 = vmatpush1.msra.mxu0 0.0
        %3424 = vmatprep.subr.mxu0 0.0
        %3425 = vmatpush1.msra.mxu0 0.0
        %3426 = vmatprep.subr.mxu0 0.0
        %3427 = vmatpush1.msra.mxu0 0.0
        %3428 = vmatprep.subr.mxu0 0.0
        %3429 = vmatpush1.msra.mxu0 0.0
        %3430 = vmatprep.mubr.f32.mxu0 0.0
        %3431 = vmatmul.mubr.f32.gmra.mrb[0].mxu0 %v3361
        %v3432 = vpop.f32.mrb[0].mxu0
        %v3433 = vadd.f32 %v3352, %v3432
        %v3434 = vpop.f32.mrb[0].mxu0
        %3435 = vmatprep.mubr.f32.mxu0 0.0
        %3436 = vmatmul.mubr.f32.gmra.mrb[0].mxu0 %v3364
        %v3437 = vpop.f32.mrb[0].mxu0
        %v3438 = vadd.f32 %v3357, %v3437
        %v3439 = vpop.f32.mrb[0].mxu0
        %3440 = vdwg.mxu0
        %s3441 = scalar_lea.vmem %s7, 64
        %v3442 = vld [vmem:[%s3441] sm:$0xff]
        %v3443 = vld [vmem:[%s3441 + $0x8] sm:$0xff]
        %v3444 = vld [vmem:[%s3441 + $0x10] sm:$0xff]
        %v3445 = vld [vmem:[%s3441 + $0x18] sm:$0xff]
        %3446 = vmatprep.subr.mxu0 0.0
        %3447 = vmatpush1.msra.mxu0 %v3442
        %3448 = vmatprep.subr.mxu0 0.0
        %3449 = vmatpush1.msra.mxu0 %v3443
        %3450 = vmatprep.subr.mxu0 0.0
        %3451 = vmatpush1.msra.mxu0 %v3444
        %3452 = vmatprep.subr.mxu0 0.0
        %3453 = vmatpush1.msra.mxu0 %v3445
        %3454 = vmatprep.subr.mxu0 0.0
        %3455 = vmatpush1.msra.mxu0 0.0
        %3456 = vmatprep.subr.mxu0 0.0
        %3457 = vmatpush1.msra.mxu0 0.0
        %3458 = vmatprep.subr.mxu0 0.0
        %3459 = vmatpush1.msra.mxu0 0.0
        %3460 = vmatprep.subr.mxu0 0.0
        %3461 = vmatpush1.msra.mxu0 0.0
        %3462 = vmatprep.subr.mxu0 0.0
        %3463 = vmatpush1.msra.mxu0 0.0
        %3464 = vmatprep.subr.mxu0 0.0
        %3465 = vmatpush1.msra.mxu0 0.0
        %3466 = vmatprep.subr.mxu0 0.0
        %3467 = vmatpush1.msra.mxu0 0.0
        %3468 = vmatprep.subr.mxu0 0.0
        %3469 = vmatpush1.msra.mxu0 0.0
        %3470 = vmatprep.subr.mxu0 0.0
        %3471 = vmatpush1.msra.mxu0 0.0
        %3472 = vmatprep.subr.mxu0 0.0
        %3473 = vmatpush1.msra.mxu0 0.0
        %3474 = vmatprep.subr.mxu0 0.0
        %3475 = vmatpush1.msra.mxu0 0.0
        %3476 = vmatprep.subr.mxu0 0.0
        %3477 = vmatpush1.msra.mxu0 0.0
        %3478 = vmatprep.subr.mxu0 0.0
        %3479 = vmatpush1.msra.mxu0 0.0
        %3480 = vmatprep.subr.mxu0 0.0
        %3481 = vmatpush1.msra.mxu0 0.0
        %3482 = vmatprep.subr.mxu0 0.0
        %3483 = vmatpush1.msra.mxu0 0.0
        %3484 = vmatprep.subr.mxu0 0.0
        %3485 = vmatpush1.msra.mxu0 0.0
        %3486 = vmatprep.subr.mxu0 0.0
        %3487 = vmatpush1.msra.mxu0 0.0
        %3488 = vmatprep.subr.mxu0 0.0
        %3489 = vmatpush1.msra.mxu0 0.0
        %3490 = vmatprep.subr.mxu0 0.0
        %3491 = vmatpush1.msra.mxu0 0.0
        %3492 = vmatprep.subr.mxu0 0.0
        %3493 = vmatpush1.msra.mxu0 0.0
        %3494 = vmatprep.subr.mxu0 0.0
        %3495 = vmatpush1.msra.mxu0 0.0
        %3496 = vmatprep.subr.mxu0 0.0
        %3497 = vmatpush1.msra.mxu0 0.0
        %3498 = vmatprep.subr.mxu0 0.0
        %3499 = vmatpush1.msra.mxu0 0.0
        %3500 = vmatprep.subr.mxu0 0.0
        %3501 = vmatpush1.msra.mxu0 0.0
        %3502 = vmatprep.subr.mxu0 0.0
        %3503 = vmatpush1.msra.mxu0 0.0
        %3504 = vmatprep.subr.mxu0 0.0
        %3505 = vmatpush1.msra.mxu0 0.0
        %3506 = vmatprep.subr.mxu0 0.0
        %3507 = vmatpush1.msra.mxu0 0.0
        %3508 = vmatprep.subr.mxu0 0.0
        %3509 = vmatpush1.msra.mxu0 0.0
        %3510 = vmatprep.mubr.f32.mxu0 0.0
        %3511 = vmatmul.mubr.f32.gmra.mrb[0].mxu0 %v2377
        %v3512 = vpop.f32.mrb[0].mxu0
        %v3513 = vadd.f32 0.0, %v3512
        %v3514 = vpop.f32.mrb[0].mxu0
        %3515 = vmatprep.mubr.f32.mxu0 0.0
        %3516 = vmatmul.mubr.f32.gmra.mrb[0].mxu0 %v2380
        %v3517 = vpop.f32.mrb[0].mxu0
        %v3518 = vadd.f32 0.0, %v3517
        %v3519 = vpop.f32.mrb[0].mxu0
        %3520 = vdwg.mxu0
        %s3521 = scalar_lea.vmem %s8, 64
        %v3522 = vld [vmem:[%s3521] sm:$0xff]
        %v3523 = vld [vmem:[%s3521 + $0x8] sm:$0xff]
        %v3524 = vld [vmem:[%s3521 + $0x10] sm:$0xff]
        %v3525 = vld [vmem:[%s3521 + $0x18] sm:$0xff]
        %3526 = vmatprep.subr.mxu0 0.0
        %3527 = vmatpush1.msra.mxu0 %v3522
        %3528 = vmatprep.subr.mxu0 0.0
        %3529 = vmatpush1.msra.mxu0 %v3523
        %3530 = vmatprep.subr.mxu0 0.0
        %3531 = vmatpush1.msra.mxu0 %v3524
        %3532 = vmatprep.subr.mxu0 0.0
        %3533 = vmatpush1.msra.mxu0 %v3525
        %3534 = vmatprep.subr.mxu0 0.0
        %3535 = vmatpush1.msra.mxu0 0.0
        %3536 = vmatprep.subr.mxu0 0.0
        %3537 = vmatpush1.msra.mxu0 0.0
        %3538 = vmatprep.subr.mxu0 0.0
        %3539 = vmatpush1.msra.mxu0 0.0
        %3540 = vmatprep.subr.mxu0 0.0
        %3541 = vmatpush1.msra.mxu0 0.0
        %3542 = vmatprep.subr.mxu0 0.0
        %3543 = vmatpush1.msra.mxu0 0.0
        %3544 = vmatprep.subr.mxu0 0.0
        %3545 = vmatpush1.msra.mxu0 0.0
        %3546 = vmatprep.subr.mxu0 0.0
        %3547 = vmatpush1.msra.mxu0 0.0
        %3548 = vmatprep.subr.mxu0 0.0
        %3549 = vmatpush1.msra.mxu0 0.0
        %3550 = vmatprep.subr.mxu0 0.0
        %3551 = vmatpush1.msra.mxu0 0.0
        %3552 = vmatprep.subr.mxu0 0.0
        %3553 = vmatpush1.msra.mxu0 0.0
        %3554 = vmatprep.subr.mxu0 0.0
        %3555 = vmatpush1.msra.mxu0 0.0
        %3556 = vmatprep.subr.mxu0 0.0
        %3557 = vmatpush1.msra.mxu0 0.0
        %3558 = vmatprep.subr.mxu0 0.0
        %3559 = vmatpush1.msra.mxu0 0.0
        %3560 = vmatprep.subr.mxu0 0.0
        %3561 = vmatpush1.msra.mxu0 0.0
        %3562 = vmatprep.subr.mxu0 0.0
        %3563 = vmatpush1.msra.mxu0 0.0
        %3564 = vmatprep.subr.mxu0 0.0
        %3565 = vmatpush1.msra.mxu0 0.0
        %3566 = vmatprep.subr.mxu0 0.0
        %3567 = vmatpush1.msra.mxu0 0.0
        %3568 = vmatprep.subr.mxu0 0.0
        %3569 = vmatpush1.msra.mxu0 0.0
        %3570 = vmatprep.subr.mxu0 0.0
        %3571 = vmatpush1.msra.mxu0 0.0
        %3572 = vmatprep.subr.mxu0 0.0
        %3573 = vmatpush1.msra.mxu0 0.0
        %3574 = vmatprep.subr.mxu0 0.0
        %3575 = vmatpush1.msra.mxu0 0.0
        %3576 = vmatprep.subr.mxu0 0.0
        %3577 = vmatpush1.msra.mxu0 0.0
        %3578 = vmatprep.subr.mxu0 0.0
        %3579 = vmatpush1.msra.mxu0 0.0
        %3580 = vmatprep.subr.mxu0 0.0
        %3581 = vmatpush1.msra.mxu0 0.0
        %3582 = vmatprep.subr.mxu0 0.0
        %3583 = vmatpush1.msra.mxu0 0.0
        %3584 = vmatprep.subr.mxu0 0.0
        %3585 = vmatpush1.msra.mxu0 0.0
        %3586 = vmatprep.subr.mxu0 0.0
        %3587 = vmatpush1.msra.mxu0 0.0
        %3588 = vmatprep.subr.mxu0 0.0
        %3589 = vmatpush1.msra.mxu0 0.0
        %3590 = vmatprep.mubr.f32.mxu0 0.0
        %3591 = vmatmul.mubr.f32.gmra.mrb[0].mxu0 %v2377
        %v3592 = vpop.f32.mrb[0].mxu0
        %v3593 = vadd.f32 0.0, %v3592
        %v3594 = vpop.f32.mrb[0].mxu0
        %3595 = vmatprep.mubr.f32.mxu0 0.0
        %3596 = vmatmul.mubr.f32.gmra.mrb[0].mxu0 %v2380
        %v3597 = vpop.f32.mrb[0].mxu0
        %v3598 = vadd.f32 0.0, %v3597
        %v3599 = vpop.f32.mrb[0].mxu0
        %3600 = vdwg.mxu0
        %s3601 = scalar_lea.vmem %s9, 64
        %v3602 = vld [vmem:[%s3601] sm:$0xff]
        %v3603 = vld [vmem:[%s3601 + $0x8] sm:$0xff]
        %v3604 = vld [vmem:[%s3601 + $0x10] sm:$0xff]
        %v3605 = vld [vmem:[%s3601 + $0x18] sm:$0xff]
        %3606 = vmatprep.subr.mxu0 0.0
        %3607 = vmatpush1.msra.mxu0 %v3602
        %3608 = vmatprep.subr.mxu0 0.0
        %3609 = vmatpush1.msra.mxu0 %v3603
        %3610 = vmatprep.subr.mxu0 0.0
        %3611 = vmatpush1.msra.mxu0 %v3604
        %3612 = vmatprep.subr.mxu0 0.0
        %3613 = vmatpush1.msra.mxu0 %v3605
        %3614 = vmatprep.subr.mxu0 0.0
        %3615 = vmatpush1.msra.mxu0 0.0
        %3616 = vmatprep.subr.mxu0 0.0
        %3617 = vmatpush1.msra.mxu0 0.0
        %3618 = vmatprep.subr.mxu0 0.0
        %3619 = vmatpush1.msra.mxu0 0.0
        %3620 = vmatprep.subr.mxu0 0.0
        %3621 = vmatpush1.msra.mxu0 0.0
        %3622 = vmatprep.subr.mxu0 0.0
        %3623 = vmatpush1.msra.mxu0 0.0
        %3624 = vmatprep.subr.mxu0 0.0
        %3625 = vmatpush1.msra.mxu0 0.0
        %3626 = vmatprep.subr.mxu0 0.0
        %3627 = vmatpush1.msra.mxu0 0.0
        %3628 = vmatprep.subr.mxu0 0.0
        %3629 = vmatpush1.msra.mxu0 0.0
        %3630 = vmatprep.subr.mxu0 0.0
        %3631 = vmatpush1.msra.mxu0 0.0
        %3632 = vmatprep.subr.mxu0 0.0
        %3633 = vmatpush1.msra.mxu0 0.0
        %3634 = vmatprep.subr.mxu0 0.0
        %3635 = vmatpush1.msra.mxu0 0.0
        %3636 = vmatprep.subr.mxu0 0.0
        %3637 = vmatpush1.msra.mxu0 0.0
        %3638 = vmatprep.subr.mxu0 0.0
        %3639 = vmatpush1.msra.mxu0 0.0
        %3640 = vmatprep.subr.mxu0 0.0
        %3641 = vmatpush1.msra.mxu0 0.0
        %3642 = vmatprep.subr.mxu0 0.0
        %3643 = vmatpush1.msra.mxu0 0.0
        %3644 = vmatprep.subr.mxu0 0.0
        %3645 = vmatpush1.msra.mxu0 0.0
        %3646 = vmatprep.subr.mxu0 0.0
        %3647 = vmatpush1.msra.mxu0 0.0
        %3648 = vmatprep.subr.mxu0 0.0
        %3649 = vmatpush1.msra.mxu0 0.0
        %3650 = vmatprep.subr.mxu0 0.0
        %3651 = vmatpush1.msra.mxu0 0.0
        %3652 = vmatprep.subr.mxu0 0.0
        %3653 = vmatpush1.msra.mxu0 0.0
        %3654 = vmatprep.subr.mxu0 0.0
        %3655 = vmatpush1.msra.mxu0 0.0
        %3656 = vmatprep.subr.mxu0 0.0
        %3657 = vmatpush1.msra.mxu0 0.0
        %3658 = vmatprep.subr.mxu0 0.0
        %3659 = vmatpush1.msra.mxu0 0.0
        %3660 = vmatprep.subr.mxu0 0.0
        %3661 = vmatpush1.msra.mxu0 0.0
        %3662 = vmatprep.subr.mxu0 0.0
        %3663 = vmatpush1.msra.mxu0 0.0
        %3664 = vmatprep.subr.mxu0 0.0
        %3665 = vmatpush1.msra.mxu0 0.0
        %3666 = vmatprep.subr.mxu0 0.0
        %3667 = vmatpush1.msra.mxu0 0.0
        %3668 = vmatprep.subr.mxu0 0.0
        %3669 = vmatpush1.msra.mxu0 0.0
        %3670 = vmatprep.mubr.f32.mxu0 0.0
        %3671 = vmatmul.mubr.f32.gmra.mrb[0].mxu0 %v2377
        %v3672 = vpop.f32.mrb[0].mxu0
        %v3673 = vadd.f32 0.0, %v3672
        %v3674 = vpop.f32.mrb[0].mxu0
        %3675 = vmatprep.mubr.f32.mxu0 0.0
        %3676 = vmatmul.mubr.f32.gmra.mrb[0].mxu0 %v2380
        %v3677 = vpop.f32.mrb[0].mxu0
        %v3678 = vadd.f32 0.0, %v3677
        %v3679 = vpop.f32.mrb[0].mxu0
        %3680 = vdwg.mxu0
        %v3682 = vsel %vm2615, %v3513, 0
        %v3685 = vsel %vm2615, %v3518, 0
        %v3688 = vsel %vm2615, %v3593, 0
        %v3691 = vsel %vm2615, %v3598, 0
        %3693 = vmatprep.subr.mxu0 0.0
        %3694 = vmatpush1.xpose.msra.mxu0 %v3688
        %3695 = vmatprep.subr.mxu0 0.0
        %3696 = vmatpush1.xpose.msra.mxu0 %v3691
        %3697 = vmatprep.subr.mxu0 0.0
        %3698 = vmatpush1.xpose.msra.mxu0 0.0
        %3699 = vmatprep.subr.mxu0 0.0
        %3700 = vmatpush1.xpose.msra.mxu0 0.0
        %3701 = vmatprep.subr.mxu0 0.0
        %3702 = vmatpush1.xpose.msra.mxu0 0.0
        %3703 = vmatprep.subr.mxu0 0.0
        %3704 = vmatpush1.xpose.msra.mxu0 0.0
        %3705 = vmatprep.subr.mxu0 0.0
        %3706 = vmatpush1.xpose.msra.mxu0 0.0
        %3707 = vmatprep.subr.mxu0 0.0
        %3708 = vmatpush1.xpose.msra.mxu0 0.0
        %3709 = vmatprep.subr.mxu0 0.0
        %3710 = vmatpush1.xpose.msra.mxu0 0.0
        %3711 = vmatprep.subr.mxu0 0.0
        %3712 = vmatpush1.xpose.msra.mxu0 0.0
        %3713 = vmatprep.subr.mxu0 0.0
        %3714 = vmatpush1.xpose.msra.mxu0 0.0
        %3715 = vmatprep.subr.mxu0 0.0
        %3716 = vmatpush1.xpose.msra.mxu0 0.0
        %3717 = vmatprep.subr.mxu0 0.0
        %3718 = vmatpush1.xpose.msra.mxu0 0.0
        %3719 = vmatprep.subr.mxu0 0.0
        %3720 = vmatpush1.xpose.msra.mxu0 0.0
        %3721 = vmatprep.subr.mxu0 0.0
        %3722 = vmatpush1.xpose.msra.mxu0 0.0
        %3723 = vmatprep.subr.mxu0 0.0
        %3724 = vmatpush1.xpose.msra.mxu0 0.0
        %3725 = vmatprep.subr.mxu0 0.0
        %3726 = vmatpush1.xpose.msra.mxu0 0.0
        %3727 = vmatprep.subr.mxu0 0.0
        %3728 = vmatpush1.xpose.msra.mxu0 0.0
        %3729 = vmatprep.subr.mxu0 0.0
        %3730 = vmatpush1.xpose.msra.mxu0 0.0
        %3731 = vmatprep.subr.mxu0 0.0
        %3732 = vmatpush1.xpose.msra.mxu0 0.0
        %3733 = vmatprep.subr.mxu0 0.0
        %3734 = vmatpush1.xpose.msra.mxu0 0.0
        %3735 = vmatprep.subr.mxu0 0.0
        %3736 = vmatpush1.xpose.msra.mxu0 0.0
        %3737 = vmatprep.subr.mxu0 0.0
        %3738 = vmatpush1.xpose.msra.mxu0 0.0
        %3739 = vmatprep.subr.mxu0 0.0
        %3740 = vmatpush1.xpose.msra.mxu0 0.0
        %3741 = vmatprep.subr.mxu0 0.0
        %3742 = vmatpush1.xpose.msra.mxu0 0.0
        %3743 = vmatprep.subr.mxu0 0.0
        %3744 = vmatpush1.xpose.msra.mxu0 0.0
        %3745 = vmatprep.subr.mxu0 0.0
        %3746 = vmatpush1.xpose.msra.mxu0 0.0
        %3747 = vmatprep.subr.mxu0 0.0
        %3748 = vmatpush1.xpose.msra.mxu0 0.0
        %3749 = vmatprep.subr.mxu0 0.0
        %3750 = vmatpush1.xpose.msra.mxu0 0.0
        %3751 = vmatprep.subr.mxu0 0.0
        %3752 = vmatpush1.xpose.msra.mxu0 0.0
        %3753 = vmatprep.subr.mxu0 0.0
        %3754 = vmatpush1.xpose.msra.mxu0 0.0
        %3755 = vmatprep.subr.mxu0 0.0
        %3756 = vmatpush1.xpose.msra.mxu0 0.0
        %3757 = vmatprep.mubr.f32.mxu0 0.0
        %3758 = vmatmul.mubr.f32.gmra.mrb[0].mxu0 %v3682
        %v3759 = vpop.f32.mrb[0].mxu0
        %v3760 = vadd.f32 0.0, %v3759
        %v3761 = vpop.f32.mrb[0].mxu0
        %3762 = vmatprep.mubr.f32.mxu0 0.0
        %3763 = vmatmul.mubr.f32.gmra.mrb[0].mxu0 %v3685
        %v3764 = vpop.f32.mrb[0].mxu0
        %v3765 = vadd.f32 0.0, %v3764
        %v3766 = vpop.f32.mrb[0].mxu0
        %3767 = vdwg.mxu0
        %v3768 = vmul.f32 %v3760, 0.35355338
        %v3769 = vmul.f32 %v3765, 0.35355338
        %v3770 = vmul.f32 %v3768, %v2709
        %v3771 = vmul.f32 %v3769, %v2709
        %v3772 = vadd.f32 %v3770, %v2719
        %v3773 = vadd.f32 %v3771, %v2719
        %v3774 = vsel %vm588, %v3772, -inf
        %3775 = vmax.xlane.f32.xlu0 %v3774
        %v3776 = vpop.xlane.xlu0 %3775
        %v3777 = vsel %vm588, %v3773, -inf
        %3778 = vmax.xlane.f32.xlu0 %v3777
        %v3779 = vpop.xlane.xlu0 %3778
        %v3780 = vsub.f32 %v3772, %v3776
        %v3781 = vsub.f32 %v3773, %v3779
        %v3782 = vmul.f32 %v3780, 1.442695
        %v3783 = vpow.pop %v3782
        %v3784 = vmul.f32 %v3781, 1.442695
        %v3785 = vpow.pop %v3784
        %v3786 = vsel %vm588, %v3783, 0.0
        %3787 = vadd.xlane.f32.xlu0 %v3786
        %v3788 = vpop.xlane.xlu0 %3787
        %v3789 = vsel %vm588, %v3785, 0.0
        %3790 = vadd.xlane.f32.xlu0 %v3789
        %v3791 = vpop.xlane.xlu0 %3790
        %v3792 = vrcp.pop %v3788
        %v3793 = vmul.f32 %v3783, %v3792
        %v3794 = vrcp.pop %v3791
        %v3795 = vmul.f32 %v3785, %v3794
        %v3796 = vmul.f32 %v3793, %v2748
        %v3797 = vmul.f32 %v3795, %v2753
        %v3799 = vsel %vm588, %v3796, 0
        %v3802 = vsel %vm588, %v3797, 0
        %3804 = vmatprep.subr.mxu0 0.0
        %3805 = vmatpush1.msra.mxu0 %v3673
        %3806 = vmatprep.subr.mxu0 0.0
        %3807 = vmatpush1.msra.mxu0 %v3678
        %3808 = vmatprep.subr.mxu0 0.0
        %3809 = vmatpush1.msra.mxu0 0.0
        %3810 = vmatprep.subr.mxu0 0.0
        %3811 = vmatpush1.msra.mxu0 0.0
        %3812 = vmatprep.subr.mxu0 0.0
        %3813 = vmatpush1.msra.mxu0 0.0
        %3814 = vmatprep.subr.mxu0 0.0
        %3815 = vmatpush1.msra.mxu0 0.0
        %3816 = vmatprep.subr.mxu0 0.0
        %3817 = vmatpush1.msra.mxu0 0.0
        %3818 = vmatprep.subr.mxu0 0.0
        %3819 = vmatpush1.msra.mxu0 0.0
        %3820 = vmatprep.subr.mxu0 0.0
        %3821 = vmatpush1.msra.mxu0 0.0
        %3822 = vmatprep.subr.mxu0 0.0
        %3823 = vmatpush1.msra.mxu0 0.0
        %3824 = vmatprep.subr.mxu0 0.0
        %3825 = vmatpush1.msra.mxu0 0.0
        %3826 = vmatprep.subr.mxu0 0.0
        %3827 = vmatpush1.msra.mxu0 0.0
        %3828 = vmatprep.subr.mxu0 0.0
        %3829 = vmatpush1.msra.mxu0 0.0
        %3830 = vmatprep.subr.mxu0 0.0
        %3831 = vmatpush1.msra.mxu0 0.0
        %3832 = vmatprep.subr.mxu0 0.0
        %3833 = vmatpush1.msra.mxu0 0.0
        %3834 = vmatprep.subr.mxu0 0.0
        %3835 = vmatpush1.msra.mxu0 0.0
        %3836 = vmatprep.subr.mxu0 0.0
        %3837 = vmatpush1.msra.mxu0 0.0
        %3838 = vmatprep.subr.mxu0 0.0
        %3839 = vmatpush1.msra.mxu0 0.0
        %3840 = vmatprep.subr.mxu0 0.0
        %3841 = vmatpush1.msra.mxu0 0.0
        %3842 = vmatprep.subr.mxu0 0.0
        %3843 = vmatpush1.msra.mxu0 0.0
        %3844 = vmatprep.subr.mxu0 0.0
        %3845 = vmatpush1.msra.mxu0 0.0
        %3846 = vmatprep.subr.mxu0 0.0
        %3847 = vmatpush1.msra.mxu0 0.0
        %3848 = vmatprep.subr.mxu0 0.0
        %3849 = vmatpush1.msra.mxu0 0.0
        %3850 = vmatprep.subr.mxu0 0.0
        %3851 = vmatpush1.msra.mxu0 0.0
        %3852 = vmatprep.subr.mxu0 0.0
        %3853 = vmatpush1.msra.mxu0 0.0
        %3854 = vmatprep.subr.mxu0 0.0
        %3855 = vmatpush1.msra.mxu0 0.0
        %3856 = vmatprep.subr.mxu0 0.0
        %3857 = vmatpush1.msra.mxu0 0.0
        %3858 = vmatprep.subr.mxu0 0.0
        %3859 = vmatpush1.msra.mxu0 0.0
        %3860 = vmatprep.subr.mxu0 0.0
        %3861 = vmatpush1.msra.mxu0 0.0
        %3862 = vmatprep.subr.mxu0 0.0
        %3863 = vmatpush1.msra.mxu0 0.0
        %3864 = vmatprep.subr.mxu0 0.0
        %3865 = vmatpush1.msra.mxu0 0.0
        %3866 = vmatprep.subr.mxu0 0.0
        %3867 = vmatpush1.msra.mxu0 0.0
        %3868 = vmatprep.mubr.f32.mxu0 0.0
        %3869 = vmatmul.mubr.f32.gmra.mrb[0].mxu0 %v3799
        %v3870 = vpop.f32.mrb[0].mxu0
        %v3871 = vadd.f32 0.0, %v3870
        %v3872 = vpop.f32.mrb[0].mxu0
        %3873 = vmatprep.mubr.f32.mxu0 0.0
        %3874 = vmatmul.mubr.f32.gmra.mrb[0].mxu0 %v3802
        %v3875 = vpop.f32.mrb[0].mxu0
        %v3876 = vadd.f32 0.0, %v3875
        %v3877 = vpop.f32.mrb[0].mxu0
        %3878 = vdwg.mxu0
        %s3879 = scalar_lea.vmem %s10, 16
        %v3880 = vld [vmem:[%s3879] sm:$0xff]
        %v3882 = vsel %vm2615, %v3871, 0
        %v3885 = vsel %vm2615, %v3876, 0
        %3887 = vmatprep.subr.mxu0 0.0
        %3888 = vmatpush1.msra.mxu0 %v3880
        %3889 = vmatprep.subr.mxu0 0.0
        %3890 = vmatpush1.msra.mxu0 0.0
        %3891 = vmatprep.subr.mxu0 0.0
        %3892 = vmatpush1.msra.mxu0 0.0
        %3893 = vmatprep.subr.mxu0 0.0
        %3894 = vmatpush1.msra.mxu0 0.0
        %3895 = vmatprep.subr.mxu0 0.0
        %3896 = vmatpush1.msra.mxu0 0.0
        %3897 = vmatprep.subr.mxu0 0.0
        %3898 = vmatpush1.msra.mxu0 0.0
        %3899 = vmatprep.subr.mxu0 0.0
        %3900 = vmatpush1.msra.mxu0 0.0
        %3901 = vmatprep.subr.mxu0 0.0
        %3902 = vmatpush1.msra.mxu0 0.0
        %3903 = vmatprep.subr.mxu0 0.0
        %3904 = vmatpush1.msra.mxu0 0.0
        %3905 = vmatprep.subr.mxu0 0.0
        %3906 = vmatpush1.msra.mxu0 0.0
        %3907 = vmatprep.subr.mxu0 0.0
        %3908 = vmatpush1.msra.mxu0 0.0
        %3909 = vmatprep.subr.mxu0 0.0
        %3910 = vmatpush1.msra.mxu0 0.0
        %3911 = vmatprep.subr.mxu0 0.0
        %3912 = vmatpush1.msra.mxu0 0.0
        %3913 = vmatprep.subr.mxu0 0.0
        %3914 = vmatpush1.msra.mxu0 0.0
        %3915 = vmatprep.subr.mxu0 0.0
        %3916 = vmatpush1.msra.mxu0 0.0
        %3917 = vmatprep.subr.mxu0 0.0
        %3918 = vmatpush1.msra.mxu0 0.0
        %3919 = vmatprep.subr.mxu0 0.0
        %3920 = vmatpush1.msra.mxu0 0.0
        %3921 = vmatprep.subr.mxu0 0.0
        %3922 = vmatpush1.msra.mxu0 0.0
        %3923 = vmatprep.subr.mxu0 0.0
        %3924 = vmatpush1.msra.mxu0 0.0
        %3925 = vmatprep.subr.mxu0 0.0
        %3926 = vmatpush1.msra.mxu0 0.0
        %3927 = vmatprep.subr.mxu0 0.0
        %3928 = vmatpush1.msra.mxu0 0.0
        %3929 = vmatprep.subr.mxu0 0.0
        %3930 = vmatpush1.msra.mxu0 0.0
        %3931 = vmatprep.subr.mxu0 0.0
        %3932 = vmatpush1.msra.mxu0 0.0
        %3933 = vmatprep.subr.mxu0 0.0
        %3934 = vmatpush1.msra.mxu0 0.0
        %3935 = vmatprep.subr.mxu0 0.0
        %3936 = vmatpush1.msra.mxu0 0.0
        %3937 = vmatprep.subr.mxu0 0.0
        %3938 = vmatpush1.msra.mxu0 0.0
        %3939 = vmatprep.subr.mxu0 0.0
        %3940 = vmatpush1.msra.mxu0 0.0
        %3941 = vmatprep.subr.mxu0 0.0
        %3942 = vmatpush1.msra.mxu0 0.0
        %3943 = vmatprep.subr.mxu0 0.0
        %3944 = vmatpush1.msra.mxu0 0.0
        %3945 = vmatprep.subr.mxu0 0.0
        %3946 = vmatpush1.msra.mxu0 0.0
        %3947 = vmatprep.subr.mxu0 0.0
        %3948 = vmatpush1.msra.mxu0 0.0
        %3949 = vmatprep.subr.mxu0 0.0
        %3950 = vmatpush1.msra.mxu0 0.0
        %3951 = vmatprep.mubr.f32.mxu0 0.0
        %3952 = vmatmul.mubr.f32.gmra.mrb[0].mxu0 %v3882
        %v3953 = vpop.f32.mrb[0].mxu0
        %v3954 = vadd.f32 0.0, %v3953
        %v3955 = vpop.f32.mrb[0].mxu0
        %3956 = vmatprep.mubr.f32.mxu0 0.0
        %3957 = vmatmul.mubr.f32.gmra.mrb[0].mxu0 %v3885
        %v3958 = vpop.f32.mrb[0].mxu0
        %v3959 = vadd.f32 0.0, %v3958
        %v3960 = vpop.f32.mrb[0].mxu0
        %3961 = vdwg.mxu0
        %v3962 = vadd.f32 %v3433, %v3954
        %v3963 = vadd.f32 %v3438, %v3959
        %s3964 = scalar_lea.vmem %s7, 96
        %v3965 = vld [vmem:[%s3964] sm:$0xff]
        %v3966 = vld [vmem:[%s3964 + $0x8] sm:$0xff]
        %v3967 = vld [vmem:[%s3964 + $0x10] sm:$0xff]
        %v3968 = vld [vmem:[%s3964 + $0x18] sm:$0xff]
        %3969 = vmatprep.subr.mxu0 0.0
        %3970 = vmatpush1.msra.mxu0 %v3965
        %3971 = vmatprep.subr.mxu0 0.0
        %3972 = vmatpush1.msra.mxu0 %v3966
        %3973 = vmatprep.subr.mxu0 0.0
        %3974 = vmatpush1.msra.mxu0 %v3967
        %3975 = vmatprep.subr.mxu0 0.0
        %3976 = vmatpush1.msra.mxu0 %v3968
        %3977 = vmatprep.subr.mxu0 0.0
        %3978 = vmatpush1.msra.mxu0 0.0
        %3979 = vmatprep.subr.mxu0 0.0
        %3980 = vmatpush1.msra.mxu0 0.0
        %3981 = vmatprep.subr.mxu0 0.0
        %3982 = vmatpush1.msra.mxu0 0.0
        %3983 = vmatprep.subr.mxu0 0.0
        %3984 = vmatpush1.msra.mxu0 0.0
        %3985 = vmatprep.subr.mxu0 0.0
        %3986 = vmatpush1.msra.mxu0 0.0
        %3987 = vmatprep.subr.mxu0 0.0
        %3988 = vmatpush1.msra.mxu0 0.0
        %3989 = vmatprep.subr.mxu0 0.0
        %3990 = vmatpush1.msra.mxu0 0.0
        %3991 = vmatprep.subr.mxu0 0.0
        %3992 = vmatpush1.msra.mxu0 0.0
        %3993 = vmatprep.subr.mxu0 0.0
        %3994 = vmatpush1.msra.mxu0 0.0
        %3995 = vmatprep.subr.mxu0 0.0
        %3996 = vmatpush1.msra.mxu0 0.0
        %3997 = vmatprep.subr.mxu0 0.0
        %3998 = vmatpush1.msra.mxu0 0.0
        %3999 = vmatprep.subr.mxu0 0.0
        %4000 = vmatpush1.msra.mxu0 0.0
        %4001 = vmatprep.subr.mxu0 0.0
        %4002 = vmatpush1.msra.mxu0 0.0
        %4003 = vmatprep.subr.mxu0 0.0
        %4004 = vmatpush1.msra.mxu0 0.0
        %4005 = vmatprep.subr.mxu0 0.0
        %4006 = vmatpush1.msra.mxu0 0.0
        %4007 = vmatprep.subr.mxu0 0.0
        %4008 = vmatpush1.msra.mxu0 0.0
        %4009 = vmatprep.subr.mxu0 0.0
        %4010 = vmatpush1.msra.mxu0 0.0
        %4011 = vmatprep.subr.mxu0 0.0
        %4012 = vmatpush1.msra.mxu0 0.0
        %4013 = vmatprep.subr.mxu0 0.0
        %4014 = vmatpush1.msra.mxu0 0.0
        %4015 = vmatprep.subr.mxu0 0.0
        %4016 = vmatpush1.msra.mxu0 0.0
        %4017 = vmatprep.subr.mxu0 0.0
        %4018 = vmatpush1.msra.mxu0 0.0
        %4019 = vmatprep.subr.mxu0 0.0
        %4020 = vmatpush1.msra.mxu0 0.0
        %4021 = vmatprep.subr.mxu0 0.0
        %4022 = vmatpush1.msra.mxu0 0.0
        %4023 = vmatprep.subr.mxu0 0.0
        %4024 = vmatpush1.msra.mxu0 0.0
        %4025 = vmatprep.subr.mxu0 0.0
        %4026 = vmatpush1.msra.mxu0 0.0
        %4027 = vmatprep.subr.mxu0 0.0
        %4028 = vmatpush1.msra.mxu0 0.0
        %4029 = vmatprep.subr.mxu0 0.0
        %4030 = vmatpush1.msra.mxu0 0.0
        %4031 = vmatprep.subr.mxu0 0.0
        %4032 = vmatpush1.msra.mxu0 0.0
        %4033 = vmatprep.mubr.f32.mxu0 0.0
        %4034 = vmatmul.mubr.f32.gmra.mrb[0].mxu0 %v2377
        %v4035 = vpop.f32.mrb[0].mxu0
        %v4036 = vadd.f32 0.0, %v4035
        %v4037 = vpop.f32.mrb[0].mxu0
        %4038 = vmatprep.mubr.f32.mxu0 0.0
        %4039 = vmatmul.mubr.f32.gmra.mrb[0].mxu0 %v2380
        %v4040 = vpop.f32.mrb[0].mxu0
        %v4041 = vadd.f32 0.0, %v4040
        %v4042 = vpop.f32.mrb[0].mxu0
        %4043 = vdwg.mxu0
        %s4044 = scalar_lea.vmem %s8, 96
        %v4045 = vld [vmem:[%s4044] sm:$0xff]
        %v4046 = vld [vmem:[%s4044 + $0x8] sm:$0xff]
        %v4047 = vld [vmem:[%s4044 + $0x10] sm:$0xff]
        %v4048 = vld [vmem:[%s4044 + $0x18] sm:$0xff]
        %4049 = vmatprep.subr.mxu0 0.0
        %4050 = vmatpush1.msra.mxu0 %v4045
        %4051 = vmatprep.subr.mxu0 0.0
        %4052 = vmatpush1.msra.mxu0 %v4046
        %4053 = vmatprep.subr.mxu0 0.0
        %4054 = vmatpush1.msra.mxu0 %v4047
        %4055 = vmatprep.subr.mxu0 0.0
        %4056 = vmatpush1.msra.mxu0 %v4048
        %4057 = vmatprep.subr.mxu0 0.0
        %4058 = vmatpush1.msra.mxu0 0.0
        %4059 = vmatprep.subr.mxu0 0.0
        %4060 = vmatpush1.msra.mxu0 0.0
        %4061 = vmatprep.subr.mxu0 0.0
        %4062 = vmatpush1.msra.mxu0 0.0
        %4063 = vmatprep.subr.mxu0 0.0
        %4064 = vmatpush1.msra.mxu0 0.0
        %4065 = vmatprep.subr.mxu0 0.0
        %4066 = vmatpush1.msra.mxu0 0.0
        %4067 = vmatprep.subr.mxu0 0.0
        %4068 = vmatpush1.msra.mxu0 0.0
        %4069 = vmatprep.subr.mxu0 0.0
        %4070 = vmatpush1.msra.mxu0 0.0
        %4071 = vmatprep.subr.mxu0 0.0
        %4072 = vmatpush1.msra.mxu0 0.0
        %4073 = vmatprep.subr.mxu0 0.0
        %4074 = vmatpush1.msra.mxu0 0.0
        %4075 = vmatprep.subr.mxu0 0.0
        %4076 = vmatpush1.msra.mxu0 0.0
        %4077 = vmatprep.subr.mxu0 0.0
        %4078 = vmatpush1.msra.mxu0 0.0
        %4079 = vmatprep.subr.mxu0 0.0
        %4080 = vmatpush1.msra.mxu0 0.0
        %4081 = vmatprep.subr.mxu0 0.0
        %4082 = vmatpush1.msra.mxu0 0.0
        %4083 = vmatprep.subr.mxu0 0.0
        %4084 = vmatpush1.msra.mxu0 0.0
        %4085 = vmatprep.subr.mxu0 0.0
        %4086 = vmatpush1.msra.mxu0 0.0
        %4087 = vmatprep.subr.mxu0 0.0
        %4088 = vmatpush1.msra.mxu0 0.0
        %4089 = vmatprep.subr.mxu0 0.0
        %4090 = vmatpush1.msra.mxu0 0.0
        %4091 = vmatprep.subr.mxu0 0.0
        %4092 = vmatpush1.msra.mxu0 0.0
        %4093 = vmatprep.subr.mxu0 0.0
        %4094 = vmatpush1.msra.mxu0 0.0
        %4095 = vmatprep.subr.mxu0 0.0
        %4096 = vmatpush1.msra.mxu0 0.0
        %4097 = vmatprep.subr.mxu0 0.0
        %4098 = vmatpush1.msra.mxu0 0.0
        %4099 = vmatprep.subr.mxu0 0.0
        %4100 = vmatpush1.msra.mxu0 0.0
        %4101 = vmatprep.subr.mxu0 0.0
        %4102 = vmatpush1.msra.mxu0 0.0
        %4103 = vmatprep.subr.mxu0 0.0
        %4104 = vmatpush1.msra.mxu0 0.0
        %4105 = vmatprep.subr.mxu0 0.0
        %4106 = vmatpush1.msra.mxu0 0.0
        %4107 = vmatprep.subr.mxu0 0.0
        %4108 = vmatpush1.msra.mxu0 0.0
        %4109 = vmatprep.subr.mxu0 0.0
        %4110 = vmatpush1.msra.mxu0 0.0
        %4111 = vmatprep.subr.mxu0 0.0
        %4112 = vmatpush1.msra.mxu0 0.0
        %4113 = vmatprep.mubr.f32.mxu0 0.0
        %4114 = vmatmul.mubr.f32.gmra.mrb[0].mxu0 %v2377
        %v4115 = vpop.f32.mrb[0].mxu0
        %v4116 = vadd.f32 0.0, %v4115
        %v4117 = vpop.f32.mrb[0].mxu0
        %4118 = vmatprep.mubr.f32.mxu0 0.0
        %4119 = vmatmul.mubr.f32.gmra.mrb[0].mxu0 %v2380
        %v4120 = vpop.f32.mrb[0].mxu0
        %v4121 = vadd.f32 0.0, %v4120
        %v4122 = vpop.f32.mrb[0].mxu0
        %4123 = vdwg.mxu0
        %s4124 = scalar_lea.vmem %s9, 96
        %v4125 = vld [vmem:[%s4124] sm:$0xff]
        %v4126 = vld [vmem:[%s4124 + $0x8] sm:$0xff]
        %v4127 = vld [vmem:[%s4124 + $0x10] sm:$0xff]
        %v4128 = vld [vmem:[%s4124 + $0x18] sm:$0xff]
        %4129 = vmatprep.subr.mxu0 0.0
        %4130 = vmatpush1.msra.mxu0 %v4125
        %4131 = vmatprep.subr.mxu0 0.0
        %4132 = vmatpush1.msra.mxu0 %v4126
        %4133 = vmatprep.subr.mxu0 0.0
        %4134 = vmatpush1.msra.mxu0 %v4127
        %4135 = vmatprep.subr.mxu0 0.0
        %4136 = vmatpush1.msra.mxu0 %v4128
        %4137 = vmatprep.subr.mxu0 0.0
        %4138 = vmatpush1.msra.mxu0 0.0
        %4139 = vmatprep.subr.mxu0 0.0
        %4140 = vmatpush1.msra.mxu0 0.0
        %4141 = vmatprep.subr.mxu0 0.0
        %4142 = vmatpush1.msra.mxu0 0.0
        %4143 = vmatprep.subr.mxu0 0.0
        %4144 = vmatpush1.msra.mxu0 0.0
        %4145 = vmatprep.subr.mxu0 0.0
        %4146 = vmatpush1.msra.mxu0 0.0
        %4147 = vmatprep.subr.mxu0 0.0
        %4148 = vmatpush1.msra.mxu0 0.0
        %4149 = vmatprep.subr.mxu0 0.0
        %4150 = vmatpush1.msra.mxu0 0.0
        %4151 = vmatprep.subr.mxu0 0.0
        %4152 = vmatpush1.msra.mxu0 0.0
        %4153 = vmatprep.subr.mxu0 0.0
        %4154 = vmatpush1.msra.mxu0 0.0
        %4155 = vmatprep.subr.mxu0 0.0
        %4156 = vmatpush1.msra.mxu0 0.0
        %4157 = vmatprep.subr.mxu0 0.0
        %4158 = vmatpush1.msra.mxu0 0.0
        %4159 = vmatprep.subr.mxu0 0.0
        %4160 = vmatpush1.msra.mxu0 0.0
        %4161 = vmatprep.subr.mxu0 0.0
        %4162 = vmatpush1.msra.mxu0 0.0
        %4163 = vmatprep.subr.mxu0 0.0
        %4164 = vmatpush1.msra.mxu0 0.0
        %4165 = vmatprep.subr.mxu0 0.0
        %4166 = vmatpush1.msra.mxu0 0.0
        %4167 = vmatprep.subr.mxu0 0.0
        %4168 = vmatpush1.msra.mxu0 0.0
        %4169 = vmatprep.subr.mxu0 0.0
        %4170 = vmatpush1.msra.mxu0 0.0
        %4171 = vmatprep.subr.mxu0 0.0
        %4172 = vmatpush1.msra.mxu0 0.0
        %4173 = vmatprep.subr.mxu0 0.0
        %4174 = vmatpush1.msra.mxu0 0.0
        %4175 = vmatprep.subr.mxu0 0.0
        %4176 = vmatpush1.msra.mxu0 0.0
        %4177 = vmatprep.subr.mxu0 0.0
        %4178 = vmatpush1.msra.mxu0 0.0
        %4179 = vmatprep.subr.mxu0 0.0
        %4180 = vmatpush1.msra.mxu0 0.0
        %4181 = vmatprep.subr.mxu0 0.0
        %4182 = vmatpush1.msra.mxu0 0.0
        %4183 = vmatprep.subr.mxu0 0.0
        %4184 = vmatpush1.msra.mxu0 0.0
        %4185 = vmatprep.subr.mxu0 0.0
        %4186 = vmatpush1.msra.mxu0 0.0
        %4187 = vmatprep.subr.mxu0 0.0
        %4188 = vmatpush1.msra.mxu0 0.0
        %4189 = vmatprep.subr.mxu0 0.0
        %4190 = vmatpush1.msra.mxu0 0.0
        %4191 = vmatprep.subr.mxu0 0.0
        %4192 = vmatpush1.msra.mxu0 0.0
        %4193 = vmatprep.mubr.f32.mxu0 0.0
        %4194 = vmatmul.mubr.f32.gmra.mrb[0].mxu0 %v2377
        %v4195 = vpop.f32.mrb[0].mxu0
        %v4196 = vadd.f32 0.0, %v4195
        %v4197 = vpop.f32.mrb[0].mxu0
        %4198 = vmatprep.mubr.f32.mxu0 0.0
        %4199 = vmatmul.mubr.f32.gmra.mrb[0].mxu0 %v2380
        %v4200 = vpop.f32.mrb[0].mxu0
        %v4201 = vadd.f32 0.0, %v4200
        %v4202 = vpop.f32.mrb[0].mxu0
        %4203 = vdwg.mxu0
        %v4205 = vsel %vm2615, %v4036, 0
        %v4208 = vsel %vm2615, %v4041, 0
        %v4211 = vsel %vm2615, %v4116, 0
        %v4214 = vsel %vm2615, %v4121, 0
        %4216 = vmatprep.subr.mxu0 0.0
        %4217 = vmatpush1.xpose.msra.mxu0 %v4211
        %4218 = vmatprep.subr.mxu0 0.0
        %4219 = vmatpush1.xpose.msra.mxu0 %v4214
        %4220 = vmatprep.subr.mxu0 0.0
        %4221 = vmatpush1.xpose.msra.mxu0 0.0
        %4222 = vmatprep.subr.mxu0 0.0
        %4223 = vmatpush1.xpose.msra.mxu0 0.0
        %4224 = vmatprep.subr.mxu0 0.0
        %4225 = vmatpush1.xpose.msra.mxu0 0.0
        %4226 = vmatprep.subr.mxu0 0.0
        %4227 = vmatpush1.xpose.msra.mxu0 0.0
        %4228 = vmatprep.subr.mxu0 0.0
        %4229 = vmatpush1.xpose.msra.mxu0 0.0
        %4230 = vmatprep.subr.mxu0 0.0
        %4231 = vmatpush1.xpose.msra.mxu0 0.0
        %4232 = vmatprep.subr.mxu0 0.0
        %4233 = vmatpush1.xpose.msra.mxu0 0.0
        %4234 = vmatprep.subr.mxu0 0.0
        %4235 = vmatpush1.xpose.msra.mxu0 0.0
        %4236 = vmatprep.subr.mxu0 0.0
        %4237 = vmatpush1.xpose.msra.mxu0 0.0
        %4238 = vmatprep.subr.mxu0 0.0
        %4239 = vmatpush1.xpose.msra.mxu0 0.0
        %4240 = vmatprep.subr.mxu0 0.0
        %4241 = vmatpush1.xpose.msra.mxu0 0.0
        %4242 = vmatprep.subr.mxu0 0.0
        %4243 = vmatpush1.xpose.msra.mxu0 0.0
        %4244 = vmatprep.subr.mxu0 0.0
        %4245 = vmatpush1.xpose.msra.mxu0 0.0
        %4246 = vmatprep.subr.mxu0 0.0
        %4247 = vmatpush1.xpose.msra.mxu0 0.0
        %4248 = vmatprep.subr.mxu0 0.0
        %4249 = vmatpush1.xpose.msra.mxu0 0.0
        %4250 = vmatprep.subr.mxu0 0.0
        %4251 = vmatpush1.xpose.msra.mxu0 0.0
        %4252 = vmatprep.subr.mxu0 0.0
        %4253 = vmatpush1.xpose.msra.mxu0 0.0
        %4254 = vmatprep.subr.mxu0 0.0
        %4255 = vmatpush1.xpose.msra.mxu0 0.0
        %4256 = vmatprep.subr.mxu0 0.0
        %4257 = vmatpush1.xpose.msra.mxu0 0.0
        %4258 = vmatprep.subr.mxu0 0.0
        %4259 = vmatpush1.xpose.msra.mxu0 0.0
        %4260 = vmatprep.subr.mxu0 0.0
        %4261 = vmatpush1.xpose.msra.mxu0 0.0
        %4262 = vmatprep.subr.mxu0 0.0
        %4263 = vmatpush1.xpose.msra.mxu0 0.0
        %4264 = vmatprep.subr.mxu0 0.0
        %4265 = vmatpush1.xpose.msra.mxu0 0.0
        %4266 = vmatprep.subr.mxu0 0.0
        %4267 = vmatpush1.xpose.msra.mxu0 0.0
        %4268 = vmatprep.subr.mxu0 0.0
        %4269 = vmatpush1.xpose.msra.mxu0 0.0
        %4270 = vmatprep.subr.mxu0 0.0
        %4271 = vmatpush1.xpose.msra.mxu0 0.0
        %4272 = vmatprep.subr.mxu0 0.0
        %4273 = vmatpush1.xpose.msra.mxu0 0.0
        %4274 = vmatprep.subr.mxu0 0.0
        %4275 = vmatpush1.xpose.msra.mxu0 0.0
        %4276 = vmatprep.subr.mxu0 0.0
        %4277 = vmatpush1.xpose.msra.mxu0 0.0
        %4278 = vmatprep.subr.mxu0 0.0
        %4279 = vmatpush1.xpose.msra.mxu0 0.0
        %4280 = vmatprep.mubr.f32.mxu0 0.0
        %4281 = vmatmul.mubr.f32.gmra.mrb[0].mxu0 %v4205
        %v4282 = vpop.f32.mrb[0].mxu0
        %v4283 = vadd.f32 0.0, %v4282
        %v4284 = vpop.f32.mrb[0].mxu0
        %4285 = vmatprep.mubr.f32.mxu0 0.0
        %4286 = vmatmul.mubr.f32.gmra.mrb[0].mxu0 %v4208
        %v4287 = vpop.f32.mrb[0].mxu0
        %v4288 = vadd.f32 0.0, %v4287
        %v4289 = vpop.f32.mrb[0].mxu0
        %4290 = vdwg.mxu0
        %v4291 = vmul.f32 %v4283, 0.35355338
        %v4292 = vmul.f32 %v4288, 0.35355338
        %v4293 = vmul.f32 %v4291, %v2709
        %v4294 = vmul.f32 %v4292, %v2709
        %v4295 = vadd.f32 %v4293, %v2719
        %v4296 = vadd.f32 %v4294, %v2719
        %v4297 = vsel %vm588, %v4295, -inf
        %4298 = vmax.xlane.f32.xlu0 %v4297
        %v4299 = vpop.xlane.xlu0 %4298
        %v4300 = vsel %vm588, %v4296, -inf
        %4301 = vmax.xlane.f32.xlu0 %v4300
        %v4302 = vpop.xlane.xlu0 %4301
        %v4303 = vsub.f32 %v4295, %v4299
        %v4304 = vsub.f32 %v4296, %v4302
        %v4305 = vmul.f32 %v4303, 1.442695
        %v4306 = vpow.pop %v4305
        %v4307 = vmul.f32 %v4304, 1.442695
        %v4308 = vpow.pop %v4307
        %v4309 = vsel %vm588, %v4306, 0.0
        %4310 = vadd.xlane.f32.xlu0 %v4309
        %v4311 = vpop.xlane.xlu0 %4310
        %v4312 = vsel %vm588, %v4308, 0.0
        %4313 = vadd.xlane.f32.xlu0 %v4312
        %v4314 = vpop.xlane.xlu0 %4313
        %v4315 = vrcp.pop %v4311
        %v4316 = vmul.f32 %v4306, %v4315
        %v4317 = vrcp.pop %v4314
        %v4318 = vmul.f32 %v4308, %v4317
        %v4319 = vmul.f32 %v4316, %v2748
        %v4320 = vmul.f32 %v4318, %v2753
        %v4322 = vsel %vm588, %v4319, 0
        %v4325 = vsel %vm588, %v4320, 0
        %4327 = vmatprep.subr.mxu0 0.0
        %4328 = vmatpush1.msra.mxu0 %v4196
        %4329 = vmatprep.subr.mxu0 0.0
        %4330 = vmatpush1.msra.mxu0 %v4201
        %4331 = vmatprep.subr.mxu0 0.0
        %4332 = vmatpush1.msra.mxu0 0.0
        %4333 = vmatprep.subr.mxu0 0.0
        %4334 = vmatpush1.msra.mxu0 0.0
        %4335 = vmatprep.subr.mxu0 0.0
        %4336 = vmatpush1.msra.mxu0 0.0
        %4337 = vmatprep.subr.mxu0 0.0
        %4338 = vmatpush1.msra.mxu0 0.0
        %4339 = vmatprep.subr.mxu0 0.0
        %4340 = vmatpush1.msra.mxu0 0.0
        %4341 = vmatprep.subr.mxu0 0.0
        %4342 = vmatpush1.msra.mxu0 0.0
        %4343 = vmatprep.subr.mxu0 0.0
        %4344 = vmatpush1.msra.mxu0 0.0
        %4345 = vmatprep.subr.mxu0 0.0
        %4346 = vmatpush1.msra.mxu0 0.0
        %4347 = vmatprep.subr.mxu0 0.0
        %4348 = vmatpush1.msra.mxu0 0.0
        %4349 = vmatprep.subr.mxu0 0.0
        %4350 = vmatpush1.msra.mxu0 0.0
        %4351 = vmatprep.subr.mxu0 0.0
        %4352 = vmatpush1.msra.mxu0 0.0
        %4353 = vmatprep.subr.mxu0 0.0
        %4354 = vmatpush1.msra.mxu0 0.0
        %4355 = vmatprep.subr.mxu0 0.0
        %4356 = vmatpush1.msra.mxu0 0.0
        %4357 = vmatprep.subr.mxu0 0.0
        %4358 = vmatpush1.msra.mxu0 0.0
        %4359 = vmatprep.subr.mxu0 0.0
        %4360 = vmatpush1.msra.mxu0 0.0
        %4361 = vmatprep.subr.mxu0 0.0
        %4362 = vmatpush1.msra.mxu0 0.0
        %4363 = vmatprep.subr.mxu0 0.0
        %4364 = vmatpush1.msra.mxu0 0.0
        %4365 = vmatprep.subr.mxu0 0.0
        %4366 = vmatpush1.msra.mxu0 0.0
        %4367 = vmatprep.subr.mxu0 0.0
        %4368 = vmatpush1.msra.mxu0 0.0
        %4369 = vmatprep.subr.mxu0 0.0
        %4370 = vmatpush1.msra.mxu0 0.0
        %4371 = vmatprep.subr.mxu0 0.0
        %4372 = vmatpush1.msra.mxu0 0.0
        %4373 = vmatprep.subr.mxu0 0.0
        %4374 = vmatpush1.msra.mxu0 0.0
        %4375 = vmatprep.subr.mxu0 0.0
        %4376 = vmatpush1.msra.mxu0 0.0
        %4377 = vmatprep.subr.mxu0 0.0
        %4378 = vmatpush1.msra.mxu0 0.0
        %4379 = vmatprep.subr.mxu0 0.0
        %4380 = vmatpush1.msra.mxu0 0.0
        %4381 = vmatprep.subr.mxu0 0.0
        %4382 = vmatpush1.msra.mxu0 0.0
        %4383 = vmatprep.subr.mxu0 0.0
        %4384 = vmatpush1.msra.mxu0 0.0
        %4385 = vmatprep.subr.mxu0 0.0
        %4386 = vmatpush1.msra.mxu0 0.0
        %4387 = vmatprep.subr.mxu0 0.0
        %4388 = vmatpush1.msra.mxu0 0.0
        %4389 = vmatprep.subr.mxu0 0.0
        %4390 = vmatpush1.msra.mxu0 0.0
        %4391 = vmatprep.mubr.f32.mxu0 0.0
        %4392 = vmatmul.mubr.f32.gmra.mrb[0].mxu0 %v4322
        %v4393 = vpop.f32.mrb[0].mxu0
        %v4394 = vadd.f32 0.0, %v4393
        %v4395 = vpop.f32.mrb[0].mxu0
        %4396 = vmatprep.mubr.f32.mxu0 0.0
        %4397 = vmatmul.mubr.f32.gmra.mrb[0].mxu0 %v4325
        %v4398 = vpop.f32.mrb[0].mxu0
        %v4399 = vadd.f32 0.0, %v4398
        %v4400 = vpop.f32.mrb[0].mxu0
        %4401 = vdwg.mxu0
        %s4402 = scalar_lea.vmem %s10, 24
        %v4403 = vld [vmem:[%s4402] sm:$0xff]
        %v4405 = vsel %vm2615, %v4394, 0
        %v4408 = vsel %vm2615, %v4399, 0
        %4410 = vmatprep.subr.mxu0 0.0
        %4411 = vmatpush1.msra.mxu0 %v4403
        %4412 = vmatprep.subr.mxu0 0.0
        %4413 = vmatpush1.msra.mxu0 0.0
        %4414 = vmatprep.subr.mxu0 0.0
        %4415 = vmatpush1.msra.mxu0 0.0
        %4416 = vmatprep.subr.mxu0 0.0
        %4417 = vmatpush1.msra.mxu0 0.0
        %4418 = vmatprep.subr.mxu0 0.0
        %4419 = vmatpush1.msra.mxu0 0.0
        %4420 = vmatprep.subr.mxu0 0.0
        %4421 = vmatpush1.msra.mxu0 0.0
        %4422 = vmatprep.subr.mxu0 0.0
        %4423 = vmatpush1.msra.mxu0 0.0
        %4424 = vmatprep.subr.mxu0 0.0
        %4425 = vmatpush1.msra.mxu0 0.0
        %4426 = vmatprep.subr.mxu0 0.0
        %4427 = vmatpush1.msra.mxu0 0.0
        %4428 = vmatprep.subr.mxu0 0.0
        %4429 = vmatpush1.msra.mxu0 0.0
        %4430 = vmatprep.subr.mxu0 0.0
        %4431 = vmatpush1.msra.mxu0 0.0
        %4432 = vmatprep.subr.mxu0 0.0
        %4433 = vmatpush1.msra.mxu0 0.0
        %4434 = vmatprep.subr.mxu0 0.0
        %4435 = vmatpush1.msra.mxu0 0.0
        %4436 = vmatprep.subr.mxu0 0.0
        %4437 = vmatpush1.msra.mxu0 0.0
        %4438 = vmatprep.subr.mxu0 0.0
        %4439 = vmatpush1.msra.mxu0 0.0
        %4440 = vmatprep.subr.mxu0 0.0
        %4441 = vmatpush1.msra.mxu0 0.0
        %4442 = vmatprep.subr.mxu0 0.0
        %4443 = vmatpush1.msra.mxu0 0.0
        %4444 = vmatprep.subr.mxu0 0.0
        %4445 = vmatpush1.msra.mxu0 0.0
        %4446 = vmatprep.subr.mxu0 0.0
        %4447 = vmatpush1.msra.mxu0 0.0
        %4448 = vmatprep.subr.mxu0 0.0
        %4449 = vmatpush1.msra.mxu0 0.0
        %4450 = vmatprep.subr.mxu0 0.0
        %4451 = vmatpush1.msra.mxu0 0.0
        %4452 = vmatprep.subr.mxu0 0.0
        %4453 = vmatpush1.msra.mxu0 0.0
        %4454 = vmatprep.subr.mxu0 0.0
        %4455 = vmatpush1.msra.mxu0 0.0
        %4456 = vmatprep.subr.mxu0 0.0
        %4457 = vmatpush1.msra.mxu0 0.0
        %4458 = vmatprep.subr.mxu0 0.0
        %4459 = vmatpush1.msra.mxu0 0.0
        %4460 = vmatprep.subr.mxu0 0.0
        %4461 = vmatpush1.msra.mxu0 0.0
        %4462 = vmatprep.subr.mxu0 0.0
        %4463 = vmatpush1.msra.mxu0 0.0
        %4464 = vmatprep.subr.mxu0 0.0
        %4465 = vmatpush1.msra.mxu0 0.0
        %4466 = vmatprep.subr.mxu0 0.0
        %4467 = vmatpush1.msra.mxu0 0.0
        %4468 = vmatprep.subr.mxu0 0.0
        %4469 = vmatpush1.msra.mxu0 0.0
        %4470 = vmatprep.subr.mxu0 0.0
        %4471 = vmatpush1.msra.mxu0 0.0
        %4472 = vmatprep.subr.mxu0 0.0
        %4473 = vmatpush1.msra.mxu0 0.0
        %4474 = vmatprep.mubr.f32.mxu0 0.0
        %4475 = vmatmul.mubr.f32.gmra.mrb[0].mxu0 %v4405
        %v4476 = vpop.f32.mrb[0].mxu0
        %v4477 = vadd.f32 0.0, %v4476
        %v4478 = vpop.f32.mrb[0].mxu0
        %4479 = vmatprep.mubr.f32.mxu0 0.0
        %4480 = vmatmul.mubr.f32.gmra.mrb[0].mxu0 %v4408
        %v4481 = vpop.f32.mrb[0].mxu0
        %v4482 = vadd.f32 0.0, %v4481
        %v4483 = vpop.f32.mrb[0].mxu0
        %4484 = vdwg.mxu0
        %v4485 = vadd.f32 %v3962, %v4477
        %v4486 = vadd.f32 %v3963, %v4482
        %v4487 = vadd.f32 %v4485, %v2321
        %v4488 = vadd.f32 %v4486, %v2322
        %v4489 = vsel %vm533, %v4487, 0.0
        %4490 = vadd.xlane.f32.xlu0 %v4489
        %v4491 = vpop.xlane.xlu0 %4490
        %v4492 = vsel %vm533, %v4488, 0.0
        %4493 = vadd.xlane.f32.xlu0 %v4492
        %v4494 = vpop.xlane.xlu0 %4493
        %v4495 = vadd.f32 %v4491, %v4494
        %v4496 = vrot.slane %v4495, 4
        %v4497 = vadd.f32 %v4495, %v4496
        %v4498 = vrot.slane %v4497, 2
        %v4499 = vadd.f32 %v4497, %v4498
        %v4500 = vrot.slane %v4499, 1
        %v4501 = vadd.f32 %v4499, %v4500
        %v4502 = vmul.f32 %v4501, 0.001953125
        %v4503 = vsub.f32 %v4487, %v4502
        %v4504 = vsub.f32 %v4488, %v4502
        %v4505 = vmul.f32 %v4503, %v4503
        %v4506 = vmul.f32 %v4504, %v4504
        %v4507 = vsel %vm533, %v4505, 0.0
        %4508 = vadd.xlane.f32.xlu0 %v4507
        %v4509 = vpop.xlane.xlu0 %4508
        %v4510 = vsel %vm533, %v4506, 0.0
        %4511 = vadd.xlane.f32.xlu0 %v4510
        %v4512 = vpop.xlane.xlu0 %4511
        %v4513 = vadd.f32 %v4509, %v4512
        %v4514 = vrot.slane %v4513, 4
        %v4515 = vadd.f32 %v4513, %v4514
        %v4516 = vrot.slane %v4515, 2
        %v4517 = vadd.f32 %v4515, %v4516
        %v4518 = vrot.slane %v4517, 1
        %v4519 = vadd.f32 %v4517, %v4518
        %v4520 = vmul.f32 %v4519, 0.001953125
        %v4521 = vadd.f32 %v4520, 1e-05
        %v4522 = vrsqrt.pop %v4521
        %v4523 = vmul.f32 %v4503, %v4522
        %v4524 = vmul.f32 %v4504, %v4522
        %s4525 = scalar_lea.vmem %s2, 48
        %v4526 = vld [vmem:[%s4525] sm:$0xff]
        %v4527 = vld [vmem:[%s4525 + $0x8] sm:$0xff]
        %v4528 = vmul.f32 %v4523, %v4526
        %v4529 = vmul.f32 %v4524, %v4527
        %s4530 = scalar_lea.vmem %s3, 48
        %v4531 = vld [vmem:[%s4530] sm:$0xff]
        %v4532 = vld [vmem:[%s4530 + $0x8] sm:$0xff]
        %v4533 = vadd.f32 %v4528, %v4531
        %v4534 = vadd.f32 %v4529, %v4532
        %v4535 = vld [vmem:[%s11] sm:$0xff]
        %v4536 = vld [vmem:[%s11 + $0x8] sm:$0xff]
        %v4537 = vld [vmem:[%s11 + $0x10] sm:$0xff]
        %v4538 = vld [vmem:[%s11 + $0x18] sm:$0xff]
        %v4539 = vld [vmem:[%s12] sm:$0x1]
        %v4541 = vlaneseq
        %v4542 = vshrl.u32 %v4541, 7
        %v4543 = vsub.s32 0, %v4542
        %v4544 = vrot.slane %v4539, %v4543
        %v4547 = vsel %vm533, %v4533, 0
        %v4550 = vsel %vm533, %v4534, 0
        %4552 = vmatprep.subr.mxu0 0.0
        %4553 = vmatpush1.msra.mxu0 %v4535
        %4554 = vmatprep.subr.mxu0 0.0
        %4555 = vmatpush1.msra.mxu0 %v4536
        %4556 = vmatprep.subr.mxu0 0.0
        %4557 = vmatpush1.msra.mxu0 %v4537
        %4558 = vmatprep.subr.mxu0 0.0
        %4559 = vmatpush1.msra.mxu0 %v4538
        %4560 = vmatprep.subr.mxu0 0.0
        %4561 = vmatpush1.msra.mxu0 0.0
        %4562 = vmatprep.subr.mxu0 0.0
        %4563 = vmatpush1.msra.mxu0 0.0
        %4564 = vmatprep.subr.mxu0 0.0
        %4565 = vmatpush1.msra.mxu0 0.0
        %4566 = vmatprep.subr.mxu0 0.0
        %4567 = vmatpush1.msra.mxu0 0.0
        %4568 = vmatprep.subr.mxu0 0.0
        %4569 = vmatpush1.msra.mxu0 0.0
        %4570 = vmatprep.subr.mxu0 0.0
        %4571 = vmatpush1.msra.mxu0 0.0
        %4572 = vmatprep.subr.mxu0 0.0
        %4573 = vmatpush1.msra.mxu0 0.0
        %4574 = vmatprep.subr.mxu0 0.0
        %4575 = vmatpush1.msra.mxu0 0.0
        %4576 = vmatprep.subr.mxu0 0.0
        %4577 = vmatpush1.msra.mxu0 0.0
        %4578 = vmatprep.subr.mxu0 0.0
        %4579 = vmatpush1.msra.mxu0 0.0
        %4580 = vmatprep.subr.mxu0 0.0
        %4581 = vmatpush1.msra.mxu0 0.0
        %4582 = vmatprep.subr.mxu0 0.0
        %4583 = vmatpush1.msra.mxu0 0.0
        %4584 = vmatprep.subr.mxu0 0.0
        %4585 = vmatpush1.msra.mxu0 0.0
        %4586 = vmatprep.subr.mxu0 0.0
        %4587 = vmatpush1.msra.mxu0 0.0
        %4588 = vmatprep.subr.mxu0 0.0
        %4589 = vmatpush1.msra.mxu0 0.0
        %4590 = vmatprep.subr.mxu0 0.0
        %4591 = vmatpush1.msra.mxu0 0.0
        %4592 = vmatprep.subr.mxu0 0.0
        %4593 = vmatpush1.msra.mxu0 0.0
        %4594 = vmatprep.subr.mxu0 0.0
        %4595 = vmatpush1.msra.mxu0 0.0
        %4596 = vmatprep.subr.mxu0 0.0
        %4597 = vmatpush1.msra.mxu0 0.0
        %4598 = vmatprep.subr.mxu0 0.0
        %4599 = vmatpush1.msra.mxu0 0.0
        %4600 = vmatprep.subr.mxu0 0.0
        %4601 = vmatpush1.msra.mxu0 0.0
        %4602 = vmatprep.subr.mxu0 0.0
        %4603 = vmatpush1.msra.mxu0 0.0
        %4604 = vmatprep.subr.mxu0 0.0
        %4605 = vmatpush1.msra.mxu0 0.0
        %4606 = vmatprep.subr.mxu0 0.0
        %4607 = vmatpush1.msra.mxu0 0.0
        %4608 = vmatprep.subr.mxu0 0.0
        %4609 = vmatpush1.msra.mxu0 0.0
        %4610 = vmatprep.subr.mxu0 0.0
        %4611 = vmatpush1.msra.mxu0 0.0
        %4612 = vmatprep.subr.mxu0 0.0
        %4613 = vmatpush1.msra.mxu0 0.0
        %4614 = vmatprep.subr.mxu0 0.0
        %4615 = vmatpush1.msra.mxu0 0.0
        %4616 = vmatprep.mubr.f32.mxu0 0.0
        %4617 = vmatmul.mubr.f32.gmra.mrb[0].mxu0 %v4547
        %v4618 = vpop.f32.mrb[0].mxu0
        %v4619 = vadd.f32 %v4544, %v4618
        %v4620 = vpop.f32.mrb[0].mxu0
        %4621 = vmatprep.mubr.f32.mxu0 0.0
        %4622 = vmatmul.mubr.f32.gmra.mrb[0].mxu0 %v4550
        %v4623 = vpop.f32.mrb[0].mxu0
        %v4624 = vadd.f32 %v4544, %v4623
        %v4625 = vpop.f32.mrb[0].mxu0
        %4626 = vdwg.mxu0
        %v4627 = vmax.f32 %v4619, 0.0
        %v4628 = vmax.f32 %v4624, 0.0
        %v4629 = vadd.f32 %v4627, %v4487
        %v4630 = vadd.f32 %v4628, %v4488
        %4631 = vst.msk [vmem:[%s513] sm:$0xff] %vm533, %v4629
        %4632 = vst.msk [vmem:[%s513 + $0x8] sm:$0xff] %vm533, %v4630
        %s4633 = sand.u32 %s367, 1
        %s4634 = scalar_lea.sflag [#allocation3], %s4633
        %s4635 = sand.u32 %s367, 1
        %s4636 = smul.addr %s4635, 16
        %s4637 = scalar_lea.vmem [#allocation2], %s4636
        // Predicated region
        $region81: #{encoder_block_forward.1} parent=79 // pred_check
          %p4638 = pneg %p377
        $region82: #{encoder_block_forward.1} parent=79 // pred_check_branch
          %4640 = sbr.rel (%p4638) target = $region84
        $region83: #{encoder_block_forward.1} parent=79 // pred_region
          %s4642 = ssub.s32 256, 256
          %4643 = vsyncadd %s4634, %s4642
          %s4644 = smul.addr %s29, 2
          %s4645 = smul.addr %s4644, 128
          %s4646 = scalar_lea.hbm %s15, %s4645
          %s4647 = sshll.u32 %s4637, 4
          %s4648 = int_to_ptr.vmem [resolvable:$true] %s4647
          %4653 = dma.vmem_to_hbm [thread:$0]  %s4648, 256, %s4646, %s4634, 128, 128, 8
        $region84: #{encoder_block_forward.1} parent=79 // pred_fallthru
          _
      $region80: #{encoder_block_forward.1} parent=5 // pred_fallthru
        _
      %p4654 = scmp.le.s32.totalorder 2, %s24
      // Predicated region
      $region85: #{encoder_block_forward.1} parent=5 // pred_check
        %p4655 = pneg %p4654
      $region86: #{encoder_block_forward.1} parent=5 // pred_check_branch
        %4657 = sbr.rel (%p4655) target = $region88
      $region87: #{encoder_block_forward.1} parent=5 // pred_region
        %s4658 = ssub.s32 %s24, 2
        // Predicated region
        $region89: #{encoder_block_forward.1} parent=87 // pred_check
          %p4659 = pneg %p383
        $region90: #{encoder_block_forward.1} parent=87 // pred_check_branch
          %4661 = sbr.rel (%p4659) target = $region92
        $region91: #{encoder_block_forward.1} parent=87 // pred_region
          %s4662 = sand.u32 %s368, 1
          %s4663 = scalar_lea.sflag [#allocation3], %s4662
          %s4664 = sand.u32 %s368, 1
          %s4665 = smul.addr %s4664, 16
          %s4666 = scalar_lea.vmem [#allocation2], %s4665
          %4667 = dma.done %s4663, 256
        $region92: #{encoder_block_forward.1} parent=87 // pred_fallthru
          _
      $region88: #{encoder_block_forward.1} parent=5 // pred_fallthru
        _
    $region6: #{encoder_block_forward.1} parent=1 // loop_footer
      %s28 = sadd.s32 1, %s24
    $region7: #{encoder_block_forward.1} parent=1 // loop_footer_branch
      %23 = sbr.rel target = $region3
    $region8: #{encoder_block_forward.1} parent=1 // loop_exit
      _
    %4668 = vsyncpa [#allocation3], 1
    %s4669 = scalar_lea.sflag [#allocation3], 1
    %4670 = vsyncpa %s4669, 1

</llo_original>
